<compile_context>
chip_gen: v6e
topology: v6e:2x2x1
jax: 0.10.0
libtpu: 0.0.40
codegen_flags: <defaults>
</compile_context>

<pallas_src>
import functools

import jax
import jax.numpy as jnp
from jax import lax
from jax.experimental import pallas as pl
from jax.experimental.pallas import tpu as pltpu

HIDDEN = 64            # LSTM hidden size of the PyTorch module
PADDED_HIDDEN = 128    # hidden padded so each gate owns one full 128-lane slab


def _gate_update(gates, c, ph):
    """PyTorch nn.LSTMCell gate math, gate order (i, f, g, o).
    gates: (B, 4*ph) f32, c: (B, ph) f32.  ph == 128 so every slice is lane-aligned.
    Padded lanes: gate cols / biases are zero there -> i=f=o=0.5, g=0 -> c,h stay 0."""
    i = jax.nn.sigmoid(gates[:, 0 * ph:1 * ph])
    f = jax.nn.sigmoid(gates[:, 1 * ph:2 * ph])
    g = jnp.tanh(gates[:, 2 * ph:3 * ph])
    o = jax.nn.sigmoid(gates[:, 3 * ph:4 * ph])
    c_new = f * c + i * g
    h_new = o * jnp.tanh(c_new)
    return h_new, c_new


def _sequence_kernel(T, F, future, mm_dtype,
                     x_ref, wih1_ref, bias_ref, wrec_ref, wlin_ref, blin_ref,
                     out_ref):
    """
    x_ref    : (B, T*F) f32   raw observed inputs (projection done in-kernel, off the chain)
    wih1_ref : (F, 4*PH) f32  layer-1 input weights, gate cols padded
    bias_ref : (2|3, 4*PH) f32  rows = [b1, b2, b_future]
    wrec_ref : ((3|4)*PH, 4*PH) mm_dtype  stacked [Whh1; Wih2; Whh2; Wlin@Wih1]
    wlin_ref : (PH, O) f32, blin_ref : (1, O) f32
    out_ref  : (B, O) f32
    """
    B = x_ref.shape[0]
    PH = wlin_ref.shape[0]

    # One up-front load per recurrent-weight slab (static, tile-aligned row slices).
    whh1 = wrec_ref[0 * PH:1 * PH, :]
    wih2 = wrec_ref[1 * PH:2 * PH, :]
    whh2 = wrec_ref[2 * PH:3 * PH, :]
    b1 = bias_ref[0:1, :]
    b2 = bias_ref[1:2, :]
    if future > 0:
        wfused = wrec_ref[3 * PH:4 * PH, :]   # Wlin^T @ Wih1^T (linear folded into lstm1 input)
        bfut = bias_ref[2:3, :]               # b_lin @ Wih1^T + b1

    def dot(a, w):
        # bf16 (or f32) operands, f32 accumulate on the MXU.
        return jnp.dot(a, w, preferred_element_type=jnp.float32)

    zeros = jnp.zeros((B, PH), jnp.float32)
    h1, c1, h2, c2 = zeros, zeros, zeros, zeros
    h1m = zeros.astype(mm_dtype)   # matmul-operand copies of the hidden state
    h2m = zeros.astype(mm_dtype)

    # ---- observed timesteps (fully unrolled: T is a compile-time constant) ----
    # For large T this should become lax.fori_loop(..., unroll=8) with x kept in HBM
    # (memory_space=pl.ANY) and double-buffered chunks; unnecessary at T=8.
    for t in range(T):
        # Layer-1 input projection: h-independent, so the scheduler can hoist it off
        # the serial chain.  F is tiny (1), so a broadcast multiply beats a K=F matmul.
        xg = b1
        for f in range(F):
            xg = xg + x_ref[:, t * F + f:t * F + f + 1] * wih1_ref[f:f + 1, :]  # (B,1)*(1,4PH)
        gates1 = xg + dot(h1m, whh1)
        h1, c1 = _gate_update(gates1, c1, PH)
        h1m = h1.astype(mm_dtype)
        # Layer 2: split dots (no concat) — the h2@Whh2 half only depends on the
        # previous step and can be issued before the new h1 is ready.
        gates2 = b2 + dot(h2m, whh2) + dot(h1m, wih2)
        h2, c2 = _gate_update(gates2, c2, PH)
        h2m = h2.astype(mm_dtype)

    # ---- future feedback steps (linear layer folded into lstm1's input path) ----
    for _ in range(future):
        gates1 = bfut + dot(h2m, wfused) + dot(h1m, whh1)
        h1, c1 = _gate_update(gates1, c1, PH)
        h1m = h1.astype(mm_dtype)
        gates2 = b2 + dot(h2m, whh2) + dot(h1m, wih2)
        h2, c2 = _gate_update(gates2, c2, PH)
        h2m = h2.astype(mm_dtype)

    # The real linear output is evaluated exactly once, on the final h2 (f32).
    out = jnp.dot(h2, wlin_ref[...], preferred_element_type=jnp.float32) + blin_ref[...]
    out_ref[...] = out.astype(out_ref.dtype)


# ----------------------------- parameter helpers -----------------------------

def _pad_gate_cols(w_t, h, ph):
    """(K, 4h) -> (K, 4*ph): gate g's h columns placed at offset g*ph, rest EXACTLY zero."""
    k = w_t.shape[0]
    out = jnp.zeros((k, 4 * ph), w_t.dtype)
    for g in range(4):
        out = out.at[:, g * ph:g * ph + h].set(w_t[:, g * h:(g + 1) * h])
    return out


def _pad_rows(w, h, ph):
    """(h, N) -> (ph, N), zero-padded rows (padded h entries are always zero)."""
    return jnp.pad(w, ((0, ph - h), (0, 0)))


def init_params(key, in_feature=1, out_feature=1, hidden=HIDDEN):
    """Deterministic init mimicking PyTorch's uniform(-1/sqrt(H), 1/sqrt(H))."""
    k = 1.0 / jnp.sqrt(jnp.float32(hidden))
    keys = jax.random.split(key, 10)

    def u(kk, shape):
        return jax.random.uniform(kk, shape, jnp.float32, -k, k)

    w_ih1 = u(keys[0], (4 * hidden, in_feature))
    w_hh1 = u(keys[1], (4 * hidden, hidden))
    b_ih1 = u(keys[2], (4 * hidden,))
    b_hh1 = u(keys[3], (4 * hidden,))
    w_ih2 = u(keys[4], (4 * hidden, hidden))
    w_hh2 = u(keys[5], (4 * hidden, hidden))
    b_ih2 = u(keys[6], (4 * hidden,))
    b_hh2 = u(keys[7], (4 * hidden,))
    w_lin = u(keys[8], (out_feature, hidden))
    b_lin = u(keys[9], (out_feature,))
    return (w_ih1, w_hh1, b_ih1, b_hh1,
            w_ih2, w_hh2, b_ih2, b_hh2,
            w_lin, b_lin)


def sequence_forward(x, params, future=1, matmul_dtype=jnp.bfloat16):
    """x: (B, T, F) float32. Returns (B, 1, out_feature) float32."""
    B, T, F = x.shape
    (w_ih1, w_hh1, b_ih1, b_hh1,
     w_ih2, w_hh2, b_ih2, b_hh2,
     w_lin, b_lin) = params
    H = w_hh1.shape[1]
    O = w_lin.shape[0]
    PH = PADDED_HIDDEN
    hp = lax.Precision.HIGHEST
    f32 = jnp.float32

    # ---- weight prep: transpose, pad each gate to a full 128-lane slab ----
    wih1_t = _pad_gate_cols(w_ih1.T.astype(f32), H, PH)                      # (F, 4PH)
    whh1_t = _pad_rows(_pad_gate_cols(w_hh1.T.astype(f32), H, PH), H, PH)    # (PH, 4PH)
    wih2_t = _pad_rows(_pad_gate_cols(w_ih2.T.astype(f32), H, PH), H, PH)
    whh2_t = _pad_rows(_pad_gate_cols(w_hh2.T.astype(f32), H, PH), H, PH)
    b1 = _pad_gate_cols((b_ih1 + b_hh1)[None, :].astype(f32), H, PH)         # (1, 4PH)
    b2 = _pad_gate_cols((b_ih2 + b_hh2)[None, :].astype(f32), H, PH)
    wlin_t = _pad_rows(w_lin.T.astype(f32), H, PH)                           # (PH, O)
    blin = b_lin[None, :].astype(f32)                                        # (1, O)

    # Pack recurrent weights / biases into single inputs (fewer kernel-entry DMAs) and
    # only include the feedback slabs when future > 0 (no dead DMA otherwise).
    rec_slabs = [whh1_t, wih2_t, whh2_t]
    bias_rows = [b1, b2]
    if future > 0:
        assert O == F, "feedback path requires out_feature == in_feature"
        rec_slabs.append(jnp.matmul(wlin_t, wih1_t, precision=hp))           # Wlin@Wih1 (PH,4PH)
        bias_rows.append(jnp.matmul(blin, wih1_t, precision=hp) + b1)        # (1, 4PH)
    wrec = jnp.concatenate(rec_slabs, axis=0).astype(matmul_dtype)           # ((3|4)PH, 4PH)
    bias = jnp.concatenate(bias_rows, axis=0)                                # ((2|3), 4PH) f32

    # Raw inputs go to the kernel unprojected; projection happens in-kernel.
    x2d = x.astype(f32).reshape(B, T * F)                                    # (B, T*F)

    kernel = functools.partial(_sequence_kernel, int(T), int(F), int(future), matmul_dtype)
    vmem = pl.BlockSpec(memory_space=pltpu.MemorySpace.VMEM)
    out = pl.pallas_call(
        kernel,
        out_shape=jax.ShapeDtypeStruct((B, O), jnp.float32),
        in_specs=[vmem] * 6,
        out_specs=vmem,
    )(x2d, wih1_t, bias, wrec, wlin_t, blin)
    return out[:, None, :]  # output.unsqueeze(1)


# ------------------------- pure-JAX reference (unfused) -----------------------

def sequence_reference(x, params, future=1):
    (w_ih1, w_hh1, b_ih1, b_hh1,
     w_ih2, w_hh2, b_ih2, b_hh2,
     w_lin, b_lin) = params
    B, T, _ = x.shape
    H = w_hh1.shape[1]
    hp = lax.Precision.HIGHEST

    def cell(xx, h, c, w_ih, w_hh, b_ih, b_hh):
        g = (jnp.matmul(xx, w_ih.T, precision=hp)
             + jnp.matmul(h, w_hh.T, precision=hp) + b_ih + b_hh)
        i, f, gg, o = jnp.split(g, 4, axis=1)
        c = jax.nn.sigmoid(f) * c + jax.nn.sigmoid(i) * jnp.tanh(gg)
        h = jax.nn.sigmoid(o) * jnp.tanh(c)
        return h, c

    z = jnp.zeros((B, H), jnp.float32)
    h1, c1, h2, c2 = z, z, z, z
    out = None
    for t in range(T):
        h1, c1 = cell(x[:, t, :].astype(jnp.float32), h1, c1, w_ih1, w_hh1, b_ih1, b_hh1)
        h2, c2 = cell(h1, h2, c2, w_ih2, w_hh2, b_ih2, b_hh2)
        out = jnp.matmul(h2, w_lin.T, precision=hp) + b_lin
    for _ in range(future):
        h1, c1 = cell(out, h1, c1, w_ih1, w_hh1, b_ih1, b_hh1)
        h2, c2 = cell(h1, h2, c2, w_ih2, w_hh2, b_ih2, b_hh2)
        out = jnp.matmul(h2, w_lin.T, precision=hp) + b_lin
    return out[:, None, :]


if __name__ == "__main__":
    key = jax.random.PRNGKey(0)
    k_param, k_data = jax.random.split(key)

    B, T, F = 2, 8, 1   # batch=2, seq=8, in_feature=1 (module defaults)
    FUTURE = 1
    params = init_params(k_param, in_feature=F, out_feature=F, hidden=HIDDEN)
    x = jax.random.normal(k_data, (B, T, F), jnp.float32)

    y_ref = sequence_reference(x, params, future=FUTURE)

    # 1) f32 MXU-operand mode: validates the kernel structure against the reference
    #    with the same tight tolerance as the previous (passing) revision.
    fwd_f32 = jax.jit(functools.partial(sequence_forward, future=FUTURE,
                                        matmul_dtype=jnp.float32))
    y32 = jax.block_until_ready(fwd_f32(x, params))
    assert y32.shape == (B, 1, F), y32.shape
    assert jnp.allclose(y32, y_ref, rtol=1e-2, atol=1e-3), (y32, y_ref)

    # 2) bf16 MXU-operand fast path (default): quantization error vs the f32 HIGHEST
    #    reference is bounded but larger than f32; documented tolerance below.
    fwd_bf16 = jax.jit(functools.partial(sequence_forward, future=FUTURE,
                                         matmul_dtype=jnp.bfloat16))
    ybf = jax.block_until_ready(fwd_bf16(x, params))
    assert ybf.shape == (B, 1, F), ybf.shape
    assert jnp.allclose(ybf, y32, rtol=5e-2, atol=1e-2), (ybf, y32)
    assert jnp.allclose(ybf, y_ref, rtol=5e-2, atol=1e-2), (ybf, y_ref)

    print("KERNEL_OK")
</pallas_src>

<mosaic_0001>
module attributes {stable_mosaic.version = 11 : i64} {
  func.func @_sequence_kernel(%arg0: memref<2x8xf32, #tpu.memory_space<vmem>>, %arg1: memref<1x512xf32, #tpu.memory_space<vmem>>, %arg2: memref<3x512xf32, #tpu.memory_space<vmem>>, %arg3: memref<512x512xf32, #tpu.memory_space<vmem>>, %arg4: memref<128x1xf32, #tpu.memory_space<vmem>>, %arg5: memref<1x1xf32, #tpu.memory_space<vmem>>, %arg6: memref<2x1xf32, #tpu.memory_space<vmem>>) attributes {dimension_semantics = [], scalar_prefetch = 0 : i64, scratch_operands = 0 : i64, tpu.core_type = #tpu.core_type<tc>} {
    %c0 = arith.constant 0 : index
    %c0_0 = arith.constant 0 : index
    %0 = vector.load %arg3[%c0, %c0_0] : memref<512x512xf32, #tpu.memory_space<vmem>>, vector<128x512xf32>
    %c128 = arith.constant 128 : index
    %c0_1 = arith.constant 0 : index
    %1 = vector.load %arg3[%c128, %c0_1] : memref<512x512xf32, #tpu.memory_space<vmem>>, vector<128x512xf32>
    %c256 = arith.constant 256 : index
    %c0_2 = arith.constant 0 : index
    %2 = vector.load %arg3[%c256, %c0_2] : memref<512x512xf32, #tpu.memory_space<vmem>>, vector<128x512xf32>
    %c0_3 = arith.constant 0 : index
    %c0_4 = arith.constant 0 : index
    %3 = vector.load %arg2[%c0_3, %c0_4] : memref<3x512xf32, #tpu.memory_space<vmem>>, vector<1x512xf32>
    %c1 = arith.constant 1 : index
    %c0_5 = arith.constant 0 : index
    %4 = vector.load %arg2[%c1, %c0_5] : memref<3x512xf32, #tpu.memory_space<vmem>>, vector<1x512xf32>
    %c384 = arith.constant 384 : index
    %c0_6 = arith.constant 0 : index
    %5 = vector.load %arg3[%c384, %c0_6] : memref<512x512xf32, #tpu.memory_space<vmem>>, vector<128x512xf32>
    %c2 = arith.constant 2 : index
    %c0_7 = arith.constant 0 : index
    %6 = vector.load %arg2[%c2, %c0_7] : memref<3x512xf32, #tpu.memory_space<vmem>>, vector<1x512xf32>
    %cst = arith.constant 0.000000e+00 : f32
    %7 = vector.broadcast %cst : f32 to vector<2x128xf32>
    %c0_8 = arith.constant 0 : index
    %c0_9 = arith.constant 0 : index
    %8 = vector.load %arg0[%c0_8, %c0_9] : memref<2x8xf32, #tpu.memory_space<vmem>>, vector<2x1xf32>
    %c0_10 = arith.constant 0 : index
    %c0_11 = arith.constant 0 : index
    %9 = vector.load %arg1[%c0_10, %c0_11] : memref<1x512xf32, #tpu.memory_space<vmem>>, vector<1x512xf32>
    %10 = vector.broadcast %8 : vector<2x1xf32> to vector<2x512xf32>
    %11 = vector.broadcast %9 : vector<1x512xf32> to vector<2x512xf32>
    %12 = arith.mulf %10, %11 : vector<2x512xf32>
    %13 = vector.broadcast %3 : vector<1x512xf32> to vector<2x512xf32>
    %14 = arith.addf %13, %12 : vector<2x512xf32>
    %cst_12 = arith.constant dense<0.000000e+00> : vector<2x512xf32>
    %15 = tpu.matmul %7, %0, %cst_12 {dimension_numbers = #tpu.dot_dimension_numbers<[1], [0], [0], [1], [0, 0, 1, 1], [], []>} : vector<2x128xf32>, vector<128x512xf32>, vector<2x512xf32> -> vector<2x512xf32>
    %16 = arith.addf %14, %15 : vector<2x512xf32>
    %17 = vector.extract_strided_slice %16 {offsets = [0, 0], sizes = [2, 128], strides = [1, 1]} : vector<2x512xf32> to vector<2x128xf32>
    %18 = arith.negf %17 : vector<2x128xf32>
    %19 = math.exp %18 : vector<2x128xf32>
    %cst_13 = arith.constant 1.000000e+00 : f32
    %20 = vector.broadcast %cst_13 : f32 to vector<2x128xf32>
    %21 = arith.addf %20, %19 : vector<2x128xf32>
    %22 = arith.divf %20, %21 : vector<2x128xf32>
    %23 = vector.extract_strided_slice %16 {offsets = [0, 128], sizes = [2, 128], strides = [1, 1]} : vector<2x512xf32> to vector<2x128xf32>
    %24 = arith.negf %23 : vector<2x128xf32>
    %25 = math.exp %24 : vector<2x128xf32>
    %cst_14 = arith.constant 1.000000e+00 : f32
    %26 = vector.broadcast %cst_14 : f32 to vector<2x128xf32>
    %27 = arith.addf %26, %25 : vector<2x128xf32>
    %28 = arith.divf %26, %27 : vector<2x128xf32>
    %29 = vector.extract_strided_slice %16 {offsets = [0, 256], sizes = [2, 128], strides = [1, 1]} : vector<2x512xf32> to vector<2x128xf32>
    %30 = math.tanh %29 : vector<2x128xf32>
    %31 = vector.extract_strided_slice %16 {offsets = [0, 384], sizes = [2, 128], strides = [1, 1]} : vector<2x512xf32> to vector<2x128xf32>
    %32 = arith.negf %31 : vector<2x128xf32>
    %33 = math.exp %32 : vector<2x128xf32>
    %cst_15 = arith.constant 1.000000e+00 : f32
    %34 = vector.broadcast %cst_15 : f32 to vector<2x128xf32>
    %35 = arith.addf %34, %33 : vector<2x128xf32>
    %36 = arith.divf %34, %35 : vector<2x128xf32>
    %37 = arith.mulf %28, %7 : vector<2x128xf32>
    %38 = arith.mulf %22, %30 : vector<2x128xf32>
    %39 = arith.addf %37, %38 : vector<2x128xf32>
    %40 = math.tanh %39 : vector<2x128xf32>
    %41 = arith.mulf %36, %40 : vector<2x128xf32>
    %cst_16 = arith.constant dense<0.000000e+00> : vector<2x512xf32>
    %42 = tpu.matmul %7, %2, %cst_16 {dimension_numbers = #tpu.dot_dimension_numbers<[1], [0], [0], [1], [0, 0, 1, 1], [], []>} : vector<2x128xf32>, vector<128x512xf32>, vector<2x512xf32> -> vector<2x512xf32>
    %43 = vector.broadcast %4 : vector<1x512xf32> to vector<2x512xf32>
    %44 = arith.addf %43, %42 : vector<2x512xf32>
    %cst_17 = arith.constant dense<0.000000e+00> : vector<2x512xf32>
    %45 = tpu.matmul %41, %1, %cst_17 {dimension_numbers = #tpu.dot_dimension_numbers<[1], [0], [0], [1], [0, 0, 1, 1], [], []>} : vector<2x128xf32>, vector<128x512xf32>, vector<2x512xf32> -> vector<2x512xf32>
    %46 = arith.addf %44, %45 : vector<2x512xf32>
    %47 = vector.extract_strided_slice %46 {offsets = [0, 0], sizes = [2, 128], strides = [1, 1]} : vector<2x512xf32> to vector<2x128xf32>
    %48 = arith.negf %47 : vector<2x128xf32>
    %49 = math.exp %48 : vector<2x128xf32>
    %cst_18 = arith.constant 1.000000e+00 : f32
    %50 = vector.broadcast %cst_18 : f32 to vector<2x128xf32>
    %51 = arith.addf %50, %49 : vector<2x128xf32>
    %52 = arith.divf %50, %51 : vector<2x128xf32>
    %53 = vector.extract_strided_slice %46 {offsets = [0, 128], sizes = [2, 128], strides = [1, 1]} : vector<2x512xf32> to vector<2x128xf32>
    %54 = arith.negf %53 : vector<2x128xf32>
    %55 = math.exp %54 : vector<2x128xf32>
    %cst_19 = arith.constant 1.000000e+00 : f32
    %56 = vector.broadcast %cst_19 : f32 to vector<2x128xf32>
    %57 = arith.addf %56, %55 : vector<2x128xf32>
    %58 = arith.divf %56, %57 : vector<2x128xf32>
    %59 = vector.extract_strided_slice %46 {offsets = [0, 256], sizes = [2, 128], strides = [1, 1]} : vector<2x512xf32> to vector<2x128xf32>
    %60 = math.tanh %59 : vector<2x128xf32>
    %61 = vector.extract_strided_slice %46 {offsets = [0, 384], sizes = [2, 128], strides = [1, 1]} : vector<2x512xf32> to vector<2x128xf32>
    %62 = arith.negf %61 : vector<2x128xf32>
    %63 = math.exp %62 : vector<2x128xf32>
    %cst_20 = arith.constant 1.000000e+00 : f32
    %64 = vector.broadcast %cst_20 : f32 to vector<2x128xf32>
    %65 = arith.addf %64, %63 : vector<2x128xf32>
    %66 = arith.divf %64, %65 : vector<2x128xf32>
    %67 = arith.mulf %58, %7 : vector<2x128xf32>
    %68 = arith.mulf %52, %60 : vector<2x128xf32>
    %69 = arith.addf %67, %68 : vector<2x128xf32>
    %70 = math.tanh %69 : vector<2x128xf32>
    %71 = arith.mulf %66, %70 : vector<2x128xf32>
    %c0_21 = arith.constant 0 : index
    %c1_22 = arith.constant 1 : index
    %72 = vector.load %arg0[%c0_21, %c1_22] : memref<2x8xf32, #tpu.memory_space<vmem>>, vector<2x1xf32>
    %c0_23 = arith.constant 0 : index
    %c0_24 = arith.constant 0 : index
    %73 = vector.load %arg1[%c0_23, %c0_24] : memref<1x512xf32, #tpu.memory_space<vmem>>, vector<1x512xf32>
    %74 = vector.broadcast %72 : vector<2x1xf32> to vector<2x512xf32>
    %75 = vector.broadcast %73 : vector<1x512xf32> to vector<2x512xf32>
    %76 = arith.mulf %74, %75 : vector<2x512xf32>
    %77 = vector.broadcast %3 : vector<1x512xf32> to vector<2x512xf32>
    %78 = arith.addf %77, %76 : vector<2x512xf32>
    %cst_25 = arith.constant dense<0.000000e+00> : vector<2x512xf32>
    %79 = tpu.matmul %41, %0, %cst_25 {dimension_numbers = #tpu.dot_dimension_numbers<[1], [0], [0], [1], [0, 0, 1, 1], [], []>} : vector<2x128xf32>, vector<128x512xf32>, vector<2x512xf32> -> vector<2x512xf32>
    %80 = arith.addf %78, %79 : vector<2x512xf32>
    %81 = vector.extract_strided_slice %80 {offsets = [0, 0], sizes = [2, 128], strides = [1, 1]} : vector<2x512xf32> to vector<2x128xf32>
    %82 = arith.negf %81 : vector<2x128xf32>
    %83 = math.exp %82 : vector<2x128xf32>
    %cst_26 = arith.constant 1.000000e+00 : f32
    %84 = vector.broadcast %cst_26 : f32 to vector<2x128xf32>
    %85 = arith.addf %84, %83 : vector<2x128xf32>
    %86 = arith.divf %84, %85 : vector<2x128xf32>
    %87 = vector.extract_strided_slice %80 {offsets = [0, 128], sizes = [2, 128], strides = [1, 1]} : vector<2x512xf32> to vector<2x128xf32>
    %88 = arith.negf %87 : vector<2x128xf32>
    %89 = math.exp %88 : vector<2x128xf32>
    %cst_27 = arith.constant 1.000000e+00 : f32
    %90 = vector.broadcast %cst_27 : f32 to vector<2x128xf32>
    %91 = arith.addf %90, %89 : vector<2x128xf32>
    %92 = arith.divf %90, %91 : vector<2x128xf32>
    %93 = vector.extract_strided_slice %80 {offsets = [0, 256], sizes = [2, 128], strides = [1, 1]} : vector<2x512xf32> to vector<2x128xf32>
    %94 = math.tanh %93 : vector<2x128xf32>
    %95 = vector.extract_strided_slice %80 {offsets = [0, 384], sizes = [2, 128], strides = [1, 1]} : vector<2x512xf32> to vector<2x128xf32>
    %96 = arith.negf %95 : vector<2x128xf32>
    %97 = math.exp %96 : vector<2x128xf32>
    %cst_28 = arith.constant 1.000000e+00 : f32
    %98 = vector.broadcast %cst_28 : f32 to vector<2x128xf32>
    %99 = arith.addf %98, %97 : vector<2x128xf32>
    %100 = arith.divf %98, %99 : vector<2x128xf32>
    %101 = arith.mulf %92, %39 : vector<2x128xf32>
    %102 = arith.mulf %86, %94 : vector<2x128xf32>
    %103 = arith.addf %101, %102 : vector<2x128xf32>
    %104 = math.tanh %103 : vector<2x128xf32>
    %105 = arith.mulf %100, %104 : vector<2x128xf32>
    %cst_29 = arith.constant dense<0.000000e+00> : vector<2x512xf32>
    %106 = tpu.matmul %71, %2, %cst_29 {dimension_numbers = #tpu.dot_dimension_numbers<[1], [0], [0], [1], [0, 0, 1, 1], [], []>} : vector<2x128xf32>, vector<128x512xf32>, vector<2x512xf32> -> vector<2x512xf32>
    %107 = vector.broadcast %4 : vector<1x512xf32> to vector<2x512xf32>
    %108 = arith.addf %107, %106 : vector<2x512xf32>
    %cst_30 = arith.constant dense<0.000000e+00> : vector<2x512xf32>
    %109 = tpu.matmul %105, %1, %cst_30 {dimension_numbers = #tpu.dot_dimension_numbers<[1], [0], [0], [1], [0, 0, 1, 1], [], []>} : vector<2x128xf32>, vector<128x512xf32>, vector<2x512xf32> -> vector<2x512xf32>
    %110 = arith.addf %108, %109 : vector<2x512xf32>
    %111 = vector.extract_strided_slice %110 {offsets = [0, 0], sizes = [2, 128], strides = [1, 1]} : vector<2x512xf32> to vector<2x128xf32>
    %112 = arith.negf %111 : vector<2x128xf32>
    %113 = math.exp %112 : vector<2x128xf32>
    %cst_31 = arith.constant 1.000000e+00 : f32
    %114 = vector.broadcast %cst_31 : f32 to vector<2x128xf32>
    %115 = arith.addf %114, %113 : vector<2x128xf32>
    %116 = arith.divf %114, %115 : vector<2x128xf32>
    %117 = vector.extract_strided_slice %110 {offsets = [0, 128], sizes = [2, 128], strides = [1, 1]} : vector<2x512xf32> to vector<2x128xf32>
    %118 = arith.negf %117 : vector<2x128xf32>
    %119 = math.exp %118 : vector<2x128xf32>
    %cst_32 = arith.constant 1.000000e+00 : f32
    %120 = vector.broadcast %cst_32 : f32 to vector<2x128xf32>
    %121 = arith.addf %120, %119 : vector<2x128xf32>
    %122 = arith.divf %120, %121 : vector<2x128xf32>
    %123 = vector.extract_strided_slice %110 {offsets = [0, 256], sizes = [2, 128], strides = [1, 1]} : vector<2x512xf32> to vector<2x128xf32>
    %124 = math.tanh %123 : vector<2x128xf32>
    %125 = vector.extract_strided_slice %110 {offsets = [0, 384], sizes = [2, 128], strides = [1, 1]} : vector<2x512xf32> to vector<2x128xf32>
    %126 = arith.negf %125 : vector<2x128xf32>
    %127 = math.exp %126 : vector<2x128xf32>
    %cst_33 = arith.constant 1.000000e+00 : f32
    %128 = vector.broadcast %cst_33 : f32 to vector<2x128xf32>
    %129 = arith.addf %128, %127 : vector<2x128xf32>
    %130 = arith.divf %128, %129 : vector<2x128xf32>
    %131 = arith.mulf %122, %69 : vector<2x128xf32>
    %132 = arith.mulf %116, %124 : vector<2x128xf32>
    %133 = arith.addf %131, %132 : vector<2x128xf32>
    %134 = math.tanh %133 : vector<2x128xf32>
    %135 = arith.mulf %130, %134 : vector<2x128xf32>
    %c0_34 = arith.constant 0 : index
    %c2_35 = arith.constant 2 : index
    %136 = vector.load %arg0[%c0_34, %c2_35] : memref<2x8xf32, #tpu.memory_space<vmem>>, vector<2x1xf32>
    %c0_36 = arith.constant 0 : index
    %c0_37 = arith.constant 0 : index
    %137 = vector.load %arg1[%c0_36, %c0_37] : memref<1x512xf32, #tpu.memory_space<vmem>>, vector<1x512xf32>
    %138 = vector.broadcast %136 : vector<2x1xf32> to vector<2x512xf32>
    %139 = vector.broadcast %137 : vector<1x512xf32> to vector<2x512xf32>
    %140 = arith.mulf %138, %139 : vector<2x512xf32>
    %141 = vector.broadcast %3 : vector<1x512xf32> to vector<2x512xf32>
    %142 = arith.addf %141, %140 : vector<2x512xf32>
    %cst_38 = arith.constant dense<0.000000e+00> : vector<2x512xf32>
    %143 = tpu.matmul %105, %0, %cst_38 {dimension_numbers = #tpu.dot_dimension_numbers<[1], [0], [0], [1], [0, 0, 1, 1], [], []>} : vector<2x128xf32>, vector<128x512xf32>, vector<2x512xf32> -> vector<2x512xf32>
    %144 = arith.addf %142, %143 : vector<2x512xf32>
    %145 = vector.extract_strided_slice %144 {offsets = [0, 0], sizes = [2, 128], strides = [1, 1]} : vector<2x512xf32> to vector<2x128xf32>
    %146 = arith.negf %145 : vector<2x128xf32>
    %147 = math.exp %146 : vector<2x128xf32>
    %cst_39 = arith.constant 1.000000e+00 : f32
    %148 = vector.broadcast %cst_39 : f32 to vector<2x128xf32>
    %149 = arith.addf %148, %147 : vector<2x128xf32>
    %150 = arith.divf %148, %149 : vector<2x128xf32>
    %151 = vector.extract_strided_slice %144 {offsets = [0, 128], sizes = [2, 128], strides = [1, 1]} : vector<2x512xf32> to vector<2x128xf32>
    %152 = arith.negf %151 : vector<2x128xf32>
    %153 = math.exp %152 : vector<2x128xf32>
    %cst_40 = arith.constant 1.000000e+00 : f32
    %154 = vector.broadcast %cst_40 : f32 to vector<2x128xf32>
    %155 = arith.addf %154, %153 : vector<2x128xf32>
    %156 = arith.divf %154, %155 : vector<2x128xf32>
    %157 = vector.extract_strided_slice %144 {offsets = [0, 256], sizes = [2, 128], strides = [1, 1]} : vector<2x512xf32> to vector<2x128xf32>
    %158 = math.tanh %157 : vector<2x128xf32>
    %159 = vector.extract_strided_slice %144 {offsets = [0, 384], sizes = [2, 128], strides = [1, 1]} : vector<2x512xf32> to vector<2x128xf32>
    %160 = arith.negf %159 : vector<2x128xf32>
    %161 = math.exp %160 : vector<2x128xf32>
    %cst_41 = arith.constant 1.000000e+00 : f32
    %162 = vector.broadcast %cst_41 : f32 to vector<2x128xf32>
    %163 = arith.addf %162, %161 : vector<2x128xf32>
    %164 = arith.divf %162, %163 : vector<2x128xf32>
    %165 = arith.mulf %156, %103 : vector<2x128xf32>
    %166 = arith.mulf %150, %158 : vector<2x128xf32>
    %167 = arith.addf %165, %166 : vector<2x128xf32>
    %168 = math.tanh %167 : vector<2x128xf32>
    %169 = arith.mulf %164, %168 : vector<2x128xf32>
    %cst_42 = arith.constant dense<0.000000e+00> : vector<2x512xf32>
    %170 = tpu.matmul %135, %2, %cst_42 {dimension_numbers = #tpu.dot_dimension_numbers<[1], [0], [0], [1], [0, 0, 1, 1], [], []>} : vector<2x128xf32>, vector<128x512xf32>, vector<2x512xf32> -> vector<2x512xf32>
    %171 = vector.broadcast %4 : vector<1x512xf32> to vector<2x512xf32>
    %172 = arith.addf %171, %170 : vector<2x512xf32>
    %cst_43 = arith.constant dense<0.000000e+00> : vector<2x512xf32>
    %173 = tpu.matmul %169, %1, %cst_43 {dimension_numbers = #tpu.dot_dimension_numbers<[1], [0], [0], [1], [0, 0, 1, 1], [], []>} : vector<2x128xf32>, vector<128x512xf32>, vector<2x512xf32> -> vector<2x512xf32>
    %174 = arith.addf %172, %173 : vector<2x512xf32>
    %175 = vector.extract_strided_slice %174 {offsets = [0, 0], sizes = [2, 128], strides = [1, 1]} : vector<2x512xf32> to vector<2x128xf32>
    %176 = arith.negf %175 : vector<2x128xf32>
    %177 = math.exp %176 : vector<2x128xf32>
    %cst_44 = arith.constant 1.000000e+00 : f32
    %178 = vector.broadcast %cst_44 : f32 to vector<2x128xf32>
    %179 = arith.addf %178, %177 : vector<2x128xf32>
    %180 = arith.divf %178, %179 : vector<2x128xf32>
    %181 = vector.extract_strided_slice %174 {offsets = [0, 128], sizes = [2, 128], strides = [1, 1]} : vector<2x512xf32> to vector<2x128xf32>
    %182 = arith.negf %181 : vector<2x128xf32>
    %183 = math.exp %182 : vector<2x128xf32>
    %cst_45 = arith.constant 1.000000e+00 : f32
    %184 = vector.broadcast %cst_45 : f32 to vector<2x128xf32>
    %185 = arith.addf %184, %183 : vector<2x128xf32>
    %186 = arith.divf %184, %185 : vector<2x128xf32>
    %187 = vector.extract_strided_slice %174 {offsets = [0, 256], sizes = [2, 128], strides = [1, 1]} : vector<2x512xf32> to vector<2x128xf32>
    %188 = math.tanh %187 : vector<2x128xf32>
    %189 = vector.extract_strided_slice %174 {offsets = [0, 384], sizes = [2, 128], strides = [1, 1]} : vector<2x512xf32> to vector<2x128xf32>
    %190 = arith.negf %189 : vector<2x128xf32>
    %191 = math.exp %190 : vector<2x128xf32>
    %cst_46 = arith.constant 1.000000e+00 : f32
    %192 = vector.broadcast %cst_46 : f32 to vector<2x128xf32>
    %193 = arith.addf %192, %191 : vector<2x128xf32>
    %194 = arith.divf %192, %193 : vector<2x128xf32>
    %195 = arith.mulf %186, %133 : vector<2x128xf32>
    %196 = arith.mulf %180, %188 : vector<2x128xf32>
    %197 = arith.addf %195, %196 : vector<2x128xf32>
    %198 = math.tanh %197 : vector<2x128xf32>
    %199 = arith.mulf %194, %198 : vector<2x128xf32>
    %c0_47 = arith.constant 0 : index
    %c3 = arith.constant 3 : index
    %200 = vector.load %arg0[%c0_47, %c3] : memref<2x8xf32, #tpu.memory_space<vmem>>, vector<2x1xf32>
    %c0_48 = arith.constant 0 : index
    %c0_49 = arith.constant 0 : index
    %201 = vector.load %arg1[%c0_48, %c0_49] : memref<1x512xf32, #tpu.memory_space<vmem>>, vector<1x512xf32>
    %202 = vector.broadcast %200 : vector<2x1xf32> to vector<2x512xf32>
    %203 = vector.broadcast %201 : vector<1x512xf32> to vector<2x512xf32>
    %204 = arith.mulf %202, %203 : vector<2x512xf32>
    %205 = vector.broadcast %3 : vector<1x512xf32> to vector<2x512xf32>
    %206 = arith.addf %205, %204 : vector<2x512xf32>
    %cst_50 = arith.constant dense<0.000000e+00> : vector<2x512xf32>
    %207 = tpu.matmul %169, %0, %cst_50 {dimension_numbers = #tpu.dot_dimension_numbers<[1], [0], [0], [1], [0, 0, 1, 1], [], []>} : vector<2x128xf32>, vector<128x512xf32>, vector<2x512xf32> -> vector<2x512xf32>
    %208 = arith.addf %206, %207 : vector<2x512xf32>
    %209 = vector.extract_strided_slice %208 {offsets = [0, 0], sizes = [2, 128], strides = [1, 1]} : vector<2x512xf32> to vector<2x128xf32>
    %210 = arith.negf %209 : vector<2x128xf32>
    %211 = math.exp %210 : vector<2x128xf32>
    %cst_51 = arith.constant 1.000000e+00 : f32
    %212 = vector.broadcast %cst_51 : f32 to vector<2x128xf32>
    %213 = arith.addf %212, %211 : vector<2x128xf32>
    %214 = arith.divf %212, %213 : vector<2x128xf32>
    %215 = vector.extract_strided_slice %208 {offsets = [0, 128], sizes = [2, 128], strides = [1, 1]} : vector<2x512xf32> to vector<2x128xf32>
    %216 = arith.negf %215 : vector<2x128xf32>
    %217 = math.exp %216 : vector<2x128xf32>
    %cst_52 = arith.constant 1.000000e+00 : f32
    %218 = vector.broadcast %cst_52 : f32 to vector<2x128xf32>
    %219 = arith.addf %218, %217 : vector<2x128xf32>
    %220 = arith.divf %218, %219 : vector<2x128xf32>
    %221 = vector.extract_strided_slice %208 {offsets = [0, 256], sizes = [2, 128], strides = [1, 1]} : vector<2x512xf32> to vector<2x128xf32>
    %222 = math.tanh %221 : vector<2x128xf32>
    %223 = vector.extract_strided_slice %208 {offsets = [0, 384], sizes = [2, 128], strides = [1, 1]} : vector<2x512xf32> to vector<2x128xf32>
    %224 = arith.negf %223 : vector<2x128xf32>
    %225 = math.exp %224 : vector<2x128xf32>
    %cst_53 = arith.constant 1.000000e+00 : f32
    %226 = vector.broadcast %cst_53 : f32 to vector<2x128xf32>
    %227 = arith.addf %226, %225 : vector<2x128xf32>
    %228 = arith.divf %226, %227 : vector<2x128xf32>
    %229 = arith.mulf %220, %167 : vector<2x128xf32>
    %230 = arith.mulf %214, %222 : vector<2x128xf32>
    %231 = arith.addf %229, %230 : vector<2x128xf32>
    %232 = math.tanh %231 : vector<2x128xf32>
    %233 = arith.mulf %228, %232 : vector<2x128xf32>
    %cst_54 = arith.constant dense<0.000000e+00> : vector<2x512xf32>
    %234 = tpu.matmul %199, %2, %cst_54 {dimension_numbers = #tpu.dot_dimension_numbers<[1], [0], [0], [1], [0, 0, 1, 1], [], []>} : vector<2x128xf32>, vector<128x512xf32>, vector<2x512xf32> -> vector<2x512xf32>
    %235 = vector.broadcast %4 : vector<1x512xf32> to vector<2x512xf32>
    %236 = arith.addf %235, %234 : vector<2x512xf32>
    %cst_55 = arith.constant dense<0.000000e+00> : vector<2x512xf32>
    %237 = tpu.matmul %233, %1, %cst_55 {dimension_numbers = #tpu.dot_dimension_numbers<[1], [0], [0], [1], [0, 0, 1, 1], [], []>} : vector<2x128xf32>, vector<128x512xf32>, vector<2x512xf32> -> vector<2x512xf32>
    %238 = arith.addf %236, %237 : vector<2x512xf32>
    %239 = vector.extract_strided_slice %238 {offsets = [0, 0], sizes = [2, 128], strides = [1, 1]} : vector<2x512xf32> to vector<2x128xf32>
    %240 = arith.negf %239 : vector<2x128xf32>
    %241 = math.exp %240 : vector<2x128xf32>
    %cst_56 = arith.constant 1.000000e+00 : f32
    %242 = vector.broadcast %cst_56 : f32 to vector<2x128xf32>
    %243 = arith.addf %242, %241 : vector<2x128xf32>
    %244 = arith.divf %242, %243 : vector<2x128xf32>
    %245 = vector.extract_strided_slice %238 {offsets = [0, 128], sizes = [2, 128], strides = [1, 1]} : vector<2x512xf32> to vector<2x128xf32>
    %246 = arith.negf %245 : vector<2x128xf32>
    %247 = math.exp %246 : vector<2x128xf32>
    %cst_57 = arith.constant 1.000000e+00 : f32
    %248 = vector.broadcast %cst_57 : f32 to vector<2x128xf32>
    %249 = arith.addf %248, %247 : vector<2x128xf32>
    %250 = arith.divf %248, %249 : vector<2x128xf32>
    %251 = vector.extract_strided_slice %238 {offsets = [0, 256], sizes = [2, 128], strides = [1, 1]} : vector<2x512xf32> to vector<2x128xf32>
    %252 = math.tanh %251 : vector<2x128xf32>
    %253 = vector.extract_strided_slice %238 {offsets = [0, 384], sizes = [2, 128], strides = [1, 1]} : vector<2x512xf32> to vector<2x128xf32>
    %254 = arith.negf %253 : vector<2x128xf32>
    %255 = math.exp %254 : vector<2x128xf32>
    %cst_58 = arith.constant 1.000000e+00 : f32
    %256 = vector.broadcast %cst_58 : f32 to vector<2x128xf32>
    %257 = arith.addf %256, %255 : vector<2x128xf32>
    %258 = arith.divf %256, %257 : vector<2x128xf32>
    %259 = arith.mulf %250, %197 : vector<2x128xf32>
    %260 = arith.mulf %244, %252 : vector<2x128xf32>
    %261 = arith.addf %259, %260 : vector<2x128xf32>
    %262 = math.tanh %261 : vector<2x128xf32>
    %263 = arith.mulf %258, %262 : vector<2x128xf32>
    %c0_59 = arith.constant 0 : index
    %c4 = arith.constant 4 : index
    %264 = vector.load %arg0[%c0_59, %c4] : memref<2x8xf32, #tpu.memory_space<vmem>>, vector<2x1xf32>
    %c0_60 = arith.constant 0 : index
    %c0_61 = arith.constant 0 : index
    %265 = vector.load %arg1[%c0_60, %c0_61] : memref<1x512xf32, #tpu.memory_space<vmem>>, vector<1x512xf32>
    %266 = vector.broadcast %264 : vector<2x1xf32> to vector<2x512xf32>
    %267 = vector.broadcast %265 : vector<1x512xf32> to vector<2x512xf32>
    %268 = arith.mulf %266, %267 : vector<2x512xf32>
    %269 = vector.broadcast %3 : vector<1x512xf32> to vector<2x512xf32>
    %270 = arith.addf %269, %268 : vector<2x512xf32>
    %cst_62 = arith.constant dense<0.000000e+00> : vector<2x512xf32>
    %271 = tpu.matmul %233, %0, %cst_62 {dimension_numbers = #tpu.dot_dimension_numbers<[1], [0], [0], [1], [0, 0, 1, 1], [], []>} : vector<2x128xf32>, vector<128x512xf32>, vector<2x512xf32> -> vector<2x512xf32>
    %272 = arith.addf %270, %271 : vector<2x512xf32>
    %273 = vector.extract_strided_slice %272 {offsets = [0, 0], sizes = [2, 128], strides = [1, 1]} : vector<2x512xf32> to vector<2x128xf32>
    %274 = arith.negf %273 : vector<2x128xf32>
    %275 = math.exp %274 : vector<2x128xf32>
    %cst_63 = arith.constant 1.000000e+00 : f32
    %276 = vector.broadcast %cst_63 : f32 to vector<2x128xf32>
    %277 = arith.addf %276, %275 : vector<2x128xf32>
    %278 = arith.divf %276, %277 : vector<2x128xf32>
    %279 = vector.extract_strided_slice %272 {offsets = [0, 128], sizes = [2, 128], strides = [1, 1]} : vector<2x512xf32> to vector<2x128xf32>
    %280 = arith.negf %279 : vector<2x128xf32>
    %281 = math.exp %280 : vector<2x128xf32>
    %cst_64 = arith.constant 1.000000e+00 : f32
    %282 = vector.broadcast %cst_64 : f32 to vector<2x128xf32>
    %283 = arith.addf %282, %281 : vector<2x128xf32>
    %284 = arith.divf %282, %283 : vector<2x128xf32>
    %285 = vector.extract_strided_slice %272 {offsets = [0, 256], sizes = [2, 128], strides = [1, 1]} : vector<2x512xf32> to vector<2x128xf32>
    %286 = math.tanh %285 : vector<2x128xf32>
    %287 = vector.extract_strided_slice %272 {offsets = [0, 384], sizes = [2, 128], strides = [1, 1]} : vector<2x512xf32> to vector<2x128xf32>
    %288 = arith.negf %287 : vector<2x128xf32>
    %289 = math.exp %288 : vector<2x128xf32>
    %cst_65 = arith.constant 1.000000e+00 : f32
    %290 = vector.broadcast %cst_65 : f32 to vector<2x128xf32>
    %291 = arith.addf %290, %289 : vector<2x128xf32>
    %292 = arith.divf %290, %291 : vector<2x128xf32>
    %293 = arith.mulf %284, %231 : vector<2x128xf32>
    %294 = arith.mulf %278, %286 : vector<2x128xf32>
    %295 = arith.addf %293, %294 : vector<2x128xf32>
    %296 = math.tanh %295 : vector<2x128xf32>
    %297 = arith.mulf %292, %296 : vector<2x128xf32>
    %cst_66 = arith.constant dense<0.000000e+00> : vector<2x512xf32>
    %298 = tpu.matmul %263, %2, %cst_66 {dimension_numbers = #tpu.dot_dimension_numbers<[1], [0], [0], [1], [0, 0, 1, 1], [], []>} : vector<2x128xf32>, vector<128x512xf32>, vector<2x512xf32> -> vector<2x512xf32>
    %299 = vector.broadcast %4 : vector<1x512xf32> to vector<2x512xf32>
    %300 = arith.addf %299, %298 : vector<2x512xf32>
    %cst_67 = arith.constant dense<0.000000e+00> : vector<2x512xf32>
    %301 = tpu.matmul %297, %1, %cst_67 {dimension_numbers = #tpu.dot_dimension_numbers<[1], [0], [0], [1], [0, 0, 1, 1], [], []>} : vector<2x128xf32>, vector<128x512xf32>, vector<2x512xf32> -> vector<2x512xf32>
    %302 = arith.addf %300, %301 : vector<2x512xf32>
    %303 = vector.extract_strided_slice %302 {offsets = [0, 0], sizes = [2, 128], strides = [1, 1]} : vector<2x512xf32> to vector<2x128xf32>
    %304 = arith.negf %303 : vector<2x128xf32>
    %305 = math.exp %304 : vector<2x128xf32>
    %cst_68 = arith.constant 1.000000e+00 : f32
    %306 = vector.broadcast %cst_68 : f32 to vector<2x128xf32>
    %307 = arith.addf %306, %305 : vector<2x128xf32>
    %308 = arith.divf %306, %307 : vector<2x128xf32>
    %309 = vector.extract_strided_slice %302 {offsets = [0, 128], sizes = [2, 128], strides = [1, 1]} : vector<2x512xf32> to vector<2x128xf32>
    %310 = arith.negf %309 : vector<2x128xf32>
    %311 = math.exp %310 : vector<2x128xf32>
    %cst_69 = arith.constant 1.000000e+00 : f32
    %312 = vector.broadcast %cst_69 : f32 to vector<2x128xf32>
    %313 = arith.addf %312, %311 : vector<2x128xf32>
    %314 = arith.divf %312, %313 : vector<2x128xf32>
    %315 = vector.extract_strided_slice %302 {offsets = [0, 256], sizes = [2, 128], strides = [1, 1]} : vector<2x512xf32> to vector<2x128xf32>
    %316 = math.tanh %315 : vector<2x128xf32>
    %317 = vector.extract_strided_slice %302 {offsets = [0, 384], sizes = [2, 128], strides = [1, 1]} : vector<2x512xf32> to vector<2x128xf32>
    %318 = arith.negf %317 : vector<2x128xf32>
    %319 = math.exp %318 : vector<2x128xf32>
    %cst_70 = arith.constant 1.000000e+00 : f32
    %320 = vector.broadcast %cst_70 : f32 to vector<2x128xf32>
    %321 = arith.addf %320, %319 : vector<2x128xf32>
    %322 = arith.divf %320, %321 : vector<2x128xf32>
    %323 = arith.mulf %314, %261 : vector<2x128xf32>
    %324 = arith.mulf %308, %316 : vector<2x128xf32>
    %325 = arith.addf %323, %324 : vector<2x128xf32>
    %326 = math.tanh %325 : vector<2x128xf32>
    %327 = arith.mulf %322, %326 : vector<2x128xf32>
    %c0_71 = arith.constant 0 : index
    %c5 = arith.constant 5 : index
    %328 = vector.load %arg0[%c0_71, %c5] : memref<2x8xf32, #tpu.memory_space<vmem>>, vector<2x1xf32>
    %c0_72 = arith.constant 0 : index
    %c0_73 = arith.constant 0 : index
    %329 = vector.load %arg1[%c0_72, %c0_73] : memref<1x512xf32, #tpu.memory_space<vmem>>, vector<1x512xf32>
    %330 = vector.broadcast %328 : vector<2x1xf32> to vector<2x512xf32>
    %331 = vector.broadcast %329 : vector<1x512xf32> to vector<2x512xf32>
    %332 = arith.mulf %330, %331 : vector<2x512xf32>
    %333 = vector.broadcast %3 : vector<1x512xf32> to vector<2x512xf32>
    %334 = arith.addf %333, %332 : vector<2x512xf32>
    %cst_74 = arith.constant dense<0.000000e+00> : vector<2x512xf32>
    %335 = tpu.matmul %297, %0, %cst_74 {dimension_numbers = #tpu.dot_dimension_numbers<[1], [0], [0], [1], [0, 0, 1, 1], [], []>} : vector<2x128xf32>, vector<128x512xf32>, vector<2x512xf32> -> vector<2x512xf32>
    %336 = arith.addf %334, %335 : vector<2x512xf32>
    %337 = vector.extract_strided_slice %336 {offsets = [0, 0], sizes = [2, 128], strides = [1, 1]} : vector<2x512xf32> to vector<2x128xf32>
    %338 = arith.negf %337 : vector<2x128xf32>
    %339 = math.exp %338 : vector<2x128xf32>
    %cst_75 = arith.constant 1.000000e+00 : f32
    %340 = vector.broadcast %cst_75 : f32 to vector<2x128xf32>
    %341 = arith.addf %340, %339 : vector<2x128xf32>
    %342 = arith.divf %340, %341 : vector<2x128xf32>
    %343 = vector.extract_strided_slice %336 {offsets = [0, 128], sizes = [2, 128], strides = [1, 1]} : vector<2x512xf32> to vector<2x128xf32>
    %344 = arith.negf %343 : vector<2x128xf32>
    %345 = math.exp %344 : vector<2x128xf32>
    %cst_76 = arith.constant 1.000000e+00 : f32
    %346 = vector.broadcast %cst_76 : f32 to vector<2x128xf32>
    %347 = arith.addf %346, %345 : vector<2x128xf32>
    %348 = arith.divf %346, %347 : vector<2x128xf32>
    %349 = vector.extract_strided_slice %336 {offsets = [0, 256], sizes = [2, 128], strides = [1, 1]} : vector<2x512xf32> to vector<2x128xf32>
    %350 = math.tanh %349 : vector<2x128xf32>
    %351 = vector.extract_strided_slice %336 {offsets = [0, 384], sizes = [2, 128], strides = [1, 1]} : vector<2x512xf32> to vector<2x128xf32>
    %352 = arith.negf %351 : vector<2x128xf32>
    %353 = math.exp %352 : vector<2x128xf32>
    %cst_77 = arith.constant 1.000000e+00 : f32
    %354 = vector.broadcast %cst_77 : f32 to vector<2x128xf32>
    %355 = arith.addf %354, %353 : vector<2x128xf32>
    %356 = arith.divf %354, %355 : vector<2x128xf32>
    %357 = arith.mulf %348, %295 : vector<2x128xf32>
    %358 = arith.mulf %342, %350 : vector<2x128xf32>
    %359 = arith.addf %357, %358 : vector<2x128xf32>
    %360 = math.tanh %359 : vector<2x128xf32>
    %361 = arith.mulf %356, %360 : vector<2x128xf32>
    %cst_78 = arith.constant dense<0.000000e+00> : vector<2x512xf32>
    %362 = tpu.matmul %327, %2, %cst_78 {dimension_numbers = #tpu.dot_dimension_numbers<[1], [0], [0], [1], [0, 0, 1, 1], [], []>} : vector<2x128xf32>, vector<128x512xf32>, vector<2x512xf32> -> vector<2x512xf32>
    %363 = vector.broadcast %4 : vector<1x512xf32> to vector<2x512xf32>
    %364 = arith.addf %363, %362 : vector<2x512xf32>
    %cst_79 = arith.constant dense<0.000000e+00> : vector<2x512xf32>
    %365 = tpu.matmul %361, %1, %cst_79 {dimension_numbers = #tpu.dot_dimension_numbers<[1], [0], [0], [1], [0, 0, 1, 1], [], []>} : vector<2x128xf32>, vector<128x512xf32>, vector<2x512xf32> -> vector<2x512xf32>
    %366 = arith.addf %364, %365 : vector<2x512xf32>
    %367 = vector.extract_strided_slice %366 {offsets = [0, 0], sizes = [2, 128], strides = [1, 1]} : vector<2x512xf32> to vector<2x128xf32>
    %368 = arith.negf %367 : vector<2x128xf32>
    %369 = math.exp %368 : vector<2x128xf32>
    %cst_80 = arith.constant 1.000000e+00 : f32
    %370 = vector.broadcast %cst_80 : f32 to vector<2x128xf32>
    %371 = arith.addf %370, %369 : vector<2x128xf32>
    %372 = arith.divf %370, %371 : vector<2x128xf32>
    %373 = vector.extract_strided_slice %366 {offsets = [0, 128], sizes = [2, 128], strides = [1, 1]} : vector<2x512xf32> to vector<2x128xf32>
    %374 = arith.negf %373 : vector<2x128xf32>
    %375 = math.exp %374 : vector<2x128xf32>
    %cst_81 = arith.constant 1.000000e+00 : f32
    %376 = vector.broadcast %cst_81 : f32 to vector<2x128xf32>
    %377 = arith.addf %376, %375 : vector<2x128xf32>
    %378 = arith.divf %376, %377 : vector<2x128xf32>
    %379 = vector.extract_strided_slice %366 {offsets = [0, 256], sizes = [2, 128], strides = [1, 1]} : vector<2x512xf32> to vector<2x128xf32>
    %380 = math.tanh %379 : vector<2x128xf32>
    %381 = vector.extract_strided_slice %366 {offsets = [0, 384], sizes = [2, 128], strides = [1, 1]} : vector<2x512xf32> to vector<2x128xf32>
    %382 = arith.negf %381 : vector<2x128xf32>
    %383 = math.exp %382 : vector<2x128xf32>
    %cst_82 = arith.constant 1.000000e+00 : f32
    %384 = vector.broadcast %cst_82 : f32 to vector<2x128xf32>
    %385 = arith.addf %384, %383 : vector<2x128xf32>
    %386 = arith.divf %384, %385 : vector<2x128xf32>
    %387 = arith.mulf %378, %325 : vector<2x128xf32>
    %388 = arith.mulf %372, %380 : vector<2x128xf32>
    %389 = arith.addf %387, %388 : vector<2x128xf32>
    %390 = math.tanh %389 : vector<2x128xf32>
    %391 = arith.mulf %386, %390 : vector<2x128xf32>
    %c0_83 = arith.constant 0 : index
    %c6 = arith.constant 6 : index
    %392 = vector.load %arg0[%c0_83, %c6] : memref<2x8xf32, #tpu.memory_space<vmem>>, vector<2x1xf32>
    %c0_84 = arith.constant 0 : index
    %c0_85 = arith.constant 0 : index
    %393 = vector.load %arg1[%c0_84, %c0_85] : memref<1x512xf32, #tpu.memory_space<vmem>>, vector<1x512xf32>
    %394 = vector.broadcast %392 : vector<2x1xf32> to vector<2x512xf32>
    %395 = vector.broadcast %393 : vector<1x512xf32> to vector<2x512xf32>
    %396 = arith.mulf %394, %395 : vector<2x512xf32>
    %397 = vector.broadcast %3 : vector<1x512xf32> to vector<2x512xf32>
    %398 = arith.addf %397, %396 : vector<2x512xf32>
    %cst_86 = arith.constant dense<0.000000e+00> : vector<2x512xf32>
    %399 = tpu.matmul %361, %0, %cst_86 {dimension_numbers = #tpu.dot_dimension_numbers<[1], [0], [0], [1], [0, 0, 1, 1], [], []>} : vector<2x128xf32>, vector<128x512xf32>, vector<2x512xf32> -> vector<2x512xf32>
    %400 = arith.addf %398, %399 : vector<2x512xf32>
    %401 = vector.extract_strided_slice %400 {offsets = [0, 0], sizes = [2, 128], strides = [1, 1]} : vector<2x512xf32> to vector<2x128xf32>
    %402 = arith.negf %401 : vector<2x128xf32>
    %403 = math.exp %402 : vector<2x128xf32>
    %cst_87 = arith.constant 1.000000e+00 : f32
    %404 = vector.broadcast %cst_87 : f32 to vector<2x128xf32>
    %405 = arith.addf %404, %403 : vector<2x128xf32>
    %406 = arith.divf %404, %405 : vector<2x128xf32>
    %407 = vector.extract_strided_slice %400 {offsets = [0, 128], sizes = [2, 128], strides = [1, 1]} : vector<2x512xf32> to vector<2x128xf32>
    %408 = arith.negf %407 : vector<2x128xf32>
    %409 = math.exp %408 : vector<2x128xf32>
    %cst_88 = arith.constant 1.000000e+00 : f32
    %410 = vector.broadcast %cst_88 : f32 to vector<2x128xf32>
    %411 = arith.addf %410, %409 : vector<2x128xf32>
    %412 = arith.divf %410, %411 : vector<2x128xf32>
    %413 = vector.extract_strided_slice %400 {offsets = [0, 256], sizes = [2, 128], strides = [1, 1]} : vector<2x512xf32> to vector<2x128xf32>
    %414 = math.tanh %413 : vector<2x128xf32>
    %415 = vector.extract_strided_slice %400 {offsets = [0, 384], sizes = [2, 128], strides = [1, 1]} : vector<2x512xf32> to vector<2x128xf32>
    %416 = arith.negf %415 : vector<2x128xf32>
    %417 = math.exp %416 : vector<2x128xf32>
    %cst_89 = arith.constant 1.000000e+00 : f32
    %418 = vector.broadcast %cst_89 : f32 to vector<2x128xf32>
    %419 = arith.addf %418, %417 : vector<2x128xf32>
    %420 = arith.divf %418, %419 : vector<2x128xf32>
    %421 = arith.mulf %412, %359 : vector<2x128xf32>
    %422 = arith.mulf %406, %414 : vector<2x128xf32>
    %423 = arith.addf %421, %422 : vector<2x128xf32>
    %424 = math.tanh %423 : vector<2x128xf32>
    %425 = arith.mulf %420, %424 : vector<2x128xf32>
    %cst_90 = arith.constant dense<0.000000e+00> : vector<2x512xf32>
    %426 = tpu.matmul %391, %2, %cst_90 {dimension_numbers = #tpu.dot_dimension_numbers<[1], [0], [0], [1], [0, 0, 1, 1], [], []>} : vector<2x128xf32>, vector<128x512xf32>, vector<2x512xf32> -> vector<2x512xf32>
    %427 = vector.broadcast %4 : vector<1x512xf32> to vector<2x512xf32>
    %428 = arith.addf %427, %426 : vector<2x512xf32>
    %cst_91 = arith.constant dense<0.000000e+00> : vector<2x512xf32>
    %429 = tpu.matmul %425, %1, %cst_91 {dimension_numbers = #tpu.dot_dimension_numbers<[1], [0], [0], [1], [0, 0, 1, 1], [], []>} : vector<2x128xf32>, vector<128x512xf32>, vector<2x512xf32> -> vector<2x512xf32>
    %430 = arith.addf %428, %429 : vector<2x512xf32>
    %431 = vector.extract_strided_slice %430 {offsets = [0, 0], sizes = [2, 128], strides = [1, 1]} : vector<2x512xf32> to vector<2x128xf32>
    %432 = arith.negf %431 : vector<2x128xf32>
    %433 = math.exp %432 : vector<2x128xf32>
    %cst_92 = arith.constant 1.000000e+00 : f32
    %434 = vector.broadcast %cst_92 : f32 to vector<2x128xf32>
    %435 = arith.addf %434, %433 : vector<2x128xf32>
    %436 = arith.divf %434, %435 : vector<2x128xf32>
    %437 = vector.extract_strided_slice %430 {offsets = [0, 128], sizes = [2, 128], strides = [1, 1]} : vector<2x512xf32> to vector<2x128xf32>
    %438 = arith.negf %437 : vector<2x128xf32>
    %439 = math.exp %438 : vector<2x128xf32>
    %cst_93 = arith.constant 1.000000e+00 : f32
    %440 = vector.broadcast %cst_93 : f32 to vector<2x128xf32>
    %441 = arith.addf %440, %439 : vector<2x128xf32>
    %442 = arith.divf %440, %441 : vector<2x128xf32>
    %443 = vector.extract_strided_slice %430 {offsets = [0, 256], sizes = [2, 128], strides = [1, 1]} : vector<2x512xf32> to vector<2x128xf32>
    %444 = math.tanh %443 : vector<2x128xf32>
    %445 = vector.extract_strided_slice %430 {offsets = [0, 384], sizes = [2, 128], strides = [1, 1]} : vector<2x512xf32> to vector<2x128xf32>
    %446 = arith.negf %445 : vector<2x128xf32>
    %447 = math.exp %446 : vector<2x128xf32>
    %cst_94 = arith.constant 1.000000e+00 : f32
    %448 = vector.broadcast %cst_94 : f32 to vector<2x128xf32>
    %449 = arith.addf %448, %447 : vector<2x128xf32>
    %450 = arith.divf %448, %449 : vector<2x128xf32>
    %451 = arith.mulf %442, %389 : vector<2x128xf32>
    %452 = arith.mulf %436, %444 : vector<2x128xf32>
    %453 = arith.addf %451, %452 : vector<2x128xf32>
    %454 = math.tanh %453 : vector<2x128xf32>
    %455 = arith.mulf %450, %454 : vector<2x128xf32>
    %c0_95 = arith.constant 0 : index
    %c7 = arith.constant 7 : index
    %456 = vector.load %arg0[%c0_95, %c7] : memref<2x8xf32, #tpu.memory_space<vmem>>, vector<2x1xf32>
    %c0_96 = arith.constant 0 : index
    %c0_97 = arith.constant 0 : index
    %457 = vector.load %arg1[%c0_96, %c0_97] : memref<1x512xf32, #tpu.memory_space<vmem>>, vector<1x512xf32>
    %458 = vector.broadcast %456 : vector<2x1xf32> to vector<2x512xf32>
    %459 = vector.broadcast %457 : vector<1x512xf32> to vector<2x512xf32>
    %460 = arith.mulf %458, %459 : vector<2x512xf32>
    %461 = vector.broadcast %3 : vector<1x512xf32> to vector<2x512xf32>
    %462 = arith.addf %461, %460 : vector<2x512xf32>
    %cst_98 = arith.constant dense<0.000000e+00> : vector<2x512xf32>
    %463 = tpu.matmul %425, %0, %cst_98 {dimension_numbers = #tpu.dot_dimension_numbers<[1], [0], [0], [1], [0, 0, 1, 1], [], []>} : vector<2x128xf32>, vector<128x512xf32>, vector<2x512xf32> -> vector<2x512xf32>
    %464 = arith.addf %462, %463 : vector<2x512xf32>
    %465 = vector.extract_strided_slice %464 {offsets = [0, 0], sizes = [2, 128], strides = [1, 1]} : vector<2x512xf32> to vector<2x128xf32>
    %466 = arith.negf %465 : vector<2x128xf32>
    %467 = math.exp %466 : vector<2x128xf32>
    %cst_99 = arith.constant 1.000000e+00 : f32
    %468 = vector.broadcast %cst_99 : f32 to vector<2x128xf32>
    %469 = arith.addf %468, %467 : vector<2x128xf32>
    %470 = arith.divf %468, %469 : vector<2x128xf32>
    %471 = vector.extract_strided_slice %464 {offsets = [0, 128], sizes = [2, 128], strides = [1, 1]} : vector<2x512xf32> to vector<2x128xf32>
    %472 = arith.negf %471 : vector<2x128xf32>
    %473 = math.exp %472 : vector<2x128xf32>
    %cst_100 = arith.constant 1.000000e+00 : f32
    %474 = vector.broadcast %cst_100 : f32 to vector<2x128xf32>
    %475 = arith.addf %474, %473 : vector<2x128xf32>
    %476 = arith.divf %474, %475 : vector<2x128xf32>
    %477 = vector.extract_strided_slice %464 {offsets = [0, 256], sizes = [2, 128], strides = [1, 1]} : vector<2x512xf32> to vector<2x128xf32>
    %478 = math.tanh %477 : vector<2x128xf32>
    %479 = vector.extract_strided_slice %464 {offsets = [0, 384], sizes = [2, 128], strides = [1, 1]} : vector<2x512xf32> to vector<2x128xf32>
    %480 = arith.negf %479 : vector<2x128xf32>
    %481 = math.exp %480 : vector<2x128xf32>
    %cst_101 = arith.constant 1.000000e+00 : f32
    %482 = vector.broadcast %cst_101 : f32 to vector<2x128xf32>
    %483 = arith.addf %482, %481 : vector<2x128xf32>
    %484 = arith.divf %482, %483 : vector<2x128xf32>
    %485 = arith.mulf %476, %423 : vector<2x128xf32>
    %486 = arith.mulf %470, %478 : vector<2x128xf32>
    %487 = arith.addf %485, %486 : vector<2x128xf32>
    %488 = math.tanh %487 : vector<2x128xf32>
    %489 = arith.mulf %484, %488 : vector<2x128xf32>
    %cst_102 = arith.constant dense<0.000000e+00> : vector<2x512xf32>
    %490 = tpu.matmul %455, %2, %cst_102 {dimension_numbers = #tpu.dot_dimension_numbers<[1], [0], [0], [1], [0, 0, 1, 1], [], []>} : vector<2x128xf32>, vector<128x512xf32>, vector<2x512xf32> -> vector<2x512xf32>
    %491 = vector.broadcast %4 : vector<1x512xf32> to vector<2x512xf32>
    %492 = arith.addf %491, %490 : vector<2x512xf32>
    %cst_103 = arith.constant dense<0.000000e+00> : vector<2x512xf32>
    %493 = tpu.matmul %489, %1, %cst_103 {dimension_numbers = #tpu.dot_dimension_numbers<[1], [0], [0], [1], [0, 0, 1, 1], [], []>} : vector<2x128xf32>, vector<128x512xf32>, vector<2x512xf32> -> vector<2x512xf32>
    %494 = arith.addf %492, %493 : vector<2x512xf32>
    %495 = vector.extract_strided_slice %494 {offsets = [0, 0], sizes = [2, 128], strides = [1, 1]} : vector<2x512xf32> to vector<2x128xf32>
    %496 = arith.negf %495 : vector<2x128xf32>
    %497 = math.exp %496 : vector<2x128xf32>
    %cst_104 = arith.constant 1.000000e+00 : f32
    %498 = vector.broadcast %cst_104 : f32 to vector<2x128xf32>
    %499 = arith.addf %498, %497 : vector<2x128xf32>
    %500 = arith.divf %498, %499 : vector<2x128xf32>
    %501 = vector.extract_strided_slice %494 {offsets = [0, 128], sizes = [2, 128], strides = [1, 1]} : vector<2x512xf32> to vector<2x128xf32>
    %502 = arith.negf %501 : vector<2x128xf32>
    %503 = math.exp %502 : vector<2x128xf32>
    %cst_105 = arith.constant 1.000000e+00 : f32
    %504 = vector.broadcast %cst_105 : f32 to vector<2x128xf32>
    %505 = arith.addf %504, %503 : vector<2x128xf32>
    %506 = arith.divf %504, %505 : vector<2x128xf32>
    %507 = vector.extract_strided_slice %494 {offsets = [0, 256], sizes = [2, 128], strides = [1, 1]} : vector<2x512xf32> to vector<2x128xf32>
    %508 = math.tanh %507 : vector<2x128xf32>
    %509 = vector.extract_strided_slice %494 {offsets = [0, 384], sizes = [2, 128], strides = [1, 1]} : vector<2x512xf32> to vector<2x128xf32>
    %510 = arith.negf %509 : vector<2x128xf32>
    %511 = math.exp %510 : vector<2x128xf32>
    %cst_106 = arith.constant 1.000000e+00 : f32
    %512 = vector.broadcast %cst_106 : f32 to vector<2x128xf32>
    %513 = arith.addf %512, %511 : vector<2x128xf32>
    %514 = arith.divf %512, %513 : vector<2x128xf32>
    %515 = arith.mulf %506, %453 : vector<2x128xf32>
    %516 = arith.mulf %500, %508 : vector<2x128xf32>
    %517 = arith.addf %515, %516 : vector<2x128xf32>
    %518 = math.tanh %517 : vector<2x128xf32>
    %519 = arith.mulf %514, %518 : vector<2x128xf32>
    %cst_107 = arith.constant dense<0.000000e+00> : vector<2x512xf32>
    %520 = tpu.matmul %519, %5, %cst_107 {dimension_numbers = #tpu.dot_dimension_numbers<[1], [0], [0], [1], [0, 0, 1, 1], [], []>} : vector<2x128xf32>, vector<128x512xf32>, vector<2x512xf32> -> vector<2x512xf32>
    %521 = vector.broadcast %6 : vector<1x512xf32> to vector<2x512xf32>
    %522 = arith.addf %521, %520 : vector<2x512xf32>
    %cst_108 = arith.constant dense<0.000000e+00> : vector<2x512xf32>
    %523 = tpu.matmul %489, %0, %cst_108 {dimension_numbers = #tpu.dot_dimension_numbers<[1], [0], [0], [1], [0, 0, 1, 1], [], []>} : vector<2x128xf32>, vector<128x512xf32>, vector<2x512xf32> -> vector<2x512xf32>
    %524 = arith.addf %522, %523 : vector<2x512xf32>
    %525 = vector.extract_strided_slice %524 {offsets = [0, 0], sizes = [2, 128], strides = [1, 1]} : vector<2x512xf32> to vector<2x128xf32>
    %526 = arith.negf %525 : vector<2x128xf32>
    %527 = math.exp %526 : vector<2x128xf32>
    %cst_109 = arith.constant 1.000000e+00 : f32
    %528 = vector.broadcast %cst_109 : f32 to vector<2x128xf32>
    %529 = arith.addf %528, %527 : vector<2x128xf32>
    %530 = arith.divf %528, %529 : vector<2x128xf32>
    %531 = vector.extract_strided_slice %524 {offsets = [0, 128], sizes = [2, 128], strides = [1, 1]} : vector<2x512xf32> to vector<2x128xf32>
    %532 = arith.negf %531 : vector<2x128xf32>
    %533 = math.exp %532 : vector<2x128xf32>
    %cst_110 = arith.constant 1.000000e+00 : f32
    %534 = vector.broadcast %cst_110 : f32 to vector<2x128xf32>
    %535 = arith.addf %534, %533 : vector<2x128xf32>
    %536 = arith.divf %534, %535 : vector<2x128xf32>
    %537 = vector.extract_strided_slice %524 {offsets = [0, 256], sizes = [2, 128], strides = [1, 1]} : vector<2x512xf32> to vector<2x128xf32>
    %538 = math.tanh %537 : vector<2x128xf32>
    %539 = vector.extract_strided_slice %524 {offsets = [0, 384], sizes = [2, 128], strides = [1, 1]} : vector<2x512xf32> to vector<2x128xf32>
    %540 = arith.negf %539 : vector<2x128xf32>
    %541 = math.exp %540 : vector<2x128xf32>
    %cst_111 = arith.constant 1.000000e+00 : f32
    %542 = vector.broadcast %cst_111 : f32 to vector<2x128xf32>
    %543 = arith.addf %542, %541 : vector<2x128xf32>
    %544 = arith.divf %542, %543 : vector<2x128xf32>
    %545 = arith.mulf %536, %487 : vector<2x128xf32>
    %546 = arith.mulf %530, %538 : vector<2x128xf32>
    %547 = arith.addf %545, %546 : vector<2x128xf32>
    %548 = math.tanh %547 : vector<2x128xf32>
    %549 = arith.mulf %544, %548 : vector<2x128xf32>
    %cst_112 = arith.constant dense<0.000000e+00> : vector<2x512xf32>
    %550 = tpu.matmul %519, %2, %cst_112 {dimension_numbers = #tpu.dot_dimension_numbers<[1], [0], [0], [1], [0, 0, 1, 1], [], []>} : vector<2x128xf32>, vector<128x512xf32>, vector<2x512xf32> -> vector<2x512xf32>
    %551 = vector.broadcast %4 : vector<1x512xf32> to vector<2x512xf32>
    %552 = arith.addf %551, %550 : vector<2x512xf32>
    %cst_113 = arith.constant dense<0.000000e+00> : vector<2x512xf32>
    %553 = tpu.matmul %549, %1, %cst_113 {dimension_numbers = #tpu.dot_dimension_numbers<[1], [0], [0], [1], [0, 0, 1, 1], [], []>} : vector<2x128xf32>, vector<128x512xf32>, vector<2x512xf32> -> vector<2x512xf32>
    %554 = arith.addf %552, %553 : vector<2x512xf32>
    %555 = vector.extract_strided_slice %554 {offsets = [0, 0], sizes = [2, 128], strides = [1, 1]} : vector<2x512xf32> to vector<2x128xf32>
    %556 = arith.negf %555 : vector<2x128xf32>
    %557 = math.exp %556 : vector<2x128xf32>
    %cst_114 = arith.constant 1.000000e+00 : f32
    %558 = vector.broadcast %cst_114 : f32 to vector<2x128xf32>
    %559 = arith.addf %558, %557 : vector<2x128xf32>
    %560 = arith.divf %558, %559 : vector<2x128xf32>
    %561 = vector.extract_strided_slice %554 {offsets = [0, 128], sizes = [2, 128], strides = [1, 1]} : vector<2x512xf32> to vector<2x128xf32>
    %562 = arith.negf %561 : vector<2x128xf32>
    %563 = math.exp %562 : vector<2x128xf32>
    %cst_115 = arith.constant 1.000000e+00 : f32
    %564 = vector.broadcast %cst_115 : f32 to vector<2x128xf32>
    %565 = arith.addf %564, %563 : vector<2x128xf32>
    %566 = arith.divf %564, %565 : vector<2x128xf32>
    %567 = vector.extract_strided_slice %554 {offsets = [0, 256], sizes = [2, 128], strides = [1, 1]} : vector<2x512xf32> to vector<2x128xf32>
    %568 = math.tanh %567 : vector<2x128xf32>
    %569 = vector.extract_strided_slice %554 {offsets = [0, 384], sizes = [2, 128], strides = [1, 1]} : vector<2x512xf32> to vector<2x128xf32>
    %570 = arith.negf %569 : vector<2x128xf32>
    %571 = math.exp %570 : vector<2x128xf32>
    %cst_116 = arith.constant 1.000000e+00 : f32
    %572 = vector.broadcast %cst_116 : f32 to vector<2x128xf32>
    %573 = arith.addf %572, %571 : vector<2x128xf32>
    %574 = arith.divf %572, %573 : vector<2x128xf32>
    %575 = arith.mulf %566, %517 : vector<2x128xf32>
    %576 = arith.mulf %560, %568 : vector<2x128xf32>
    %577 = arith.addf %575, %576 : vector<2x128xf32>
    %578 = math.tanh %577 : vector<2x128xf32>
    %579 = arith.mulf %574, %578 : vector<2x128xf32>
    %c0_117 = arith.constant 0 : index
    %c0_118 = arith.constant 0 : index
    %580 = vector.load %arg4[%c0_117, %c0_118] : memref<128x1xf32, #tpu.memory_space<vmem>>, vector<128x1xf32>
    %cst_119 = arith.constant dense<0.000000e+00> : vector<2x1xf32>
    %581 = tpu.matmul %579, %580, %cst_119 {dimension_numbers = #tpu.dot_dimension_numbers<[1], [0], [0], [1], [0, 0, 1, 1], [], []>} : vector<2x128xf32>, vector<128x1xf32>, vector<2x1xf32> -> vector<2x1xf32>
    %c0_120 = arith.constant 0 : index
    %c0_121 = arith.constant 0 : index
    %582 = vector.load %arg5[%c0_120, %c0_121] : memref<1x1xf32, #tpu.memory_space<vmem>>, vector<1x1xf32>
    %583 = vector.broadcast %582 : vector<1x1xf32> to vector<2x1xf32>
    %584 = arith.addf %581, %583 : vector<2x1xf32>
    %c0_122 = arith.constant 0 : index
    %c0_123 = arith.constant 0 : index
    %585 = vector.load %arg6[%c0_122, %c0_123] : memref<2x1xf32, #tpu.memory_space<vmem>>, vector<2x1xf32>
    tpu.vector_store %arg6[%c0_122, %c0_123], %584 {strides = array<i32>} : memref<2x1xf32, #tpu.memory_space<vmem>>, vector<2x1xf32>,
    return
  }
}

</mosaic_0001>

<llo_original>
// kernel: sequence_forward.1
$region0: #{sequence_forward.1}
  #allocation0 [shape = 'u32[]', space=smem, size = 0x4, offset = 0x4, fixed_abs, tag = 'smem constant byte address 0x4 - core index']
  #allocation1 [shape = 'u32[144,128]{1,0:T(1,128)}', space=vmem, size = 0x12000, scoped, tag = 'internal scratch']
  #allocation2 [shape = 'f32[1,1]{1,0:T(1,128)S(1)}', space=vmem, size = 0x200, scoped, tag = 'scoped memory for sequence_forward.1']
  %s0 = inlined_call_operand.vmem [shape: f32[2,8], index: 0, kind: input, shape index: {}]
  %s1 = inlined_call_operand.vmem [shape: f32[1,512], index: 1, kind: input, shape index: {}]
  %s2 = inlined_call_operand.vmem [shape: f32[3,512], index: 2, kind: input, shape index: {}]
  %s3 = inlined_call_operand.vmem [shape: f32[512,512], index: 3, kind: input, shape index: {}]
  %s4 = inlined_call_operand.vmem [shape: f32[128,1], index: 4, kind: input, shape index: {}]
  %s5 = inlined_call_operand.<no memory space> [shape: f32[1,1], index: 5, kind: input, shape index: {}]
  %s6 = inlined_call_operand.vmem [shape: f32[2,1], index: 6, kind: output, shape index: {}]
  %s7 = sld [smem:[#allocation0]]
  $region34: #{sequence_forward.1} parent=0
    _
  %s9 = ssub.s32 1, %s7
  %s10 = scalar_select 0, %s9, %s7
  %v11 = vstv %s5
  %12 = vst [vmem:[#allocation2] sm:$0x1] %v11
  // Predicated region
  $region2: #{sequence_forward.1} parent=0 // pred_check
    _
  $region3: #{sequence_forward.1} parent=0 // pred_check_branch
    %14 = sbr.rel (0) target = $region5
  $region4: #{sequence_forward.1} parent=0 // pred_region
    _
  $region5: #{sequence_forward.1} parent=0 // pred_fallthru
    _
  // Predicated region
  $region6: #{sequence_forward.1} parent=0 // pred_check
    _
  $region7: #{sequence_forward.1} parent=0 // pred_check_branch
    %16 = sbr.rel (0) target = $region9
  $region8: #{sequence_forward.1} parent=0 // pred_region
    _
  $region9: #{sequence_forward.1} parent=0 // pred_fallthru
    _
  // Predicated region
  $region10: #{sequence_forward.1} parent=0 // pred_check
    _
  $region11: #{sequence_forward.1} parent=0 // pred_check_branch
    %18 = sbr.rel (0) target = $region13
  $region12: #{sequence_forward.1} parent=0 // pred_region
    _
  $region13: #{sequence_forward.1} parent=0 // pred_fallthru
    _
  // Predicated region
  $region14: #{sequence_forward.1} parent=0 // pred_check
    _
  $region15: #{sequence_forward.1} parent=0 // pred_check_branch
    %20 = sbr.rel (0) target = $region17
  $region16: #{sequence_forward.1} parent=0 // pred_region
    _
  $region17: #{sequence_forward.1} parent=0 // pred_fallthru
    _
  // Predicated region
  $region18: #{sequence_forward.1} parent=0 // pred_check
    _
  $region19: #{sequence_forward.1} parent=0 // pred_check_branch
    %22 = sbr.rel (0) target = $region21
  $region20: #{sequence_forward.1} parent=0 // pred_region
    _
  $region21: #{sequence_forward.1} parent=0 // pred_fallthru
    _
  // Predicated region
  $region22: #{sequence_forward.1} parent=0 // pred_check
    _
  $region23: #{sequence_forward.1} parent=0 // pred_check_branch
    %24 = sbr.rel (0) target = $region25
  $region24: #{sequence_forward.1} parent=0 // pred_region
    _
  $region25: #{sequence_forward.1} parent=0 // pred_fallthru
    _
  %v25 = vld [vmem:[%s3] sm:$0xff]
  %v26 = vld [vmem:[%s3 + $0x8] sm:$0xff]
  %v27 = vld [vmem:[%s3 + $0x10] sm:$0xff]
  %v28 = vld [vmem:[%s3 + $0x18] sm:$0xff]
  %v29 = vld [vmem:[%s3 + $0x20] sm:$0xff]
  %v30 = vld [vmem:[%s3 + $0x28] sm:$0xff]
  %v31 = vld [vmem:[%s3 + $0x30] sm:$0xff]
  %v32 = vld [vmem:[%s3 + $0x38] sm:$0xff]
  %v33 = vld [vmem:[%s3 + $0x40] sm:$0xff]
  %v34 = vld [vmem:[%s3 + $0x48] sm:$0xff]
  %v35 = vld [vmem:[%s3 + $0x50] sm:$0xff]
  %v36 = vld [vmem:[%s3 + $0x58] sm:$0xff]
  %v37 = vld [vmem:[%s3 + $0x60] sm:$0xff]
  %v38 = vld [vmem:[%s3 + $0x68] sm:$0xff]
  %v39 = vld [vmem:[%s3 + $0x70] sm:$0xff]
  %v40 = vld [vmem:[%s3 + $0x78] sm:$0xff]
  %v41 = vld [vmem:[%s3 + $0x80] sm:$0xff]
  %v42 = vld [vmem:[%s3 + $0x88] sm:$0xff]
  %v43 = vld [vmem:[%s3 + $0x90] sm:$0xff]
  %v44 = vld [vmem:[%s3 + $0x98] sm:$0xff]
  %v45 = vld [vmem:[%s3 + $0xa0] sm:$0xff]
  %v46 = vld [vmem:[%s3 + $0xa8] sm:$0xff]
  %v47 = vld [vmem:[%s3 + $0xb0] sm:$0xff]
  %v48 = vld [vmem:[%s3 + $0xb8] sm:$0xff]
  %v49 = vld [vmem:[%s3 + $0xc0] sm:$0xff]
  %v50 = vld [vmem:[%s3 + $0xc8] sm:$0xff]
  %v51 = vld [vmem:[%s3 + $0xd0] sm:$0xff]
  %v52 = vld [vmem:[%s3 + $0xd8] sm:$0xff]
  %v53 = vld [vmem:[%s3 + $0xe0] sm:$0xff]
  %v54 = vld [vmem:[%s3 + $0xe8] sm:$0xff]
  %v55 = vld [vmem:[%s3 + $0xf0] sm:$0xff]
  %v56 = vld [vmem:[%s3 + $0xf8] sm:$0xff]
  %v57 = vld [vmem:[%s3 + $0x100] sm:$0xff]
  %v58 = vld [vmem:[%s3 + $0x108] sm:$0xff]
  %v59 = vld [vmem:[%s3 + $0x110] sm:$0xff]
  %v60 = vld [vmem:[%s3 + $0x118] sm:$0xff]
  %v61 = vld [vmem:[%s3 + $0x120] sm:$0xff]
  %v62 = vld [vmem:[%s3 + $0x128] sm:$0xff]
  %v63 = vld [vmem:[%s3 + $0x130] sm:$0xff]
  %v64 = vld [vmem:[%s3 + $0x138] sm:$0xff]
  %v65 = vld [vmem:[%s3 + $0x140] sm:$0xff]
  %v66 = vld [vmem:[%s3 + $0x148] sm:$0xff]
  %v67 = vld [vmem:[%s3 + $0x150] sm:$0xff]
  %v68 = vld [vmem:[%s3 + $0x158] sm:$0xff]
  %v69 = vld [vmem:[%s3 + $0x160] sm:$0xff]
  %v70 = vld [vmem:[%s3 + $0x168] sm:$0xff]
  %v71 = vld [vmem:[%s3 + $0x170] sm:$0xff]
  %v72 = vld [vmem:[%s3 + $0x178] sm:$0xff]
  %v73 = vld [vmem:[%s3 + $0x180] sm:$0xff]
  %v74 = vld [vmem:[%s3 + $0x188] sm:$0xff]
  %v75 = vld [vmem:[%s3 + $0x190] sm:$0xff]
  %v76 = vld [vmem:[%s3 + $0x198] sm:$0xff]
  %v77 = vld [vmem:[%s3 + $0x1a0] sm:$0xff]
  %v78 = vld [vmem:[%s3 + $0x1a8] sm:$0xff]
  %v79 = vld [vmem:[%s3 + $0x1b0] sm:$0xff]
  %v80 = vld [vmem:[%s3 + $0x1b8] sm:$0xff]
  %v81 = vld [vmem:[%s3 + $0x1c0] sm:$0xff]
  %v82 = vld [vmem:[%s3 + $0x1c8] sm:$0xff]
  %v83 = vld [vmem:[%s3 + $0x1d0] sm:$0xff]
  %v84 = vld [vmem:[%s3 + $0x1d8] sm:$0xff]
  %v85 = vld [vmem:[%s3 + $0x1e0] sm:$0xff]
  %v86 = vld [vmem:[%s3 + $0x1e8] sm:$0xff]
  %v87 = vld [vmem:[%s3 + $0x1f0] sm:$0xff]
  %v88 = vld [vmem:[%s3 + $0x1f8] sm:$0xff]
  %v89 = vld [vmem:[%s3 + $0x200] sm:$0xff]
  %v90 = vld [vmem:[%s3 + $0x208] sm:$0xff]
  %v91 = vld [vmem:[%s3 + $0x210] sm:$0xff]
  %v92 = vld [vmem:[%s3 + $0x218] sm:$0xff]
  %v93 = vld [vmem:[%s3 + $0x220] sm:$0xff]
  %v94 = vld [vmem:[%s3 + $0x228] sm:$0xff]
  %v95 = vld [vmem:[%s3 + $0x230] sm:$0xff]
  %v96 = vld [vmem:[%s3 + $0x238] sm:$0xff]
  %v97 = vld [vmem:[%s3 + $0x240] sm:$0xff]
  %v98 = vld [vmem:[%s3 + $0x248] sm:$0xff]
  %v99 = vld [vmem:[%s3 + $0x250] sm:$0xff]
  %v100 = vld [vmem:[%s3 + $0x258] sm:$0xff]
  %v101 = vld [vmem:[%s3 + $0x260] sm:$0xff]
  %v102 = vld [vmem:[%s3 + $0x268] sm:$0xff]
  %v103 = vld [vmem:[%s3 + $0x270] sm:$0xff]
  %v104 = vld [vmem:[%s3 + $0x278] sm:$0xff]
  %v105 = vld [vmem:[%s3 + $0x280] sm:$0xff]
  %v106 = vld [vmem:[%s3 + $0x288] sm:$0xff]
  %v107 = vld [vmem:[%s3 + $0x290] sm:$0xff]
  %v108 = vld [vmem:[%s3 + $0x298] sm:$0xff]
  %v109 = vld [vmem:[%s3 + $0x2a0] sm:$0xff]
  %v110 = vld [vmem:[%s3 + $0x2a8] sm:$0xff]
  %v111 = vld [vmem:[%s3 + $0x2b0] sm:$0xff]
  %v112 = vld [vmem:[%s3 + $0x2b8] sm:$0xff]
  %v113 = vld [vmem:[%s3 + $0x2c0] sm:$0xff]
  %v114 = vld [vmem:[%s3 + $0x2c8] sm:$0xff]
  %v115 = vld [vmem:[%s3 + $0x2d0] sm:$0xff]
  %v116 = vld [vmem:[%s3 + $0x2d8] sm:$0xff]
  %v117 = vld [vmem:[%s3 + $0x2e0] sm:$0xff]
  %v118 = vld [vmem:[%s3 + $0x2e8] sm:$0xff]
  %v119 = vld [vmem:[%s3 + $0x2f0] sm:$0xff]
  %v120 = vld [vmem:[%s3 + $0x2f8] sm:$0xff]
  %v121 = vld [vmem:[%s3 + $0x300] sm:$0xff]
  %v122 = vld [vmem:[%s3 + $0x308] sm:$0xff]
  %v123 = vld [vmem:[%s3 + $0x310] sm:$0xff]
  %v124 = vld [vmem:[%s3 + $0x318] sm:$0xff]
  %v125 = vld [vmem:[%s3 + $0x320] sm:$0xff]
  %v126 = vld [vmem:[%s3 + $0x328] sm:$0xff]
  %v127 = vld [vmem:[%s3 + $0x330] sm:$0xff]
  %v128 = vld [vmem:[%s3 + $0x338] sm:$0xff]
  %v129 = vld [vmem:[%s3 + $0x340] sm:$0xff]
  %v130 = vld [vmem:[%s3 + $0x348] sm:$0xff]
  %v131 = vld [vmem:[%s3 + $0x350] sm:$0xff]
  %v132 = vld [vmem:[%s3 + $0x358] sm:$0xff]
  %v133 = vld [vmem:[%s3 + $0x360] sm:$0xff]
  %v134 = vld [vmem:[%s3 + $0x368] sm:$0xff]
  %v135 = vld [vmem:[%s3 + $0x370] sm:$0xff]
  %v136 = vld [vmem:[%s3 + $0x378] sm:$0xff]
  %v137 = vld [vmem:[%s3 + $0x380] sm:$0xff]
  %v138 = vld [vmem:[%s3 + $0x388] sm:$0xff]
  %v139 = vld [vmem:[%s3 + $0x390] sm:$0xff]
  %v140 = vld [vmem:[%s3 + $0x398] sm:$0xff]
  %v141 = vld [vmem:[%s3 + $0x3a0] sm:$0xff]
  %v142 = vld [vmem:[%s3 + $0x3a8] sm:$0xff]
  %v143 = vld [vmem:[%s3 + $0x3b0] sm:$0xff]
  %v144 = vld [vmem:[%s3 + $0x3b8] sm:$0xff]
  %v145 = vld [vmem:[%s3 + $0x3c0] sm:$0xff]
  %v146 = vld [vmem:[%s3 + $0x3c8] sm:$0xff]
  %v147 = vld [vmem:[%s3 + $0x3d0] sm:$0xff]
  %v148 = vld [vmem:[%s3 + $0x3d8] sm:$0xff]
  %v149 = vld [vmem:[%s3 + $0x3e0] sm:$0xff]
  %v150 = vld [vmem:[%s3 + $0x3e8] sm:$0xff]
  %v151 = vld [vmem:[%s3 + $0x3f0] sm:$0xff]
  %v152 = vld [vmem:[%s3 + $0x3f8] sm:$0xff]
  %v153 = vld [vmem:[%s3 + $0x400] sm:$0xff]
  %v154 = vld [vmem:[%s3 + $0x408] sm:$0xff]
  %v155 = vld [vmem:[%s3 + $0x410] sm:$0xff]
  %v156 = vld [vmem:[%s3 + $0x418] sm:$0xff]
  %v157 = vld [vmem:[%s3 + $0x420] sm:$0xff]
  %v158 = vld [vmem:[%s3 + $0x428] sm:$0xff]
  %v159 = vld [vmem:[%s3 + $0x430] sm:$0xff]
  %v160 = vld [vmem:[%s3 + $0x438] sm:$0xff]
  %v161 = vld [vmem:[%s3 + $0x440] sm:$0xff]
  %v162 = vld [vmem:[%s3 + $0x448] sm:$0xff]
  %v163 = vld [vmem:[%s3 + $0x450] sm:$0xff]
  %v164 = vld [vmem:[%s3 + $0x458] sm:$0xff]
  %v165 = vld [vmem:[%s3 + $0x460] sm:$0xff]
  %v166 = vld [vmem:[%s3 + $0x468] sm:$0xff]
  %v167 = vld [vmem:[%s3 + $0x470] sm:$0xff]
  %v168 = vld [vmem:[%s3 + $0x478] sm:$0xff]
  %v169 = vld [vmem:[%s3 + $0x480] sm:$0xff]
  %v170 = vld [vmem:[%s3 + $0x488] sm:$0xff]
  %v171 = vld [vmem:[%s3 + $0x490] sm:$0xff]
  %v172 = vld [vmem:[%s3 + $0x498] sm:$0xff]
  %v173 = vld [vmem:[%s3 + $0x4a0] sm:$0xff]
  %v174 = vld [vmem:[%s3 + $0x4a8] sm:$0xff]
  %v175 = vld [vmem:[%s3 + $0x4b0] sm:$0xff]
  %v176 = vld [vmem:[%s3 + $0x4b8] sm:$0xff]
  %v177 = vld [vmem:[%s3 + $0x4c0] sm:$0xff]
  %v178 = vld [vmem:[%s3 + $0x4c8] sm:$0xff]
  %v179 = vld [vmem:[%s3 + $0x4d0] sm:$0xff]
  %v180 = vld [vmem:[%s3 + $0x4d8] sm:$0xff]
  %v181 = vld [vmem:[%s3 + $0x4e0] sm:$0xff]
  %v182 = vld [vmem:[%s3 + $0x4e8] sm:$0xff]
  %v183 = vld [vmem:[%s3 + $0x4f0] sm:$0xff]
  %v184 = vld [vmem:[%s3 + $0x4f8] sm:$0xff]
  %v185 = vld [vmem:[%s3 + $0x500] sm:$0xff]
  %v186 = vld [vmem:[%s3 + $0x508] sm:$0xff]
  %v187 = vld [vmem:[%s3 + $0x510] sm:$0xff]
  %v188 = vld [vmem:[%s3 + $0x518] sm:$0xff]
  %v189 = vld [vmem:[%s3 + $0x520] sm:$0xff]
  %v190 = vld [vmem:[%s3 + $0x528] sm:$0xff]
  %v191 = vld [vmem:[%s3 + $0x530] sm:$0xff]
  %v192 = vld [vmem:[%s3 + $0x538] sm:$0xff]
  %v193 = vld [vmem:[%s3 + $0x540] sm:$0xff]
  %v194 = vld [vmem:[%s3 + $0x548] sm:$0xff]
  %v195 = vld [vmem:[%s3 + $0x550] sm:$0xff]
  %v196 = vld [vmem:[%s3 + $0x558] sm:$0xff]
  %v197 = vld [vmem:[%s3 + $0x560] sm:$0xff]
  %v198 = vld [vmem:[%s3 + $0x568] sm:$0xff]
  %v199 = vld [vmem:[%s3 + $0x570] sm:$0xff]
  %v200 = vld [vmem:[%s3 + $0x578] sm:$0xff]
  %v201 = vld [vmem:[%s3 + $0x580] sm:$0xff]
  %v202 = vld [vmem:[%s3 + $0x588] sm:$0xff]
  %v203 = vld [vmem:[%s3 + $0x590] sm:$0xff]
  %v204 = vld [vmem:[%s3 + $0x598] sm:$0xff]
  %v205 = vld [vmem:[%s3 + $0x5a0] sm:$0xff]
  %v206 = vld [vmem:[%s3 + $0x5a8] sm:$0xff]
  %v207 = vld [vmem:[%s3 + $0x5b0] sm:$0xff]
  %v208 = vld [vmem:[%s3 + $0x5b8] sm:$0xff]
  %v209 = vld [vmem:[%s3 + $0x5c0] sm:$0xff]
  %v210 = vld [vmem:[%s3 + $0x5c8] sm:$0xff]
  %v211 = vld [vmem:[%s3 + $0x5d0] sm:$0xff]
  %v212 = vld [vmem:[%s3 + $0x5d8] sm:$0xff]
  %v213 = vld [vmem:[%s3 + $0x5e0] sm:$0xff]
  %v214 = vld [vmem:[%s3 + $0x5e8] sm:$0xff]
  %v215 = vld [vmem:[%s3 + $0x5f0] sm:$0xff]
  %v216 = vld [vmem:[%s3 + $0x5f8] sm:$0xff]
  %v217 = vld [vmem:[%s2] ss:$4 sm:$0xf]
  %s218 = scalar_lea.vmem %s2, 1
  %v219 = vld [vmem:[%s218] ss:$4 sm:$0xf]
  %v220 = vld [vmem:[%s3 + $0x600] sm:$0xff]
  %v221 = vld [vmem:[%s3 + $0x608] sm:$0xff]
  %v222 = vld [vmem:[%s3 + $0x610] sm:$0xff]
  %v223 = vld [vmem:[%s3 + $0x618] sm:$0xff]
  %v224 = vld [vmem:[%s3 + $0x620] sm:$0xff]
  %v225 = vld [vmem:[%s3 + $0x628] sm:$0xff]
  %v226 = vld [vmem:[%s3 + $0x630] sm:$0xff]
  %v227 = vld [vmem:[%s3 + $0x638] sm:$0xff]
  %v228 = vld [vmem:[%s3 + $0x640] sm:$0xff]
  %v229 = vld [vmem:[%s3 + $0x648] sm:$0xff]
  %v230 = vld [vmem:[%s3 + $0x650] sm:$0xff]
  %v231 = vld [vmem:[%s3 + $0x658] sm:$0xff]
  %v232 = vld [vmem:[%s3 + $0x660] sm:$0xff]
  %v233 = vld [vmem:[%s3 + $0x668] sm:$0xff]
  %v234 = vld [vmem:[%s3 + $0x670] sm:$0xff]
  %v235 = vld [vmem:[%s3 + $0x678] sm:$0xff]
  %v236 = vld [vmem:[%s3 + $0x680] sm:$0xff]
  %v237 = vld [vmem:[%s3 + $0x688] sm:$0xff]
  %v238 = vld [vmem:[%s3 + $0x690] sm:$0xff]
  %v239 = vld [vmem:[%s3 + $0x698] sm:$0xff]
  %v240 = vld [vmem:[%s3 + $0x6a0] sm:$0xff]
  %v241 = vld [vmem:[%s3 + $0x6a8] sm:$0xff]
  %v242 = vld [vmem:[%s3 + $0x6b0] sm:$0xff]
  %v243 = vld [vmem:[%s3 + $0x6b8] sm:$0xff]
  %v244 = vld [vmem:[%s3 + $0x6c0] sm:$0xff]
  %v245 = vld [vmem:[%s3 + $0x6c8] sm:$0xff]
  %v246 = vld [vmem:[%s3 + $0x6d0] sm:$0xff]
  %v247 = vld [vmem:[%s3 + $0x6d8] sm:$0xff]
  %v248 = vld [vmem:[%s3 + $0x6e0] sm:$0xff]
  %v249 = vld [vmem:[%s3 + $0x6e8] sm:$0xff]
  %v250 = vld [vmem:[%s3 + $0x6f0] sm:$0xff]
  %v251 = vld [vmem:[%s3 + $0x6f8] sm:$0xff]
  %v252 = vld [vmem:[%s3 + $0x700] sm:$0xff]
  %v253 = vld [vmem:[%s3 + $0x708] sm:$0xff]
  %v254 = vld [vmem:[%s3 + $0x710] sm:$0xff]
  %v255 = vld [vmem:[%s3 + $0x718] sm:$0xff]
  %v256 = vld [vmem:[%s3 + $0x720] sm:$0xff]
  %v257 = vld [vmem:[%s3 + $0x728] sm:$0xff]
  %v258 = vld [vmem:[%s3 + $0x730] sm:$0xff]
  %v259 = vld [vmem:[%s3 + $0x738] sm:$0xff]
  %v260 = vld [vmem:[%s3 + $0x740] sm:$0xff]
  %v261 = vld [vmem:[%s3 + $0x748] sm:$0xff]
  %v262 = vld [vmem:[%s3 + $0x750] sm:$0xff]
  %v263 = vld [vmem:[%s3 + $0x758] sm:$0xff]
  %v264 = vld [vmem:[%s3 + $0x760] sm:$0xff]
  %v265 = vld [vmem:[%s3 + $0x768] sm:$0xff]
  %v266 = vld [vmem:[%s3 + $0x770] sm:$0xff]
  %v267 = vld [vmem:[%s3 + $0x778] sm:$0xff]
  %v268 = vld [vmem:[%s3 + $0x780] sm:$0xff]
  %v269 = vld [vmem:[%s3 + $0x788] sm:$0xff]
  %v270 = vld [vmem:[%s3 + $0x790] sm:$0xff]
  %v271 = vld [vmem:[%s3 + $0x798] sm:$0xff]
  %v272 = vld [vmem:[%s3 + $0x7a0] sm:$0xff]
  %v273 = vld [vmem:[%s3 + $0x7a8] sm:$0xff]
  %v274 = vld [vmem:[%s3 + $0x7b0] sm:$0xff]
  %v275 = vld [vmem:[%s3 + $0x7b8] sm:$0xff]
  %v276 = vld [vmem:[%s3 + $0x7c0] sm:$0xff]
  %v277 = vld [vmem:[%s3 + $0x7c8] sm:$0xff]
  %v278 = vld [vmem:[%s3 + $0x7d0] sm:$0xff]
  %v279 = vld [vmem:[%s3 + $0x7d8] sm:$0xff]
  %v280 = vld [vmem:[%s3 + $0x7e0] sm:$0xff]
  %v281 = vld [vmem:[%s3 + $0x7e8] sm:$0xff]
  %v282 = vld [vmem:[%s3 + $0x7f0] sm:$0xff]
  %v283 = vld [vmem:[%s3 + $0x7f8] sm:$0xff]
  %s284 = scalar_lea.vmem %s2, 2
  %v285 = vld [vmem:[%s284] ss:$4 sm:$0xf]
  %v286 = vld [vmem:[%s0] sm:$0x3]
  %v287 = vld [vmem:[%s1] sm:$0xf]
  %289 = vset.pattern.permute.xlu0 0
  %290 = vperm.xlu0 %289, %v286
  %v291 = vpop.permute.xlu0 %290
  %v294 = vlaneseq
  %v295 = vshrl.u32 %v294, 7
  %v296 = vsub.s32 0, %v295
  %v297 = vrot.slane %v287, %v296
  %v298 = vlaneseq
  %v299 = vshrl.u32 %v298, 7
  %v300 = vsub.s32 1, %v299
  %v301 = vrot.slane %v287, %v300
  %v302 = vlaneseq
  %v303 = vshrl.u32 %v302, 7
  %v304 = vsub.s32 2, %v303
  %v305 = vrot.slane %v287, %v304
  %v306 = vlaneseq
  %v307 = vshrl.u32 %v306, 7
  %v308 = vsub.s32 3, %v307
  %v309 = vrot.slane %v287, %v308
  %v314 = vmul.f32 %v291, %v297
  %v315 = vmul.f32 %v291, %v301
  %v316 = vmul.f32 %v291, %v305
  %v317 = vmul.f32 %v291, %v309
  %v319 = vlaneseq
  %v320 = vshrl.u32 %v319, 7
  %v321 = vsub.s32 0, %v320
  %v322 = vrot.slane %v217, %v321
  %v323 = vlaneseq
  %v324 = vshrl.u32 %v323, 7
  %v325 = vsub.s32 1, %v324
  %v326 = vrot.slane %v217, %v325
  %v327 = vlaneseq
  %v328 = vshrl.u32 %v327, 7
  %v329 = vsub.s32 2, %v328
  %v330 = vrot.slane %v217, %v329
  %v331 = vlaneseq
  %v332 = vshrl.u32 %v331, 7
  %v333 = vsub.s32 3, %v332
  %v334 = vrot.slane %v217, %v333
  %v339 = vadd.f32 %v322, %v314
  %v340 = vadd.f32 %v326, %v315
  %v341 = vadd.f32 %v330, %v316
  %v342 = vadd.f32 %v334, %v317
  %343 = vmatprep.subr.mxu0 %v86
  %344 = vmatpush1.msra.mxu0 %v85
  %345 = vmatprep.subr.mxu0 %v82
  %346 = vmatpush1.msra.mxu0 %v81
  %347 = vmatprep.subr.mxu0 %v78
  %348 = vmatpush1.msra.mxu0 %v77
  %349 = vmatprep.subr.mxu0 %v74
  %350 = vmatpush1.msra.mxu0 %v73
  %351 = vmatprep.subr.mxu0 %v70
  %352 = vmatpush1.msra.mxu0 %v69
  %353 = vmatprep.subr.mxu0 %v66
  %354 = vmatpush1.msra.mxu0 %v65
  %355 = vmatprep.subr.mxu0 %v62
  %356 = vmatpush1.msra.mxu0 %v61
  %357 = vmatprep.subr.mxu0 %v58
  %358 = vmatpush1.msra.mxu0 %v57
  %359 = vmatprep.subr.mxu0 %v54
  %360 = vmatpush1.msra.mxu0 %v53
  %361 = vmatprep.subr.mxu0 %v50
  %362 = vmatpush1.msra.mxu0 %v49
  %363 = vmatprep.subr.mxu0 %v46
  %364 = vmatpush1.msra.mxu0 %v45
  %365 = vmatprep.subr.mxu0 %v42
  %366 = vmatpush1.msra.mxu0 %v41
  %367 = vmatprep.subr.mxu0 %v38
  %368 = vmatpush1.msra.mxu0 %v37
  %369 = vmatprep.subr.mxu0 %v34
  %370 = vmatpush1.msra.mxu0 %v33
  %371 = vmatprep.subr.mxu0 %v30
  %372 = vmatpush1.msra.mxu0 %v29
  %373 = vmatprep.subr.mxu0 %v26
  %374 = vmatpush1.msra.mxu0 %v25
  %375 = vmatprep.subr.mxu0 0.0
  %376 = vmatpush2.msra.mxu0 0.0
  %377 = vmatprep.subr.mxu0 0.0
  %378 = vmatpush2.msra.mxu0 0.0
  %379 = vmatprep.subr.mxu0 0.0
  %380 = vmatpush2.msra.mxu0 0.0
  %381 = vmatprep.subr.mxu0 0.0
  %382 = vmatpush2.msra.mxu0 0.0
  %383 = vmatprep.subr.mxu0 0.0
  %384 = vmatpush2.msra.mxu0 0.0
  %385 = vmatprep.subr.mxu0 0.0
  %386 = vmatpush2.msra.mxu0 0.0
  %387 = vmatprep.subr.mxu0 0.0
  %388 = vmatpush2.msra.mxu0 0.0
  %389 = vmatprep.subr.mxu0 0.0
  %390 = vmatpush2.msra.mxu0 0.0
  %391 = vmatprep.subr.mxu0 0.0
  %392 = vmatpush2.msra.mxu0 0.0
  %393 = vmatprep.subr.mxu0 0.0
  %394 = vmatpush2.msra.mxu0 0.0
  %395 = vmatprep.subr.mxu0 0.0
  %396 = vmatpush2.msra.mxu0 0.0
  %397 = vmatprep.subr.mxu0 0.0
  %398 = vmatpush2.msra.mxu0 0.0
  %399 = vmatprep.subr.mxu0 0.0
  %400 = vmatpush2.msra.mxu0 0.0
  %401 = vmatprep.subr.mxu0 0.0
  %402 = vmatpush2.msra.mxu0 0.0
  %403 = vmatprep.subr.mxu0 0.0
  %404 = vmatpush2.msra.mxu0 0.0
  %405 = vmatprep.subr.mxu0 0.0
  %406 = vmatpush2.msra.mxu0 0.0
  %407 = vmatprep.mubr.f32.mxu0 0.0
  %408 = vmatmul.mubr.f32.gmra.mxu0 0.0
  %v409 = vpop.f32.mrf.mxu0
  %v410 = vadd.f32 0.0, %v409
  %v411 = vpop.f32.mrf.mxu0
  %v412 = vadd.f32 0.0, %v411
  %413 = vdwg.mxu0
  %414 = vmatprep.subr.mxu0 %v88
  %415 = vmatpush1.msra.mxu0 %v87
  %416 = vmatprep.subr.mxu0 %v84
  %417 = vmatpush1.msra.mxu0 %v83
  %418 = vmatprep.subr.mxu0 %v80
  %419 = vmatpush1.msra.mxu0 %v79
  %420 = vmatprep.subr.mxu0 %v76
  %421 = vmatpush1.msra.mxu0 %v75
  %422 = vmatprep.subr.mxu0 %v72
  %423 = vmatpush1.msra.mxu0 %v71
  %424 = vmatprep.subr.mxu0 %v68
  %425 = vmatpush1.msra.mxu0 %v67
  %426 = vmatprep.subr.mxu0 %v64
  %427 = vmatpush1.msra.mxu0 %v63
  %428 = vmatprep.subr.mxu0 %v60
  %429 = vmatpush1.msra.mxu0 %v59
  %430 = vmatprep.subr.mxu0 %v56
  %431 = vmatpush1.msra.mxu0 %v55
  %432 = vmatprep.subr.mxu0 %v52
  %433 = vmatpush1.msra.mxu0 %v51
  %434 = vmatprep.subr.mxu0 %v48
  %435 = vmatpush1.msra.mxu0 %v47
  %436 = vmatprep.subr.mxu0 %v44
  %437 = vmatpush1.msra.mxu0 %v43
  %438 = vmatprep.subr.mxu0 %v40
  %439 = vmatpush1.msra.mxu0 %v39
  %440 = vmatprep.subr.mxu0 %v36
  %441 = vmatpush1.msra.mxu0 %v35
  %442 = vmatprep.subr.mxu0 %v32
  %443 = vmatpush1.msra.mxu0 %v31
  %444 = vmatprep.subr.mxu0 %v28
  %445 = vmatpush1.msra.mxu0 %v27
  %446 = vmatprep.subr.mxu0 0.0
  %447 = vmatpush2.msra.mxu0 0.0
  %448 = vmatprep.subr.mxu0 0.0
  %449 = vmatpush2.msra.mxu0 0.0
  %450 = vmatprep.subr.mxu0 0.0
  %451 = vmatpush2.msra.mxu0 0.0
  %452 = vmatprep.subr.mxu0 0.0
  %453 = vmatpush2.msra.mxu0 0.0
  %454 = vmatprep.subr.mxu0 0.0
  %455 = vmatpush2.msra.mxu0 0.0
  %456 = vmatprep.subr.mxu0 0.0
  %457 = vmatpush2.msra.mxu0 0.0
  %458 = vmatprep.subr.mxu0 0.0
  %459 = vmatpush2.msra.mxu0 0.0
  %460 = vmatprep.subr.mxu0 0.0
  %461 = vmatpush2.msra.mxu0 0.0
  %462 = vmatprep.subr.mxu0 0.0
  %463 = vmatpush2.msra.mxu0 0.0
  %464 = vmatprep.subr.mxu0 0.0
  %465 = vmatpush2.msra.mxu0 0.0
  %466 = vmatprep.subr.mxu0 0.0
  %467 = vmatpush2.msra.mxu0 0.0
  %468 = vmatprep.subr.mxu0 0.0
  %469 = vmatpush2.msra.mxu0 0.0
  %470 = vmatprep.subr.mxu0 0.0
  %471 = vmatpush2.msra.mxu0 0.0
  %472 = vmatprep.subr.mxu0 0.0
  %473 = vmatpush2.msra.mxu0 0.0
  %474 = vmatprep.subr.mxu0 0.0
  %475 = vmatpush2.msra.mxu0 0.0
  %476 = vmatprep.subr.mxu0 0.0
  %477 = vmatpush2.msra.mxu0 0.0
  %478 = vmatprep.mubr.f32.mxu0 0.0
  %479 = vmatmul.mubr.f32.gmra.mxu0 0.0
  %v480 = vpop.f32.mrf.mxu0
  %v481 = vadd.f32 0.0, %v480
  %v482 = vpop.f32.mrf.mxu0
  %v483 = vadd.f32 0.0, %v482
  %484 = vdwg.mxu0
  %v485 = vadd.f32 %v339, %v410
  %v486 = vadd.f32 %v340, %v412
  %v487 = vadd.f32 %v341, %v481
  %v488 = vadd.f32 %v342, %v483
  %v489 = vxor.u32 %v485, 2147483648
  %v490 = vmul.f32 %v489, 1.442695
  %v491 = vpow.pop %v490
  %v492 = vadd.f32 %v491, 1.0
  %v493 = vrcp.pop %v492
  %v494 = vmul.f32 1.0, %v493
  %v495 = vxor.u32 %v486, 2147483648
  %v496 = vmul.f32 %v495, 1.442695
  %v497 = vpow.pop %v496
  %v498 = vadd.f32 %v497, 1.0
  %v499 = vrcp.pop %v498
  %v500 = vmul.f32 1.0, %v499
  %v501 = vtanh.pop %v487
  %v502 = vxor.u32 %v488, 2147483648
  %v503 = vmul.f32 %v502, 1.442695
  %v504 = vpow.pop %v503
  %v505 = vadd.f32 %v504, 1.0
  %v506 = vrcp.pop %v505
  %v507 = vmul.f32 1.0, %v506
  %v508 = vmul.f32 %v500, 0.0
  %v509 = vmul.f32 %v494, %v501
  %v510 = vadd.f32 %v508, %v509
  %v511 = vtanh.pop %v510
  %v512 = vmul.f32 %v507, %v511
  %513 = vmatprep.subr.mxu0 %v214
  %514 = vmatpush1.msra.mxu0 %v213
  %515 = vmatprep.subr.mxu0 %v210
  %516 = vmatpush1.msra.mxu0 %v209
  %517 = vmatprep.subr.mxu0 %v206
  %518 = vmatpush1.msra.mxu0 %v205
  %519 = vmatprep.subr.mxu0 %v202
  %520 = vmatpush1.msra.mxu0 %v201
  %521 = vmatprep.subr.mxu0 %v198
  %522 = vmatpush1.msra.mxu0 %v197
  %523 = vmatprep.subr.mxu0 %v194
  %524 = vmatpush1.msra.mxu0 %v193
  %525 = vmatprep.subr.mxu0 %v190
  %526 = vmatpush1.msra.mxu0 %v189
  %527 = vmatprep.subr.mxu0 %v186
  %528 = vmatpush1.msra.mxu0 %v185
  %529 = vmatprep.subr.mxu0 %v182
  %530 = vmatpush1.msra.mxu0 %v181
  %531 = vmatprep.subr.mxu0 %v178
  %532 = vmatpush1.msra.mxu0 %v177
  %533 = vmatprep.subr.mxu0 %v174
  %534 = vmatpush1.msra.mxu0 %v173
  %535 = vmatprep.subr.mxu0 %v170
  %536 = vmatpush1.msra.mxu0 %v169
  %537 = vmatprep.subr.mxu0 %v166
  %538 = vmatpush1.msra.mxu0 %v165
  %539 = vmatprep.subr.mxu0 %v162
  %540 = vmatpush1.msra.mxu0 %v161
  %541 = vmatprep.subr.mxu0 %v158
  %542 = vmatpush1.msra.mxu0 %v157
  %543 = vmatprep.subr.mxu0 %v154
  %544 = vmatpush1.msra.mxu0 %v153
  %545 = vmatprep.subr.mxu0 0.0
  %546 = vmatpush2.msra.mxu0 0.0
  %547 = vmatprep.subr.mxu0 0.0
  %548 = vmatpush2.msra.mxu0 0.0
  %549 = vmatprep.subr.mxu0 0.0
  %550 = vmatpush2.msra.mxu0 0.0
  %551 = vmatprep.subr.mxu0 0.0
  %552 = vmatpush2.msra.mxu0 0.0
  %553 = vmatprep.subr.mxu0 0.0
  %554 = vmatpush2.msra.mxu0 0.0
  %555 = vmatprep.subr.mxu0 0.0
  %556 = vmatpush2.msra.mxu0 0.0
  %557 = vmatprep.subr.mxu0 0.0
  %558 = vmatpush2.msra.mxu0 0.0
  %559 = vmatprep.subr.mxu0 0.0
  %560 = vmatpush2.msra.mxu0 0.0
  %561 = vmatprep.subr.mxu0 0.0
  %562 = vmatpush2.msra.mxu0 0.0
  %563 = vmatprep.subr.mxu0 0.0
  %564 = vmatpush2.msra.mxu0 0.0
  %565 = vmatprep.subr.mxu0 0.0
  %566 = vmatpush2.msra.mxu0 0.0
  %567 = vmatprep.subr.mxu0 0.0
  %568 = vmatpush2.msra.mxu0 0.0
  %569 = vmatprep.subr.mxu0 0.0
  %570 = vmatpush2.msra.mxu0 0.0
  %571 = vmatprep.subr.mxu0 0.0
  %572 = vmatpush2.msra.mxu0 0.0
  %573 = vmatprep.subr.mxu0 0.0
  %574 = vmatpush2.msra.mxu0 0.0
  %575 = vmatprep.subr.mxu0 0.0
  %576 = vmatpush2.msra.mxu0 0.0
  %577 = vmatprep.mubr.f32.mxu0 0.0
  %578 = vmatmul.mubr.f32.gmra.mxu0 0.0
  %v579 = vpop.f32.mrf.mxu0
  %v580 = vadd.f32 0.0, %v579
  %v581 = vpop.f32.mrf.mxu0
  %v582 = vadd.f32 0.0, %v581
  %583 = vdwg.mxu0
  %584 = vmatprep.subr.mxu0 %v216
  %585 = vmatpush1.msra.mxu0 %v215
  %586 = vmatprep.subr.mxu0 %v212
  %587 = vmatpush1.msra.mxu0 %v211
  %588 = vmatprep.subr.mxu0 %v208
  %589 = vmatpush1.msra.mxu0 %v207
  %590 = vmatprep.subr.mxu0 %v204
  %591 = vmatpush1.msra.mxu0 %v203
  %592 = vmatprep.subr.mxu0 %v200
  %593 = vmatpush1.msra.mxu0 %v199
  %594 = vmatprep.subr.mxu0 %v196
  %595 = vmatpush1.msra.mxu0 %v195
  %596 = vmatprep.subr.mxu0 %v192
  %597 = vmatpush1.msra.mxu0 %v191
  %598 = vmatprep.subr.mxu0 %v188
  %599 = vmatpush1.msra.mxu0 %v187
  %600 = vmatprep.subr.mxu0 %v184
  %601 = vmatpush1.msra.mxu0 %v183
  %602 = vmatprep.subr.mxu0 %v180
  %603 = vmatpush1.msra.mxu0 %v179
  %604 = vmatprep.subr.mxu0 %v176
  %605 = vmatpush1.msra.mxu0 %v175
  %606 = vmatprep.subr.mxu0 %v172
  %607 = vmatpush1.msra.mxu0 %v171
  %608 = vmatprep.subr.mxu0 %v168
  %609 = vmatpush1.msra.mxu0 %v167
  %610 = vmatprep.subr.mxu0 %v164
  %611 = vmatpush1.msra.mxu0 %v163
  %612 = vmatprep.subr.mxu0 %v160
  %613 = vmatpush1.msra.mxu0 %v159
  %614 = vmatprep.subr.mxu0 %v156
  %615 = vmatpush1.msra.mxu0 %v155
  %616 = vmatprep.subr.mxu0 0.0
  %617 = vmatpush2.msra.mxu0 0.0
  %618 = vmatprep.subr.mxu0 0.0
  %619 = vmatpush2.msra.mxu0 0.0
  %620 = vmatprep.subr.mxu0 0.0
  %621 = vmatpush2.msra.mxu0 0.0
  %622 = vmatprep.subr.mxu0 0.0
  %623 = vmatpush2.msra.mxu0 0.0
  %624 = vmatprep.subr.mxu0 0.0
  %625 = vmatpush2.msra.mxu0 0.0
  %626 = vmatprep.subr.mxu0 0.0
  %627 = vmatpush2.msra.mxu0 0.0
  %628 = vmatprep.subr.mxu0 0.0
  %629 = vmatpush2.msra.mxu0 0.0
  %630 = vmatprep.subr.mxu0 0.0
  %631 = vmatpush2.msra.mxu0 0.0
  %632 = vmatprep.subr.mxu0 0.0
  %633 = vmatpush2.msra.mxu0 0.0
  %634 = vmatprep.subr.mxu0 0.0
  %635 = vmatpush2.msra.mxu0 0.0
  %636 = vmatprep.subr.mxu0 0.0
  %637 = vmatpush2.msra.mxu0 0.0
  %638 = vmatprep.subr.mxu0 0.0
  %639 = vmatpush2.msra.mxu0 0.0
  %640 = vmatprep.subr.mxu0 0.0
  %641 = vmatpush2.msra.mxu0 0.0
  %642 = vmatprep.subr.mxu0 0.0
  %643 = vmatpush2.msra.mxu0 0.0
  %644 = vmatprep.subr.mxu0 0.0
  %645 = vmatpush2.msra.mxu0 0.0
  %646 = vmatprep.subr.mxu0 0.0
  %647 = vmatpush2.msra.mxu0 0.0
  %648 = vmatprep.mubr.f32.mxu0 0.0
  %649 = vmatmul.mubr.f32.gmra.mxu0 0.0
  %v650 = vpop.f32.mrf.mxu0
  %v651 = vadd.f32 0.0, %v650
  %v652 = vpop.f32.mrf.mxu0
  %v653 = vadd.f32 0.0, %v652
  %654 = vdwg.mxu0
  %v656 = vlaneseq
  %v657 = vshrl.u32 %v656, 7
  %v658 = vsub.s32 0, %v657
  %v659 = vrot.slane %v219, %v658
  %v660 = vlaneseq
  %v661 = vshrl.u32 %v660, 7
  %v662 = vsub.s32 1, %v661
  %v663 = vrot.slane %v219, %v662
  %v664 = vlaneseq
  %v665 = vshrl.u32 %v664, 7
  %v666 = vsub.s32 2, %v665
  %v667 = vrot.slane %v219, %v666
  %v668 = vlaneseq
  %v669 = vshrl.u32 %v668, 7
  %v670 = vsub.s32 3, %v669
  %v671 = vrot.slane %v219, %v670
  %v676 = vadd.f32 %v659, %v580
  %v677 = vadd.f32 %v663, %v582
  %v678 = vadd.f32 %v667, %v651
  %v679 = vadd.f32 %v671, %v653
  %680 = vmatprep.subr.mxu0 %v150
  %681 = vmatpush1.msra.mxu0 %v149
  %682 = vmatprep.subr.mxu0 %v146
  %683 = vmatpush1.msra.mxu0 %v145
  %684 = vmatprep.subr.mxu0 %v142
  %685 = vmatpush1.msra.mxu0 %v141
  %686 = vmatprep.subr.mxu0 %v138
  %687 = vmatpush1.msra.mxu0 %v137
  %688 = vmatprep.subr.mxu0 %v134
  %689 = vmatpush1.msra.mxu0 %v133
  %690 = vmatprep.subr.mxu0 %v130
  %691 = vmatpush1.msra.mxu0 %v129
  %692 = vmatprep.subr.mxu0 %v126
  %693 = vmatpush1.msra.mxu0 %v125
  %694 = vmatprep.subr.mxu0 %v122
  %695 = vmatpush1.msra.mxu0 %v121
  %696 = vmatprep.subr.mxu0 %v118
  %697 = vmatpush1.msra.mxu0 %v117
  %698 = vmatprep.subr.mxu0 %v114
  %699 = vmatpush1.msra.mxu0 %v113
  %700 = vmatprep.subr.mxu0 %v110
  %701 = vmatpush1.msra.mxu0 %v109
  %702 = vmatprep.subr.mxu0 %v106
  %703 = vmatpush1.msra.mxu0 %v105
  %704 = vmatprep.subr.mxu0 %v102
  %705 = vmatpush1.msra.mxu0 %v101
  %706 = vmatprep.subr.mxu0 %v98
  %707 = vmatpush1.msra.mxu0 %v97
  %708 = vmatprep.subr.mxu0 %v94
  %709 = vmatpush1.msra.mxu0 %v93
  %710 = vmatprep.subr.mxu0 %v90
  %711 = vmatpush1.msra.mxu0 %v89
  %712 = vmatprep.subr.mxu0 0.0
  %713 = vmatpush2.msra.mxu0 0.0
  %714 = vmatprep.subr.mxu0 0.0
  %715 = vmatpush2.msra.mxu0 0.0
  %716 = vmatprep.subr.mxu0 0.0
  %717 = vmatpush2.msra.mxu0 0.0
  %718 = vmatprep.subr.mxu0 0.0
  %719 = vmatpush2.msra.mxu0 0.0
  %720 = vmatprep.subr.mxu0 0.0
  %721 = vmatpush2.msra.mxu0 0.0
  %722 = vmatprep.subr.mxu0 0.0
  %723 = vmatpush2.msra.mxu0 0.0
  %724 = vmatprep.subr.mxu0 0.0
  %725 = vmatpush2.msra.mxu0 0.0
  %726 = vmatprep.subr.mxu0 0.0
  %727 = vmatpush2.msra.mxu0 0.0
  %728 = vmatprep.subr.mxu0 0.0
  %729 = vmatpush2.msra.mxu0 0.0
  %730 = vmatprep.subr.mxu0 0.0
  %731 = vmatpush2.msra.mxu0 0.0
  %732 = vmatprep.subr.mxu0 0.0
  %733 = vmatpush2.msra.mxu0 0.0
  %734 = vmatprep.subr.mxu0 0.0
  %735 = vmatpush2.msra.mxu0 0.0
  %736 = vmatprep.subr.mxu0 0.0
  %737 = vmatpush2.msra.mxu0 0.0
  %738 = vmatprep.subr.mxu0 0.0
  %739 = vmatpush2.msra.mxu0 0.0
  %740 = vmatprep.subr.mxu0 0.0
  %741 = vmatpush2.msra.mxu0 0.0
  %742 = vmatprep.subr.mxu0 0.0
  %743 = vmatpush2.msra.mxu0 0.0
  %744 = vmatprep.mubr.f32.mxu0 0.0
  %745 = vmatmul.mubr.f32.gmra.mxu0 %v512
  %v746 = vpop.f32.mrf.mxu0
  %v747 = vadd.f32 0.0, %v746
  %v748 = vpop.f32.mrf.mxu0
  %v749 = vadd.f32 0.0, %v748
  %750 = vdwg.mxu0
  %751 = vmatprep.subr.mxu0 %v152
  %752 = vmatpush1.msra.mxu0 %v151
  %753 = vmatprep.subr.mxu0 %v148
  %754 = vmatpush1.msra.mxu0 %v147
  %755 = vmatprep.subr.mxu0 %v144
  %756 = vmatpush1.msra.mxu0 %v143
  %757 = vmatprep.subr.mxu0 %v140
  %758 = vmatpush1.msra.mxu0 %v139
  %759 = vmatprep.subr.mxu0 %v136
  %760 = vmatpush1.msra.mxu0 %v135
  %761 = vmatprep.subr.mxu0 %v132
  %762 = vmatpush1.msra.mxu0 %v131
  %763 = vmatprep.subr.mxu0 %v128
  %764 = vmatpush1.msra.mxu0 %v127
  %765 = vmatprep.subr.mxu0 %v124
  %766 = vmatpush1.msra.mxu0 %v123
  %767 = vmatprep.subr.mxu0 %v120
  %768 = vmatpush1.msra.mxu0 %v119
  %769 = vmatprep.subr.mxu0 %v116
  %770 = vmatpush1.msra.mxu0 %v115
  %771 = vmatprep.subr.mxu0 %v112
  %772 = vmatpush1.msra.mxu0 %v111
  %773 = vmatprep.subr.mxu0 %v108
  %774 = vmatpush1.msra.mxu0 %v107
  %775 = vmatprep.subr.mxu0 %v104
  %776 = vmatpush1.msra.mxu0 %v103
  %777 = vmatprep.subr.mxu0 %v100
  %778 = vmatpush1.msra.mxu0 %v99
  %779 = vmatprep.subr.mxu0 %v96
  %780 = vmatpush1.msra.mxu0 %v95
  %781 = vmatprep.subr.mxu0 %v92
  %782 = vmatpush1.msra.mxu0 %v91
  %783 = vmatprep.subr.mxu0 0.0
  %784 = vmatpush2.msra.mxu0 0.0
  %785 = vmatprep.subr.mxu0 0.0
  %786 = vmatpush2.msra.mxu0 0.0
  %787 = vmatprep.subr.mxu0 0.0
  %788 = vmatpush2.msra.mxu0 0.0
  %789 = vmatprep.subr.mxu0 0.0
  %790 = vmatpush2.msra.mxu0 0.0
  %791 = vmatprep.subr.mxu0 0.0
  %792 = vmatpush2.msra.mxu0 0.0
  %793 = vmatprep.subr.mxu0 0.0
  %794 = vmatpush2.msra.mxu0 0.0
  %795 = vmatprep.subr.mxu0 0.0
  %796 = vmatpush2.msra.mxu0 0.0
  %797 = vmatprep.subr.mxu0 0.0
  %798 = vmatpush2.msra.mxu0 0.0
  %799 = vmatprep.subr.mxu0 0.0
  %800 = vmatpush2.msra.mxu0 0.0
  %801 = vmatprep.subr.mxu0 0.0
  %802 = vmatpush2.msra.mxu0 0.0
  %803 = vmatprep.subr.mxu0 0.0
  %804 = vmatpush2.msra.mxu0 0.0
  %805 = vmatprep.subr.mxu0 0.0
  %806 = vmatpush2.msra.mxu0 0.0
  %807 = vmatprep.subr.mxu0 0.0
  %808 = vmatpush2.msra.mxu0 0.0
  %809 = vmatprep.subr.mxu0 0.0
  %810 = vmatpush2.msra.mxu0 0.0
  %811 = vmatprep.subr.mxu0 0.0
  %812 = vmatpush2.msra.mxu0 0.0
  %813 = vmatprep.subr.mxu0 0.0
  %814 = vmatpush2.msra.mxu0 0.0
  %815 = vmatprep.mubr.f32.mxu0 0.0
  %816 = vmatmul.mubr.f32.gmra.mxu0 %v512
  %v817 = vpop.f32.mrf.mxu0
  %v818 = vadd.f32 0.0, %v817
  %v819 = vpop.f32.mrf.mxu0
  %v820 = vadd.f32 0.0, %v819
  %821 = vdwg.mxu0
  %v822 = vadd.f32 %v676, %v747
  %v823 = vadd.f32 %v677, %v749
  %v824 = vadd.f32 %v678, %v818
  %v825 = vadd.f32 %v679, %v820
  %v826 = vxor.u32 %v822, 2147483648
  %v827 = vmul.f32 %v826, 1.442695
  %v828 = vpow.pop %v827
  %v829 = vadd.f32 %v828, 1.0
  %v830 = vrcp.pop %v829
  %v831 = vmul.f32 1.0, %v830
  %v832 = vxor.u32 %v823, 2147483648
  %v833 = vmul.f32 %v832, 1.442695
  %v834 = vpow.pop %v833
  %v835 = vadd.f32 %v834, 1.0
  %v836 = vrcp.pop %v835
  %v837 = vmul.f32 1.0, %v836
  %v838 = vtanh.pop %v824
  %v839 = vxor.u32 %v825, 2147483648
  %v840 = vmul.f32 %v839, 1.442695
  %v841 = vpow.pop %v840
  %v842 = vadd.f32 %v841, 1.0
  %v843 = vrcp.pop %v842
  %v844 = vmul.f32 1.0, %v843
  %v845 = vmul.f32 %v837, 0.0
  %v846 = vmul.f32 %v831, %v838
  %v847 = vadd.f32 %v845, %v846
  %v848 = vtanh.pop %v847
  %v849 = vmul.f32 %v844, %v848
  %850 = vset.pattern.permute.xlu0 1
  %851 = vperm.xlu0 %850, %v286
  %v852 = vpop.permute.xlu0 %851
  %v854 = vmul.f32 %v852, %v297
  %v855 = vmul.f32 %v852, %v301
  %v856 = vmul.f32 %v852, %v305
  %v857 = vmul.f32 %v852, %v309
  %v858 = vadd.f32 %v322, %v854
  %v859 = vadd.f32 %v326, %v855
  %v860 = vadd.f32 %v330, %v856
  %v861 = vadd.f32 %v334, %v857
  %862 = vmatprep.subr.mxu0 %v86
  %863 = vmatpush1.msra.mxu0 %v85
  %864 = vmatprep.subr.mxu0 %v82
  %865 = vmatpush1.msra.mxu0 %v81
  %866 = vmatprep.subr.mxu0 %v78
  %867 = vmatpush1.msra.mxu0 %v77
  %868 = vmatprep.subr.mxu0 %v74
  %869 = vmatpush1.msra.mxu0 %v73
  %870 = vmatprep.subr.mxu0 %v70
  %871 = vmatpush1.msra.mxu0 %v69
  %872 = vmatprep.subr.mxu0 %v66
  %873 = vmatpush1.msra.mxu0 %v65
  %874 = vmatprep.subr.mxu0 %v62
  %875 = vmatpush1.msra.mxu0 %v61
  %876 = vmatprep.subr.mxu0 %v58
  %877 = vmatpush1.msra.mxu0 %v57
  %878 = vmatprep.subr.mxu0 %v54
  %879 = vmatpush1.msra.mxu0 %v53
  %880 = vmatprep.subr.mxu0 %v50
  %881 = vmatpush1.msra.mxu0 %v49
  %882 = vmatprep.subr.mxu0 %v46
  %883 = vmatpush1.msra.mxu0 %v45
  %884 = vmatprep.subr.mxu0 %v42
  %885 = vmatpush1.msra.mxu0 %v41
  %886 = vmatprep.subr.mxu0 %v38
  %887 = vmatpush1.msra.mxu0 %v37
  %888 = vmatprep.subr.mxu0 %v34
  %889 = vmatpush1.msra.mxu0 %v33
  %890 = vmatprep.subr.mxu0 %v30
  %891 = vmatpush1.msra.mxu0 %v29
  %892 = vmatprep.subr.mxu0 %v26
  %893 = vmatpush1.msra.mxu0 %v25
  %894 = vmatprep.subr.mxu0 0.0
  %895 = vmatpush2.msra.mxu0 0.0
  %896 = vmatprep.subr.mxu0 0.0
  %897 = vmatpush2.msra.mxu0 0.0
  %898 = vmatprep.subr.mxu0 0.0
  %899 = vmatpush2.msra.mxu0 0.0
  %900 = vmatprep.subr.mxu0 0.0
  %901 = vmatpush2.msra.mxu0 0.0
  %902 = vmatprep.subr.mxu0 0.0
  %903 = vmatpush2.msra.mxu0 0.0
  %904 = vmatprep.subr.mxu0 0.0
  %905 = vmatpush2.msra.mxu0 0.0
  %906 = vmatprep.subr.mxu0 0.0
  %907 = vmatpush2.msra.mxu0 0.0
  %908 = vmatprep.subr.mxu0 0.0
  %909 = vmatpush2.msra.mxu0 0.0
  %910 = vmatprep.subr.mxu0 0.0
  %911 = vmatpush2.msra.mxu0 0.0
  %912 = vmatprep.subr.mxu0 0.0
  %913 = vmatpush2.msra.mxu0 0.0
  %914 = vmatprep.subr.mxu0 0.0
  %915 = vmatpush2.msra.mxu0 0.0
  %916 = vmatprep.subr.mxu0 0.0
  %917 = vmatpush2.msra.mxu0 0.0
  %918 = vmatprep.subr.mxu0 0.0
  %919 = vmatpush2.msra.mxu0 0.0
  %920 = vmatprep.subr.mxu0 0.0
  %921 = vmatpush2.msra.mxu0 0.0
  %922 = vmatprep.subr.mxu0 0.0
  %923 = vmatpush2.msra.mxu0 0.0
  %924 = vmatprep.subr.mxu0 0.0
  %925 = vmatpush2.msra.mxu0 0.0
  %926 = vmatprep.mubr.f32.mxu0 0.0
  %927 = vmatmul.mubr.f32.gmra.mxu0 %v512
  %v928 = vpop.f32.mrf.mxu0
  %v929 = vadd.f32 0.0, %v928
  %v930 = vpop.f32.mrf.mxu0
  %v931 = vadd.f32 0.0, %v930
  %932 = vdwg.mxu0
  %933 = vmatprep.subr.mxu0 %v88
  %934 = vmatpush1.msra.mxu0 %v87
  %935 = vmatprep.subr.mxu0 %v84
  %936 = vmatpush1.msra.mxu0 %v83
  %937 = vmatprep.subr.mxu0 %v80
  %938 = vmatpush1.msra.mxu0 %v79
  %939 = vmatprep.subr.mxu0 %v76
  %940 = vmatpush1.msra.mxu0 %v75
  %941 = vmatprep.subr.mxu0 %v72
  %942 = vmatpush1.msra.mxu0 %v71
  %943 = vmatprep.subr.mxu0 %v68
  %944 = vmatpush1.msra.mxu0 %v67
  %945 = vmatprep.subr.mxu0 %v64
  %946 = vmatpush1.msra.mxu0 %v63
  %947 = vmatprep.subr.mxu0 %v60
  %948 = vmatpush1.msra.mxu0 %v59
  %949 = vmatprep.subr.mxu0 %v56
  %950 = vmatpush1.msra.mxu0 %v55
  %951 = vmatprep.subr.mxu0 %v52
  %952 = vmatpush1.msra.mxu0 %v51
  %953 = vmatprep.subr.mxu0 %v48
  %954 = vmatpush1.msra.mxu0 %v47
  %955 = vmatprep.subr.mxu0 %v44
  %956 = vmatpush1.msra.mxu0 %v43
  %957 = vmatprep.subr.mxu0 %v40
  %958 = vmatpush1.msra.mxu0 %v39
  %959 = vmatprep.subr.mxu0 %v36
  %960 = vmatpush1.msra.mxu0 %v35
  %961 = vmatprep.subr.mxu0 %v32
  %962 = vmatpush1.msra.mxu0 %v31
  %963 = vmatprep.subr.mxu0 %v28
  %964 = vmatpush1.msra.mxu0 %v27
  %965 = vmatprep.subr.mxu0 0.0
  %966 = vmatpush2.msra.mxu0 0.0
  %967 = vmatprep.subr.mxu0 0.0
  %968 = vmatpush2.msra.mxu0 0.0
  %969 = vmatprep.subr.mxu0 0.0
  %970 = vmatpush2.msra.mxu0 0.0
  %971 = vmatprep.subr.mxu0 0.0
  %972 = vmatpush2.msra.mxu0 0.0
  %973 = vmatprep.subr.mxu0 0.0
  %974 = vmatpush2.msra.mxu0 0.0
  %975 = vmatprep.subr.mxu0 0.0
  %976 = vmatpush2.msra.mxu0 0.0
  %977 = vmatprep.subr.mxu0 0.0
  %978 = vmatpush2.msra.mxu0 0.0
  %979 = vmatprep.subr.mxu0 0.0
  %980 = vmatpush2.msra.mxu0 0.0
  %981 = vmatprep.subr.mxu0 0.0
  %982 = vmatpush2.msra.mxu0 0.0
  %983 = vmatprep.subr.mxu0 0.0
  %984 = vmatpush2.msra.mxu0 0.0
  %985 = vmatprep.subr.mxu0 0.0
  %986 = vmatpush2.msra.mxu0 0.0
  %987 = vmatprep.subr.mxu0 0.0
  %988 = vmatpush2.msra.mxu0 0.0
  %989 = vmatprep.subr.mxu0 0.0
  %990 = vmatpush2.msra.mxu0 0.0
  %991 = vmatprep.subr.mxu0 0.0
  %992 = vmatpush2.msra.mxu0 0.0
  %993 = vmatprep.subr.mxu0 0.0
  %994 = vmatpush2.msra.mxu0 0.0
  %995 = vmatprep.subr.mxu0 0.0
  %996 = vmatpush2.msra.mxu0 0.0
  %997 = vmatprep.mubr.f32.mxu0 0.0
  %998 = vmatmul.mubr.f32.gmra.mxu0 %v512
  %v999 = vpop.f32.mrf.mxu0
  %v1000 = vadd.f32 0.0, %v999
  %v1001 = vpop.f32.mrf.mxu0
  %v1002 = vadd.f32 0.0, %v1001
  %1003 = vdwg.mxu0
  %v1004 = vadd.f32 %v858, %v929
  %v1005 = vadd.f32 %v859, %v931
  %v1006 = vadd.f32 %v860, %v1000
  %v1007 = vadd.f32 %v861, %v1002
  %v1008 = vxor.u32 %v1004, 2147483648
  %v1009 = vmul.f32 %v1008, 1.442695
  %v1010 = vpow.pop %v1009
  %v1011 = vadd.f32 %v1010, 1.0
  %v1012 = vrcp.pop %v1011
  %v1013 = vmul.f32 1.0, %v1012
  %v1014 = vxor.u32 %v1005, 2147483648
  %v1015 = vmul.f32 %v1014, 1.442695
  %v1016 = vpow.pop %v1015
  %v1017 = vadd.f32 %v1016, 1.0
  %v1018 = vrcp.pop %v1017
  %v1019 = vmul.f32 1.0, %v1018
  %v1020 = vtanh.pop %v1006
  %v1021 = vxor.u32 %v1007, 2147483648
  %v1022 = vmul.f32 %v1021, 1.442695
  %v1023 = vpow.pop %v1022
  %v1024 = vadd.f32 %v1023, 1.0
  %v1025 = vrcp.pop %v1024
  %v1026 = vmul.f32 1.0, %v1025
  %v1027 = vmul.f32 %v1019, %v510
  %v1028 = vmul.f32 %v1013, %v1020
  %v1029 = vadd.f32 %v1027, %v1028
  %v1030 = vtanh.pop %v1029
  %v1031 = vmul.f32 %v1026, %v1030
  %1032 = vmatprep.subr.mxu0 %v214
  %1033 = vmatpush1.msra.mxu0 %v213
  %1034 = vmatprep.subr.mxu0 %v210
  %1035 = vmatpush1.msra.mxu0 %v209
  %1036 = vmatprep.subr.mxu0 %v206
  %1037 = vmatpush1.msra.mxu0 %v205
  %1038 = vmatprep.subr.mxu0 %v202
  %1039 = vmatpush1.msra.mxu0 %v201
  %1040 = vmatprep.subr.mxu0 %v198
  %1041 = vmatpush1.msra.mxu0 %v197
  %1042 = vmatprep.subr.mxu0 %v194
  %1043 = vmatpush1.msra.mxu0 %v193
  %1044 = vmatprep.subr.mxu0 %v190
  %1045 = vmatpush1.msra.mxu0 %v189
  %1046 = vmatprep.subr.mxu0 %v186
  %1047 = vmatpush1.msra.mxu0 %v185
  %1048 = vmatprep.subr.mxu0 %v182
  %1049 = vmatpush1.msra.mxu0 %v181
  %1050 = vmatprep.subr.mxu0 %v178
  %1051 = vmatpush1.msra.mxu0 %v177
  %1052 = vmatprep.subr.mxu0 %v174
  %1053 = vmatpush1.msra.mxu0 %v173
  %1054 = vmatprep.subr.mxu0 %v170
  %1055 = vmatpush1.msra.mxu0 %v169
  %1056 = vmatprep.subr.mxu0 %v166
  %1057 = vmatpush1.msra.mxu0 %v165
  %1058 = vmatprep.subr.mxu0 %v162
  %1059 = vmatpush1.msra.mxu0 %v161
  %1060 = vmatprep.subr.mxu0 %v158
  %1061 = vmatpush1.msra.mxu0 %v157
  %1062 = vmatprep.subr.mxu0 %v154
  %1063 = vmatpush1.msra.mxu0 %v153
  %1064 = vmatprep.subr.mxu0 0.0
  %1065 = vmatpush2.msra.mxu0 0.0
  %1066 = vmatprep.subr.mxu0 0.0
  %1067 = vmatpush2.msra.mxu0 0.0
  %1068 = vmatprep.subr.mxu0 0.0
  %1069 = vmatpush2.msra.mxu0 0.0
  %1070 = vmatprep.subr.mxu0 0.0
  %1071 = vmatpush2.msra.mxu0 0.0
  %1072 = vmatprep.subr.mxu0 0.0
  %1073 = vmatpush2.msra.mxu0 0.0
  %1074 = vmatprep.subr.mxu0 0.0
  %1075 = vmatpush2.msra.mxu0 0.0
  %1076 = vmatprep.subr.mxu0 0.0
  %1077 = vmatpush2.msra.mxu0 0.0
  %1078 = vmatprep.subr.mxu0 0.0
  %1079 = vmatpush2.msra.mxu0 0.0
  %1080 = vmatprep.subr.mxu0 0.0
  %1081 = vmatpush2.msra.mxu0 0.0
  %1082 = vmatprep.subr.mxu0 0.0
  %1083 = vmatpush2.msra.mxu0 0.0
  %1084 = vmatprep.subr.mxu0 0.0
  %1085 = vmatpush2.msra.mxu0 0.0
  %1086 = vmatprep.subr.mxu0 0.0
  %1087 = vmatpush2.msra.mxu0 0.0
  %1088 = vmatprep.subr.mxu0 0.0
  %1089 = vmatpush2.msra.mxu0 0.0
  %1090 = vmatprep.subr.mxu0 0.0
  %1091 = vmatpush2.msra.mxu0 0.0
  %1092 = vmatprep.subr.mxu0 0.0
  %1093 = vmatpush2.msra.mxu0 0.0
  %1094 = vmatprep.subr.mxu0 0.0
  %1095 = vmatpush2.msra.mxu0 0.0
  %1096 = vmatprep.mubr.f32.mxu0 0.0
  %1097 = vmatmul.mubr.f32.gmra.mxu0 %v849
  %v1098 = vpop.f32.mrf.mxu0
  %v1099 = vadd.f32 0.0, %v1098
  %v1100 = vpop.f32.mrf.mxu0
  %v1101 = vadd.f32 0.0, %v1100
  %1102 = vdwg.mxu0
  %1103 = vmatprep.subr.mxu0 %v216
  %1104 = vmatpush1.msra.mxu0 %v215
  %1105 = vmatprep.subr.mxu0 %v212
  %1106 = vmatpush1.msra.mxu0 %v211
  %1107 = vmatprep.subr.mxu0 %v208
  %1108 = vmatpush1.msra.mxu0 %v207
  %1109 = vmatprep.subr.mxu0 %v204
  %1110 = vmatpush1.msra.mxu0 %v203
  %1111 = vmatprep.subr.mxu0 %v200
  %1112 = vmatpush1.msra.mxu0 %v199
  %1113 = vmatprep.subr.mxu0 %v196
  %1114 = vmatpush1.msra.mxu0 %v195
  %1115 = vmatprep.subr.mxu0 %v192
  %1116 = vmatpush1.msra.mxu0 %v191
  %1117 = vmatprep.subr.mxu0 %v188
  %1118 = vmatpush1.msra.mxu0 %v187
  %1119 = vmatprep.subr.mxu0 %v184
  %1120 = vmatpush1.msra.mxu0 %v183
  %1121 = vmatprep.subr.mxu0 %v180
  %1122 = vmatpush1.msra.mxu0 %v179
  %1123 = vmatprep.subr.mxu0 %v176
  %1124 = vmatpush1.msra.mxu0 %v175
  %1125 = vmatprep.subr.mxu0 %v172
  %1126 = vmatpush1.msra.mxu0 %v171
  %1127 = vmatprep.subr.mxu0 %v168
  %1128 = vmatpush1.msra.mxu0 %v167
  %1129 = vmatprep.subr.mxu0 %v164
  %1130 = vmatpush1.msra.mxu0 %v163
  %1131 = vmatprep.subr.mxu0 %v160
  %1132 = vmatpush1.msra.mxu0 %v159
  %1133 = vmatprep.subr.mxu0 %v156
  %1134 = vmatpush1.msra.mxu0 %v155
  %1135 = vmatprep.subr.mxu0 0.0
  %1136 = vmatpush2.msra.mxu0 0.0
  %1137 = vmatprep.subr.mxu0 0.0
  %1138 = vmatpush2.msra.mxu0 0.0
  %1139 = vmatprep.subr.mxu0 0.0
  %1140 = vmatpush2.msra.mxu0 0.0
  %1141 = vmatprep.subr.mxu0 0.0
  %1142 = vmatpush2.msra.mxu0 0.0
  %1143 = vmatprep.subr.mxu0 0.0
  %1144 = vmatpush2.msra.mxu0 0.0
  %1145 = vmatprep.subr.mxu0 0.0
  %1146 = vmatpush2.msra.mxu0 0.0
  %1147 = vmatprep.subr.mxu0 0.0
  %1148 = vmatpush2.msra.mxu0 0.0
  %1149 = vmatprep.subr.mxu0 0.0
  %1150 = vmatpush2.msra.mxu0 0.0
  %1151 = vmatprep.subr.mxu0 0.0
  %1152 = vmatpush2.msra.mxu0 0.0
  %1153 = vmatprep.subr.mxu0 0.0
  %1154 = vmatpush2.msra.mxu0 0.0
  %1155 = vmatprep.subr.mxu0 0.0
  %1156 = vmatpush2.msra.mxu0 0.0
  %1157 = vmatprep.subr.mxu0 0.0
  %1158 = vmatpush2.msra.mxu0 0.0
  %1159 = vmatprep.subr.mxu0 0.0
  %1160 = vmatpush2.msra.mxu0 0.0
  %1161 = vmatprep.subr.mxu0 0.0
  %1162 = vmatpush2.msra.mxu0 0.0
  %1163 = vmatprep.subr.mxu0 0.0
  %1164 = vmatpush2.msra.mxu0 0.0
  %1165 = vmatprep.subr.mxu0 0.0
  %1166 = vmatpush2.msra.mxu0 0.0
  %1167 = vmatprep.mubr.f32.mxu0 0.0
  %1168 = vmatmul.mubr.f32.gmra.mxu0 %v849
  %v1169 = vpop.f32.mrf.mxu0
  %v1170 = vadd.f32 0.0, %v1169
  %v1171 = vpop.f32.mrf.mxu0
  %v1172 = vadd.f32 0.0, %v1171
  %1173 = vdwg.mxu0
  %v1174 = vadd.f32 %v659, %v1099
  %v1175 = vadd.f32 %v663, %v1101
  %v1176 = vadd.f32 %v667, %v1170
  %v1177 = vadd.f32 %v671, %v1172
  %1178 = vmatprep.subr.mxu0 %v150
  %1179 = vmatpush1.msra.mxu0 %v149
  %1180 = vmatprep.subr.mxu0 %v146
  %1181 = vmatpush1.msra.mxu0 %v145
  %1182 = vmatprep.subr.mxu0 %v142
  %1183 = vmatpush1.msra.mxu0 %v141
  %1184 = vmatprep.subr.mxu0 %v138
  %1185 = vmatpush1.msra.mxu0 %v137
  %1186 = vmatprep.subr.mxu0 %v134
  %1187 = vmatpush1.msra.mxu0 %v133
  %1188 = vmatprep.subr.mxu0 %v130
  %1189 = vmatpush1.msra.mxu0 %v129
  %1190 = vmatprep.subr.mxu0 %v126
  %1191 = vmatpush1.msra.mxu0 %v125
  %1192 = vmatprep.subr.mxu0 %v122
  %1193 = vmatpush1.msra.mxu0 %v121
  %1194 = vmatprep.subr.mxu0 %v118
  %1195 = vmatpush1.msra.mxu0 %v117
  %1196 = vmatprep.subr.mxu0 %v114
  %1197 = vmatpush1.msra.mxu0 %v113
  %1198 = vmatprep.subr.mxu0 %v110
  %1199 = vmatpush1.msra.mxu0 %v109
  %1200 = vmatprep.subr.mxu0 %v106
  %1201 = vmatpush1.msra.mxu0 %v105
  %1202 = vmatprep.subr.mxu0 %v102
  %1203 = vmatpush1.msra.mxu0 %v101
  %1204 = vmatprep.subr.mxu0 %v98
  %1205 = vmatpush1.msra.mxu0 %v97
  %1206 = vmatprep.subr.mxu0 %v94
  %1207 = vmatpush1.msra.mxu0 %v93
  %1208 = vmatprep.subr.mxu0 %v90
  %1209 = vmatpush1.msra.mxu0 %v89
  %1210 = vmatprep.subr.mxu0 0.0
  %1211 = vmatpush2.msra.mxu0 0.0
  %1212 = vmatprep.subr.mxu0 0.0
  %1213 = vmatpush2.msra.mxu0 0.0
  %1214 = vmatprep.subr.mxu0 0.0
  %1215 = vmatpush2.msra.mxu0 0.0
  %1216 = vmatprep.subr.mxu0 0.0
  %1217 = vmatpush2.msra.mxu0 0.0
  %1218 = vmatprep.subr.mxu0 0.0
  %1219 = vmatpush2.msra.mxu0 0.0
  %1220 = vmatprep.subr.mxu0 0.0
  %1221 = vmatpush2.msra.mxu0 0.0
  %1222 = vmatprep.subr.mxu0 0.0
  %1223 = vmatpush2.msra.mxu0 0.0
  %1224 = vmatprep.subr.mxu0 0.0
  %1225 = vmatpush2.msra.mxu0 0.0
  %1226 = vmatprep.subr.mxu0 0.0
  %1227 = vmatpush2.msra.mxu0 0.0
  %1228 = vmatprep.subr.mxu0 0.0
  %1229 = vmatpush2.msra.mxu0 0.0
  %1230 = vmatprep.subr.mxu0 0.0
  %1231 = vmatpush2.msra.mxu0 0.0
  %1232 = vmatprep.subr.mxu0 0.0
  %1233 = vmatpush2.msra.mxu0 0.0
  %1234 = vmatprep.subr.mxu0 0.0
  %1235 = vmatpush2.msra.mxu0 0.0
  %1236 = vmatprep.subr.mxu0 0.0
  %1237 = vmatpush2.msra.mxu0 0.0
  %1238 = vmatprep.subr.mxu0 0.0
  %1239 = vmatpush2.msra.mxu0 0.0
  %1240 = vmatprep.subr.mxu0 0.0
  %1241 = vmatpush2.msra.mxu0 0.0
  %1242 = vmatprep.mubr.f32.mxu0 0.0
  %1243 = vmatmul.mubr.f32.gmra.mxu0 %v1031
  %v1244 = vpop.f32.mrf.mxu0
  %v1245 = vadd.f32 0.0, %v1244
  %v1246 = vpop.f32.mrf.mxu0
  %v1247 = vadd.f32 0.0, %v1246
  %1248 = vdwg.mxu0
  %1249 = vmatprep.subr.mxu0 %v152
  %1250 = vmatpush1.msra.mxu0 %v151
  %1251 = vmatprep.subr.mxu0 %v148
  %1252 = vmatpush1.msra.mxu0 %v147
  %1253 = vmatprep.subr.mxu0 %v144
  %1254 = vmatpush1.msra.mxu0 %v143
  %1255 = vmatprep.subr.mxu0 %v140
  %1256 = vmatpush1.msra.mxu0 %v139
  %1257 = vmatprep.subr.mxu0 %v136
  %1258 = vmatpush1.msra.mxu0 %v135
  %1259 = vmatprep.subr.mxu0 %v132
  %1260 = vmatpush1.msra.mxu0 %v131
  %1261 = vmatprep.subr.mxu0 %v128
  %1262 = vmatpush1.msra.mxu0 %v127
  %1263 = vmatprep.subr.mxu0 %v124
  %1264 = vmatpush1.msra.mxu0 %v123
  %1265 = vmatprep.subr.mxu0 %v120
  %1266 = vmatpush1.msra.mxu0 %v119
  %1267 = vmatprep.subr.mxu0 %v116
  %1268 = vmatpush1.msra.mxu0 %v115
  %1269 = vmatprep.subr.mxu0 %v112
  %1270 = vmatpush1.msra.mxu0 %v111
  %1271 = vmatprep.subr.mxu0 %v108
  %1272 = vmatpush1.msra.mxu0 %v107
  %1273 = vmatprep.subr.mxu0 %v104
  %1274 = vmatpush1.msra.mxu0 %v103
  %1275 = vmatprep.subr.mxu0 %v100
  %1276 = vmatpush1.msra.mxu0 %v99
  %1277 = vmatprep.subr.mxu0 %v96
  %1278 = vmatpush1.msra.mxu0 %v95
  %1279 = vmatprep.subr.mxu0 %v92
  %1280 = vmatpush1.msra.mxu0 %v91
  %1281 = vmatprep.subr.mxu0 0.0
  %1282 = vmatpush2.msra.mxu0 0.0
  %1283 = vmatprep.subr.mxu0 0.0
  %1284 = vmatpush2.msra.mxu0 0.0
  %1285 = vmatprep.subr.mxu0 0.0
  %1286 = vmatpush2.msra.mxu0 0.0
  %1287 = vmatprep.subr.mxu0 0.0
  %1288 = vmatpush2.msra.mxu0 0.0
  %1289 = vmatprep.subr.mxu0 0.0
  %1290 = vmatpush2.msra.mxu0 0.0
  %1291 = vmatprep.subr.mxu0 0.0
  %1292 = vmatpush2.msra.mxu0 0.0
  %1293 = vmatprep.subr.mxu0 0.0
  %1294 = vmatpush2.msra.mxu0 0.0
  %1295 = vmatprep.subr.mxu0 0.0
  %1296 = vmatpush2.msra.mxu0 0.0
  %1297 = vmatprep.subr.mxu0 0.0
  %1298 = vmatpush2.msra.mxu0 0.0
  %1299 = vmatprep.subr.mxu0 0.0
  %1300 = vmatpush2.msra.mxu0 0.0
  %1301 = vmatprep.subr.mxu0 0.0
  %1302 = vmatpush2.msra.mxu0 0.0
  %1303 = vmatprep.subr.mxu0 0.0
  %1304 = vmatpush2.msra.mxu0 0.0
  %1305 = vmatprep.subr.mxu0 0.0
  %1306 = vmatpush2.msra.mxu0 0.0
  %1307 = vmatprep.subr.mxu0 0.0
  %1308 = vmatpush2.msra.mxu0 0.0
  %1309 = vmatprep.subr.mxu0 0.0
  %1310 = vmatpush2.msra.mxu0 0.0
  %1311 = vmatprep.subr.mxu0 0.0
  %1312 = vmatpush2.msra.mxu0 0.0
  %1313 = vmatprep.mubr.f32.mxu0 0.0
  %1314 = vmatmul.mubr.f32.gmra.mxu0 %v1031
  %v1315 = vpop.f32.mrf.mxu0
  %v1316 = vadd.f32 0.0, %v1315
  %v1317 = vpop.f32.mrf.mxu0
  %v1318 = vadd.f32 0.0, %v1317
  %1319 = vdwg.mxu0
  %v1320 = vadd.f32 %v1174, %v1245
  %v1321 = vadd.f32 %v1175, %v1247
  %v1322 = vadd.f32 %v1176, %v1316
  %v1323 = vadd.f32 %v1177, %v1318
  %v1324 = vxor.u32 %v1320, 2147483648
  %v1325 = vmul.f32 %v1324, 1.442695
  %v1326 = vpow.pop %v1325
  %v1327 = vadd.f32 %v1326, 1.0
  %v1328 = vrcp.pop %v1327
  %v1329 = vmul.f32 1.0, %v1328
  %v1330 = vxor.u32 %v1321, 2147483648
  %v1331 = vmul.f32 %v1330, 1.442695
  %v1332 = vpow.pop %v1331
  %v1333 = vadd.f32 %v1332, 1.0
  %v1334 = vrcp.pop %v1333
  %v1335 = vmul.f32 1.0, %v1334
  %v1336 = vtanh.pop %v1322
  %v1337 = vxor.u32 %v1323, 2147483648
  %v1338 = vmul.f32 %v1337, 1.442695
  %v1339 = vpow.pop %v1338
  %v1340 = vadd.f32 %v1339, 1.0
  %v1341 = vrcp.pop %v1340
  %v1342 = vmul.f32 1.0, %v1341
  %v1343 = vmul.f32 %v1335, %v847
  %v1344 = vmul.f32 %v1329, %v1336
  %v1345 = vadd.f32 %v1343, %v1344
  %v1346 = vtanh.pop %v1345
  %v1347 = vmul.f32 %v1342, %v1346
  %1348 = vset.pattern.permute.xlu0 2
  %1349 = vperm.xlu0 %1348, %v286
  %v1350 = vpop.permute.xlu0 %1349
  %v1352 = vmul.f32 %v1350, %v297
  %v1353 = vmul.f32 %v1350, %v301
  %v1354 = vmul.f32 %v1350, %v305
  %v1355 = vmul.f32 %v1350, %v309
  %v1356 = vadd.f32 %v322, %v1352
  %v1357 = vadd.f32 %v326, %v1353
  %v1358 = vadd.f32 %v330, %v1354
  %v1359 = vadd.f32 %v334, %v1355
  %1360 = vmatprep.subr.mxu0 %v86
  %1361 = vmatpush1.msra.mxu0 %v85
  %1362 = vmatprep.subr.mxu0 %v82
  %1363 = vmatpush1.msra.mxu0 %v81
  %1364 = vmatprep.subr.mxu0 %v78
  %1365 = vmatpush1.msra.mxu0 %v77
  %1366 = vmatprep.subr.mxu0 %v74
  %1367 = vmatpush1.msra.mxu0 %v73
  %1368 = vmatprep.subr.mxu0 %v70
  %1369 = vmatpush1.msra.mxu0 %v69
  %1370 = vmatprep.subr.mxu0 %v66
  %1371 = vmatpush1.msra.mxu0 %v65
  %1372 = vmatprep.subr.mxu0 %v62
  %1373 = vmatpush1.msra.mxu0 %v61
  %1374 = vmatprep.subr.mxu0 %v58
  %1375 = vmatpush1.msra.mxu0 %v57
  %1376 = vmatprep.subr.mxu0 %v54
  %1377 = vmatpush1.msra.mxu0 %v53
  %1378 = vmatprep.subr.mxu0 %v50
  %1379 = vmatpush1.msra.mxu0 %v49
  %1380 = vmatprep.subr.mxu0 %v46
  %1381 = vmatpush1.msra.mxu0 %v45
  %1382 = vmatprep.subr.mxu0 %v42
  %1383 = vmatpush1.msra.mxu0 %v41
  %1384 = vmatprep.subr.mxu0 %v38
  %1385 = vmatpush1.msra.mxu0 %v37
  %1386 = vmatprep.subr.mxu0 %v34
  %1387 = vmatpush1.msra.mxu0 %v33
  %1388 = vmatprep.subr.mxu0 %v30
  %1389 = vmatpush1.msra.mxu0 %v29
  %1390 = vmatprep.subr.mxu0 %v26
  %1391 = vmatpush1.msra.mxu0 %v25
  %1392 = vmatprep.subr.mxu0 0.0
  %1393 = vmatpush2.msra.mxu0 0.0
  %1394 = vmatprep.subr.mxu0 0.0
  %1395 = vmatpush2.msra.mxu0 0.0
  %1396 = vmatprep.subr.mxu0 0.0
  %1397 = vmatpush2.msra.mxu0 0.0
  %1398 = vmatprep.subr.mxu0 0.0
  %1399 = vmatpush2.msra.mxu0 0.0
  %1400 = vmatprep.subr.mxu0 0.0
  %1401 = vmatpush2.msra.mxu0 0.0
  %1402 = vmatprep.subr.mxu0 0.0
  %1403 = vmatpush2.msra.mxu0 0.0
  %1404 = vmatprep.subr.mxu0 0.0
  %1405 = vmatpush2.msra.mxu0 0.0
  %1406 = vmatprep.subr.mxu0 0.0
  %1407 = vmatpush2.msra.mxu0 0.0
  %1408 = vmatprep.subr.mxu0 0.0
  %1409 = vmatpush2.msra.mxu0 0.0
  %1410 = vmatprep.subr.mxu0 0.0
  %1411 = vmatpush2.msra.mxu0 0.0
  %1412 = vmatprep.subr.mxu0 0.0
  %1413 = vmatpush2.msra.mxu0 0.0
  %1414 = vmatprep.subr.mxu0 0.0
  %1415 = vmatpush2.msra.mxu0 0.0
  %1416 = vmatprep.subr.mxu0 0.0
  %1417 = vmatpush2.msra.mxu0 0.0
  %1418 = vmatprep.subr.mxu0 0.0
  %1419 = vmatpush2.msra.mxu0 0.0
  %1420 = vmatprep.subr.mxu0 0.0
  %1421 = vmatpush2.msra.mxu0 0.0
  %1422 = vmatprep.subr.mxu0 0.0
  %1423 = vmatpush2.msra.mxu0 0.0
  %1424 = vmatprep.mubr.f32.mxu0 0.0
  %1425 = vmatmul.mubr.f32.gmra.mxu0 %v1031
  %v1426 = vpop.f32.mrf.mxu0
  %v1427 = vadd.f32 0.0, %v1426
  %v1428 = vpop.f32.mrf.mxu0
  %v1429 = vadd.f32 0.0, %v1428
  %1430 = vdwg.mxu0
  %1431 = vmatprep.subr.mxu0 %v88
  %1432 = vmatpush1.msra.mxu0 %v87
  %1433 = vmatprep.subr.mxu0 %v84
  %1434 = vmatpush1.msra.mxu0 %v83
  %1435 = vmatprep.subr.mxu0 %v80
  %1436 = vmatpush1.msra.mxu0 %v79
  %1437 = vmatprep.subr.mxu0 %v76
  %1438 = vmatpush1.msra.mxu0 %v75
  %1439 = vmatprep.subr.mxu0 %v72
  %1440 = vmatpush1.msra.mxu0 %v71
  %1441 = vmatprep.subr.mxu0 %v68
  %1442 = vmatpush1.msra.mxu0 %v67
  %1443 = vmatprep.subr.mxu0 %v64
  %1444 = vmatpush1.msra.mxu0 %v63
  %1445 = vmatprep.subr.mxu0 %v60
  %1446 = vmatpush1.msra.mxu0 %v59
  %1447 = vmatprep.subr.mxu0 %v56
  %1448 = vmatpush1.msra.mxu0 %v55
  %1449 = vmatprep.subr.mxu0 %v52
  %1450 = vmatpush1.msra.mxu0 %v51
  %1451 = vmatprep.subr.mxu0 %v48
  %1452 = vmatpush1.msra.mxu0 %v47
  %1453 = vmatprep.subr.mxu0 %v44
  %1454 = vmatpush1.msra.mxu0 %v43
  %1455 = vmatprep.subr.mxu0 %v40
  %1456 = vmatpush1.msra.mxu0 %v39
  %1457 = vmatprep.subr.mxu0 %v36
  %1458 = vmatpush1.msra.mxu0 %v35
  %1459 = vmatprep.subr.mxu0 %v32
  %1460 = vmatpush1.msra.mxu0 %v31
  %1461 = vmatprep.subr.mxu0 %v28
  %1462 = vmatpush1.msra.mxu0 %v27
  %1463 = vmatprep.subr.mxu0 0.0
  %1464 = vmatpush2.msra.mxu0 0.0
  %1465 = vmatprep.subr.mxu0 0.0
  %1466 = vmatpush2.msra.mxu0 0.0
  %1467 = vmatprep.subr.mxu0 0.0
  %1468 = vmatpush2.msra.mxu0 0.0
  %1469 = vmatprep.subr.mxu0 0.0
  %1470 = vmatpush2.msra.mxu0 0.0
  %1471 = vmatprep.subr.mxu0 0.0
  %1472 = vmatpush2.msra.mxu0 0.0
  %1473 = vmatprep.subr.mxu0 0.0
  %1474 = vmatpush2.msra.mxu0 0.0
  %1475 = vmatprep.subr.mxu0 0.0
  %1476 = vmatpush2.msra.mxu0 0.0
  %1477 = vmatprep.subr.mxu0 0.0
  %1478 = vmatpush2.msra.mxu0 0.0
  %1479 = vmatprep.subr.mxu0 0.0
  %1480 = vmatpush2.msra.mxu0 0.0
  %1481 = vmatprep.subr.mxu0 0.0
  %1482 = vmatpush2.msra.mxu0 0.0
  %1483 = vmatprep.subr.mxu0 0.0
  %1484 = vmatpush2.msra.mxu0 0.0
  %1485 = vmatprep.subr.mxu0 0.0
  %1486 = vmatpush2.msra.mxu0 0.0
  %1487 = vmatprep.subr.mxu0 0.0
  %1488 = vmatpush2.msra.mxu0 0.0
  %1489 = vmatprep.subr.mxu0 0.0
  %1490 = vmatpush2.msra.mxu0 0.0
  %1491 = vmatprep.subr.mxu0 0.0
  %1492 = vmatpush2.msra.mxu0 0.0
  %1493 = vmatprep.subr.mxu0 0.0
  %1494 = vmatpush2.msra.mxu0 0.0
  %1495 = vmatprep.mubr.f32.mxu0 0.0
  %1496 = vmatmul.mubr.f32.gmra.mxu0 %v1031
  %v1497 = vpop.f32.mrf.mxu0
  %v1498 = vadd.f32 0.0, %v1497
  %v1499 = vpop.f32.mrf.mxu0
  %v1500 = vadd.f32 0.0, %v1499
  %1501 = vdwg.mxu0
  %v1502 = vadd.f32 %v1356, %v1427
  %v1503 = vadd.f32 %v1357, %v1429
  %v1504 = vadd.f32 %v1358, %v1498
  %v1505 = vadd.f32 %v1359, %v1500
  %v1506 = vxor.u32 %v1502, 2147483648
  %v1507 = vmul.f32 %v1506, 1.442695
  %v1508 = vpow.pop %v1507
  %v1509 = vadd.f32 %v1508, 1.0
  %v1510 = vrcp.pop %v1509
  %v1511 = vmul.f32 1.0, %v1510
  %v1512 = vxor.u32 %v1503, 2147483648
  %v1513 = vmul.f32 %v1512, 1.442695
  %v1514 = vpow.pop %v1513
  %v1515 = vadd.f32 %v1514, 1.0
  %v1516 = vrcp.pop %v1515
  %v1517 = vmul.f32 1.0, %v1516
  %v1518 = vtanh.pop %v1504
  %v1519 = vxor.u32 %v1505, 2147483648
  %v1520 = vmul.f32 %v1519, 1.442695
  %v1521 = vpow.pop %v1520
  %v1522 = vadd.f32 %v1521, 1.0
  %v1523 = vrcp.pop %v1522
  %v1524 = vmul.f32 1.0, %v1523
  %v1525 = vmul.f32 %v1517, %v1029
  %v1526 = vmul.f32 %v1511, %v1518
  %v1527 = vadd.f32 %v1525, %v1526
  %v1528 = vtanh.pop %v1527
  %v1529 = vmul.f32 %v1524, %v1528
  %1530 = vmatprep.subr.mxu0 %v214
  %1531 = vmatpush1.msra.mxu0 %v213
  %1532 = vmatprep.subr.mxu0 %v210
  %1533 = vmatpush1.msra.mxu0 %v209
  %1534 = vmatprep.subr.mxu0 %v206
  %1535 = vmatpush1.msra.mxu0 %v205
  %1536 = vmatprep.subr.mxu0 %v202
  %1537 = vmatpush1.msra.mxu0 %v201
  %1538 = vmatprep.subr.mxu0 %v198
  %1539 = vmatpush1.msra.mxu0 %v197
  %1540 = vmatprep.subr.mxu0 %v194
  %1541 = vmatpush1.msra.mxu0 %v193
  %1542 = vmatprep.subr.mxu0 %v190
  %1543 = vmatpush1.msra.mxu0 %v189
  %1544 = vmatprep.subr.mxu0 %v186
  %1545 = vmatpush1.msra.mxu0 %v185
  %1546 = vmatprep.subr.mxu0 %v182
  %1547 = vmatpush1.msra.mxu0 %v181
  %1548 = vmatprep.subr.mxu0 %v178
  %1549 = vmatpush1.msra.mxu0 %v177
  %1550 = vmatprep.subr.mxu0 %v174
  %1551 = vmatpush1.msra.mxu0 %v173
  %1552 = vmatprep.subr.mxu0 %v170
  %1553 = vmatpush1.msra.mxu0 %v169
  %1554 = vmatprep.subr.mxu0 %v166
  %1555 = vmatpush1.msra.mxu0 %v165
  %1556 = vmatprep.subr.mxu0 %v162
  %1557 = vmatpush1.msra.mxu0 %v161
  %1558 = vmatprep.subr.mxu0 %v158
  %1559 = vmatpush1.msra.mxu0 %v157
  %1560 = vmatprep.subr.mxu0 %v154
  %1561 = vmatpush1.msra.mxu0 %v153
  %1562 = vmatprep.subr.mxu0 0.0
  %1563 = vmatpush2.msra.mxu0 0.0
  %1564 = vmatprep.subr.mxu0 0.0
  %1565 = vmatpush2.msra.mxu0 0.0
  %1566 = vmatprep.subr.mxu0 0.0
  %1567 = vmatpush2.msra.mxu0 0.0
  %1568 = vmatprep.subr.mxu0 0.0
  %1569 = vmatpush2.msra.mxu0 0.0
  %1570 = vmatprep.subr.mxu0 0.0
  %1571 = vmatpush2.msra.mxu0 0.0
  %1572 = vmatprep.subr.mxu0 0.0
  %1573 = vmatpush2.msra.mxu0 0.0
  %1574 = vmatprep.subr.mxu0 0.0
  %1575 = vmatpush2.msra.mxu0 0.0
  %1576 = vmatprep.subr.mxu0 0.0
  %1577 = vmatpush2.msra.mxu0 0.0
  %1578 = vmatprep.subr.mxu0 0.0
  %1579 = vmatpush2.msra.mxu0 0.0
  %1580 = vmatprep.subr.mxu0 0.0
  %1581 = vmatpush2.msra.mxu0 0.0
  %1582 = vmatprep.subr.mxu0 0.0
  %1583 = vmatpush2.msra.mxu0 0.0
  %1584 = vmatprep.subr.mxu0 0.0
  %1585 = vmatpush2.msra.mxu0 0.0
  %1586 = vmatprep.subr.mxu0 0.0
  %1587 = vmatpush2.msra.mxu0 0.0
  %1588 = vmatprep.subr.mxu0 0.0
  %1589 = vmatpush2.msra.mxu0 0.0
  %1590 = vmatprep.subr.mxu0 0.0
  %1591 = vmatpush2.msra.mxu0 0.0
  %1592 = vmatprep.subr.mxu0 0.0
  %1593 = vmatpush2.msra.mxu0 0.0
  %1594 = vmatprep.mubr.f32.mxu0 0.0
  %1595 = vmatmul.mubr.f32.gmra.mxu0 %v1347
  %v1596 = vpop.f32.mrf.mxu0
  %v1597 = vadd.f32 0.0, %v1596
  %v1598 = vpop.f32.mrf.mxu0
  %v1599 = vadd.f32 0.0, %v1598
  %1600 = vdwg.mxu0
  %1601 = vmatprep.subr.mxu0 %v216
  %1602 = vmatpush1.msra.mxu0 %v215
  %1603 = vmatprep.subr.mxu0 %v212
  %1604 = vmatpush1.msra.mxu0 %v211
  %1605 = vmatprep.subr.mxu0 %v208
  %1606 = vmatpush1.msra.mxu0 %v207
  %1607 = vmatprep.subr.mxu0 %v204
  %1608 = vmatpush1.msra.mxu0 %v203
  %1609 = vmatprep.subr.mxu0 %v200
  %1610 = vmatpush1.msra.mxu0 %v199
  %1611 = vmatprep.subr.mxu0 %v196
  %1612 = vmatpush1.msra.mxu0 %v195
  %1613 = vmatprep.subr.mxu0 %v192
  %1614 = vmatpush1.msra.mxu0 %v191
  %1615 = vmatprep.subr.mxu0 %v188
  %1616 = vmatpush1.msra.mxu0 %v187
  %1617 = vmatprep.subr.mxu0 %v184
  %1618 = vmatpush1.msra.mxu0 %v183
  %1619 = vmatprep.subr.mxu0 %v180
  %1620 = vmatpush1.msra.mxu0 %v179
  %1621 = vmatprep.subr.mxu0 %v176
  %1622 = vmatpush1.msra.mxu0 %v175
  %1623 = vmatprep.subr.mxu0 %v172
  %1624 = vmatpush1.msra.mxu0 %v171
  %1625 = vmatprep.subr.mxu0 %v168
  %1626 = vmatpush1.msra.mxu0 %v167
  %1627 = vmatprep.subr.mxu0 %v164
  %1628 = vmatpush1.msra.mxu0 %v163
  %1629 = vmatprep.subr.mxu0 %v160
  %1630 = vmatpush1.msra.mxu0 %v159
  %1631 = vmatprep.subr.mxu0 %v156
  %1632 = vmatpush1.msra.mxu0 %v155
  %1633 = vmatprep.subr.mxu0 0.0
  %1634 = vmatpush2.msra.mxu0 0.0
  %1635 = vmatprep.subr.mxu0 0.0
  %1636 = vmatpush2.msra.mxu0 0.0
  %1637 = vmatprep.subr.mxu0 0.0
  %1638 = vmatpush2.msra.mxu0 0.0
  %1639 = vmatprep.subr.mxu0 0.0
  %1640 = vmatpush2.msra.mxu0 0.0
  %1641 = vmatprep.subr.mxu0 0.0
  %1642 = vmatpush2.msra.mxu0 0.0
  %1643 = vmatprep.subr.mxu0 0.0
  %1644 = vmatpush2.msra.mxu0 0.0
  %1645 = vmatprep.subr.mxu0 0.0
  %1646 = vmatpush2.msra.mxu0 0.0
  %1647 = vmatprep.subr.mxu0 0.0
  %1648 = vmatpush2.msra.mxu0 0.0
  %1649 = vmatprep.subr.mxu0 0.0
  %1650 = vmatpush2.msra.mxu0 0.0
  %1651 = vmatprep.subr.mxu0 0.0
  %1652 = vmatpush2.msra.mxu0 0.0
  %1653 = vmatprep.subr.mxu0 0.0
  %1654 = vmatpush2.msra.mxu0 0.0
  %1655 = vmatprep.subr.mxu0 0.0
  %1656 = vmatpush2.msra.mxu0 0.0
  %1657 = vmatprep.subr.mxu0 0.0
  %1658 = vmatpush2.msra.mxu0 0.0
  %1659 = vmatprep.subr.mxu0 0.0
  %1660 = vmatpush2.msra.mxu0 0.0
  %1661 = vmatprep.subr.mxu0 0.0
  %1662 = vmatpush2.msra.mxu0 0.0
  %1663 = vmatprep.subr.mxu0 0.0
  %1664 = vmatpush2.msra.mxu0 0.0
  %1665 = vmatprep.mubr.f32.mxu0 0.0
  %1666 = vmatmul.mubr.f32.gmra.mxu0 %v1347
  %v1667 = vpop.f32.mrf.mxu0
  %v1668 = vadd.f32 0.0, %v1667
  %v1669 = vpop.f32.mrf.mxu0
  %v1670 = vadd.f32 0.0, %v1669
  %1671 = vdwg.mxu0
  %v1672 = vadd.f32 %v659, %v1597
  %v1673 = vadd.f32 %v663, %v1599
  %v1674 = vadd.f32 %v667, %v1668
  %v1675 = vadd.f32 %v671, %v1670
  %1676 = vmatprep.subr.mxu0 %v150
  %1677 = vmatpush1.msra.mxu0 %v149
  %1678 = vmatprep.subr.mxu0 %v146
  %1679 = vmatpush1.msra.mxu0 %v145
  %1680 = vmatprep.subr.mxu0 %v142
  %1681 = vmatpush1.msra.mxu0 %v141
  %1682 = vmatprep.subr.mxu0 %v138
  %1683 = vmatpush1.msra.mxu0 %v137
  %1684 = vmatprep.subr.mxu0 %v134
  %1685 = vmatpush1.msra.mxu0 %v133
  %1686 = vmatprep.subr.mxu0 %v130
  %1687 = vmatpush1.msra.mxu0 %v129
  %1688 = vmatprep.subr.mxu0 %v126
  %1689 = vmatpush1.msra.mxu0 %v125
  %1690 = vmatprep.subr.mxu0 %v122
  %1691 = vmatpush1.msra.mxu0 %v121
  %1692 = vmatprep.subr.mxu0 %v118
  %1693 = vmatpush1.msra.mxu0 %v117
  %1694 = vmatprep.subr.mxu0 %v114
  %1695 = vmatpush1.msra.mxu0 %v113
  %1696 = vmatprep.subr.mxu0 %v110
  %1697 = vmatpush1.msra.mxu0 %v109
  %1698 = vmatprep.subr.mxu0 %v106
  %1699 = vmatpush1.msra.mxu0 %v105
  %1700 = vmatprep.subr.mxu0 %v102
  %1701 = vmatpush1.msra.mxu0 %v101
  %1702 = vmatprep.subr.mxu0 %v98
  %1703 = vmatpush1.msra.mxu0 %v97
  %1704 = vmatprep.subr.mxu0 %v94
  %1705 = vmatpush1.msra.mxu0 %v93
  %1706 = vmatprep.subr.mxu0 %v90
  %1707 = vmatpush1.msra.mxu0 %v89
  %1708 = vmatprep.subr.mxu0 0.0
  %1709 = vmatpush2.msra.mxu0 0.0
  %1710 = vmatprep.subr.mxu0 0.0
  %1711 = vmatpush2.msra.mxu0 0.0
  %1712 = vmatprep.subr.mxu0 0.0
  %1713 = vmatpush2.msra.mxu0 0.0
  %1714 = vmatprep.subr.mxu0 0.0
  %1715 = vmatpush2.msra.mxu0 0.0
  %1716 = vmatprep.subr.mxu0 0.0
  %1717 = vmatpush2.msra.mxu0 0.0
  %1718 = vmatprep.subr.mxu0 0.0
  %1719 = vmatpush2.msra.mxu0 0.0
  %1720 = vmatprep.subr.mxu0 0.0
  %1721 = vmatpush2.msra.mxu0 0.0
  %1722 = vmatprep.subr.mxu0 0.0
  %1723 = vmatpush2.msra.mxu0 0.0
  %1724 = vmatprep.subr.mxu0 0.0
  %1725 = vmatpush2.msra.mxu0 0.0
  %1726 = vmatprep.subr.mxu0 0.0
  %1727 = vmatpush2.msra.mxu0 0.0
  %1728 = vmatprep.subr.mxu0 0.0
  %1729 = vmatpush2.msra.mxu0 0.0
  %1730 = vmatprep.subr.mxu0 0.0
  %1731 = vmatpush2.msra.mxu0 0.0
  %1732 = vmatprep.subr.mxu0 0.0
  %1733 = vmatpush2.msra.mxu0 0.0
  %1734 = vmatprep.subr.mxu0 0.0
  %1735 = vmatpush2.msra.mxu0 0.0
  %1736 = vmatprep.subr.mxu0 0.0
  %1737 = vmatpush2.msra.mxu0 0.0
  %1738 = vmatprep.subr.mxu0 0.0
  %1739 = vmatpush2.msra.mxu0 0.0
  %1740 = vmatprep.mubr.f32.mxu0 0.0
  %1741 = vmatmul.mubr.f32.gmra.mxu0 %v1529
  %v1742 = vpop.f32.mrf.mxu0
  %v1743 = vadd.f32 0.0, %v1742
  %v1744 = vpop.f32.mrf.mxu0
  %v1745 = vadd.f32 0.0, %v1744
  %1746 = vdwg.mxu0
  %1747 = vmatprep.subr.mxu0 %v152
  %1748 = vmatpush1.msra.mxu0 %v151
  %1749 = vmatprep.subr.mxu0 %v148
  %1750 = vmatpush1.msra.mxu0 %v147
  %1751 = vmatprep.subr.mxu0 %v144
  %1752 = vmatpush1.msra.mxu0 %v143
  %1753 = vmatprep.subr.mxu0 %v140
  %1754 = vmatpush1.msra.mxu0 %v139
  %1755 = vmatprep.subr.mxu0 %v136
  %1756 = vmatpush1.msra.mxu0 %v135
  %1757 = vmatprep.subr.mxu0 %v132
  %1758 = vmatpush1.msra.mxu0 %v131
  %1759 = vmatprep.subr.mxu0 %v128
  %1760 = vmatpush1.msra.mxu0 %v127
  %1761 = vmatprep.subr.mxu0 %v124
  %1762 = vmatpush1.msra.mxu0 %v123
  %1763 = vmatprep.subr.mxu0 %v120
  %1764 = vmatpush1.msra.mxu0 %v119
  %1765 = vmatprep.subr.mxu0 %v116
  %1766 = vmatpush1.msra.mxu0 %v115
  %1767 = vmatprep.subr.mxu0 %v112
  %1768 = vmatpush1.msra.mxu0 %v111
  %1769 = vmatprep.subr.mxu0 %v108
  %1770 = vmatpush1.msra.mxu0 %v107
  %1771 = vmatprep.subr.mxu0 %v104
  %1772 = vmatpush1.msra.mxu0 %v103
  %1773 = vmatprep.subr.mxu0 %v100
  %1774 = vmatpush1.msra.mxu0 %v99
  %1775 = vmatprep.subr.mxu0 %v96
  %1776 = vmatpush1.msra.mxu0 %v95
  %1777 = vmatprep.subr.mxu0 %v92
  %1778 = vmatpush1.msra.mxu0 %v91
  %1779 = vmatprep.subr.mxu0 0.0
  %1780 = vmatpush2.msra.mxu0 0.0
  %1781 = vmatprep.subr.mxu0 0.0
  %1782 = vmatpush2.msra.mxu0 0.0
  %1783 = vmatprep.subr.mxu0 0.0
  %1784 = vmatpush2.msra.mxu0 0.0
  %1785 = vmatprep.subr.mxu0 0.0
  %1786 = vmatpush2.msra.mxu0 0.0
  %1787 = vmatprep.subr.mxu0 0.0
  %1788 = vmatpush2.msra.mxu0 0.0
  %1789 = vmatprep.subr.mxu0 0.0
  %1790 = vmatpush2.msra.mxu0 0.0
  %1791 = vmatprep.subr.mxu0 0.0
  %1792 = vmatpush2.msra.mxu0 0.0
  %1793 = vmatprep.subr.mxu0 0.0
  %1794 = vmatpush2.msra.mxu0 0.0
  %1795 = vmatprep.subr.mxu0 0.0
  %1796 = vmatpush2.msra.mxu0 0.0
  %1797 = vmatprep.subr.mxu0 0.0
  %1798 = vmatpush2.msra.mxu0 0.0
  %1799 = vmatprep.subr.mxu0 0.0
  %1800 = vmatpush2.msra.mxu0 0.0
  %1801 = vmatprep.subr.mxu0 0.0
  %1802 = vmatpush2.msra.mxu0 0.0
  %1803 = vmatprep.subr.mxu0 0.0
  %1804 = vmatpush2.msra.mxu0 0.0
  %1805 = vmatprep.subr.mxu0 0.0
  %1806 = vmatpush2.msra.mxu0 0.0
  %1807 = vmatprep.subr.mxu0 0.0
  %1808 = vmatpush2.msra.mxu0 0.0
  %1809 = vmatprep.subr.mxu0 0.0
  %1810 = vmatpush2.msra.mxu0 0.0
  %1811 = vmatprep.mubr.f32.mxu0 0.0
  %1812 = vmatmul.mubr.f32.gmra.mxu0 %v1529
  %v1813 = vpop.f32.mrf.mxu0
  %v1814 = vadd.f32 0.0, %v1813
  %v1815 = vpop.f32.mrf.mxu0
  %v1816 = vadd.f32 0.0, %v1815
  %1817 = vdwg.mxu0
  %v1818 = vadd.f32 %v1672, %v1743
  %v1819 = vadd.f32 %v1673, %v1745
  %v1820 = vadd.f32 %v1674, %v1814
  %v1821 = vadd.f32 %v1675, %v1816
  %v1822 = vxor.u32 %v1818, 2147483648
  %v1823 = vmul.f32 %v1822, 1.442695
  %v1824 = vpow.pop %v1823
  %v1825 = vadd.f32 %v1824, 1.0
  %v1826 = vrcp.pop %v1825
  %v1827 = vmul.f32 1.0, %v1826
  %v1828 = vxor.u32 %v1819, 2147483648
  %v1829 = vmul.f32 %v1828, 1.442695
  %v1830 = vpow.pop %v1829
  %v1831 = vadd.f32 %v1830, 1.0
  %v1832 = vrcp.pop %v1831
  %v1833 = vmul.f32 1.0, %v1832
  %v1834 = vtanh.pop %v1820
  %v1835 = vxor.u32 %v1821, 2147483648
  %v1836 = vmul.f32 %v1835, 1.442695
  %v1837 = vpow.pop %v1836
  %v1838 = vadd.f32 %v1837, 1.0
  %v1839 = vrcp.pop %v1838
  %v1840 = vmul.f32 1.0, %v1839
  %v1841 = vmul.f32 %v1833, %v1345
  %v1842 = vmul.f32 %v1827, %v1834
  %v1843 = vadd.f32 %v1841, %v1842
  %v1844 = vtanh.pop %v1843
  %v1845 = vmul.f32 %v1840, %v1844
  %1846 = vset.pattern.permute.xlu0 3
  %1847 = vperm.xlu0 %1846, %v286
  %v1848 = vpop.permute.xlu0 %1847
  %v1850 = vmul.f32 %v1848, %v297
  %v1851 = vmul.f32 %v1848, %v301
  %v1852 = vmul.f32 %v1848, %v305
  %v1853 = vmul.f32 %v1848, %v309
  %v1854 = vadd.f32 %v322, %v1850
  %v1855 = vadd.f32 %v326, %v1851
  %v1856 = vadd.f32 %v330, %v1852
  %v1857 = vadd.f32 %v334, %v1853
  %1858 = vmatprep.subr.mxu0 %v86
  %1859 = vmatpush1.msra.mxu0 %v85
  %1860 = vmatprep.subr.mxu0 %v82
  %1861 = vmatpush1.msra.mxu0 %v81
  %1862 = vmatprep.subr.mxu0 %v78
  %1863 = vmatpush1.msra.mxu0 %v77
  %1864 = vmatprep.subr.mxu0 %v74
  %1865 = vmatpush1.msra.mxu0 %v73
  %1866 = vmatprep.subr.mxu0 %v70
  %1867 = vmatpush1.msra.mxu0 %v69
  %1868 = vmatprep.subr.mxu0 %v66
  %1869 = vmatpush1.msra.mxu0 %v65
  %1870 = vmatprep.subr.mxu0 %v62
  %1871 = vmatpush1.msra.mxu0 %v61
  %1872 = vmatprep.subr.mxu0 %v58
  %1873 = vmatpush1.msra.mxu0 %v57
  %1874 = vmatprep.subr.mxu0 %v54
  %1875 = vmatpush1.msra.mxu0 %v53
  %1876 = vmatprep.subr.mxu0 %v50
  %1877 = vmatpush1.msra.mxu0 %v49
  %1878 = vmatprep.subr.mxu0 %v46
  %1879 = vmatpush1.msra.mxu0 %v45
  %1880 = vmatprep.subr.mxu0 %v42
  %1881 = vmatpush1.msra.mxu0 %v41
  %1882 = vmatprep.subr.mxu0 %v38
  %1883 = vmatpush1.msra.mxu0 %v37
  %1884 = vmatprep.subr.mxu0 %v34
  %1885 = vmatpush1.msra.mxu0 %v33
  %1886 = vmatprep.subr.mxu0 %v30
  %1887 = vmatpush1.msra.mxu0 %v29
  %1888 = vmatprep.subr.mxu0 %v26
  %1889 = vmatpush1.msra.mxu0 %v25
  %1890 = vmatprep.subr.mxu0 0.0
  %1891 = vmatpush2.msra.mxu0 0.0
  %1892 = vmatprep.subr.mxu0 0.0
  %1893 = vmatpush2.msra.mxu0 0.0
  %1894 = vmatprep.subr.mxu0 0.0
  %1895 = vmatpush2.msra.mxu0 0.0
  %1896 = vmatprep.subr.mxu0 0.0
  %1897 = vmatpush2.msra.mxu0 0.0
  %1898 = vmatprep.subr.mxu0 0.0
  %1899 = vmatpush2.msra.mxu0 0.0
  %1900 = vmatprep.subr.mxu0 0.0
  %1901 = vmatpush2.msra.mxu0 0.0
  %1902 = vmatprep.subr.mxu0 0.0
  %1903 = vmatpush2.msra.mxu0 0.0
  %1904 = vmatprep.subr.mxu0 0.0
  %1905 = vmatpush2.msra.mxu0 0.0
  %1906 = vmatprep.subr.mxu0 0.0
  %1907 = vmatpush2.msra.mxu0 0.0
  %1908 = vmatprep.subr.mxu0 0.0
  %1909 = vmatpush2.msra.mxu0 0.0
  %1910 = vmatprep.subr.mxu0 0.0
  %1911 = vmatpush2.msra.mxu0 0.0
  %1912 = vmatprep.subr.mxu0 0.0
  %1913 = vmatpush2.msra.mxu0 0.0
  %1914 = vmatprep.subr.mxu0 0.0
  %1915 = vmatpush2.msra.mxu0 0.0
  %1916 = vmatprep.subr.mxu0 0.0
  %1917 = vmatpush2.msra.mxu0 0.0
  %1918 = vmatprep.subr.mxu0 0.0
  %1919 = vmatpush2.msra.mxu0 0.0
  %1920 = vmatprep.subr.mxu0 0.0
  %1921 = vmatpush2.msra.mxu0 0.0
  %1922 = vmatprep.mubr.f32.mxu0 0.0
  %1923 = vmatmul.mubr.f32.gmra.mxu0 %v1529
  %v1924 = vpop.f32.mrf.mxu0
  %v1925 = vadd.f32 0.0, %v1924
  %v1926 = vpop.f32.mrf.mxu0
  %v1927 = vadd.f32 0.0, %v1926
  %1928 = vdwg.mxu0
  %1929 = vmatprep.subr.mxu0 %v88
  %1930 = vmatpush1.msra.mxu0 %v87
  %1931 = vmatprep.subr.mxu0 %v84
  %1932 = vmatpush1.msra.mxu0 %v83
  %1933 = vmatprep.subr.mxu0 %v80
  %1934 = vmatpush1.msra.mxu0 %v79
  %1935 = vmatprep.subr.mxu0 %v76
  %1936 = vmatpush1.msra.mxu0 %v75
  %1937 = vmatprep.subr.mxu0 %v72
  %1938 = vmatpush1.msra.mxu0 %v71
  %1939 = vmatprep.subr.mxu0 %v68
  %1940 = vmatpush1.msra.mxu0 %v67
  %1941 = vmatprep.subr.mxu0 %v64
  %1942 = vmatpush1.msra.mxu0 %v63
  %1943 = vmatprep.subr.mxu0 %v60
  %1944 = vmatpush1.msra.mxu0 %v59
  %1945 = vmatprep.subr.mxu0 %v56
  %1946 = vmatpush1.msra.mxu0 %v55
  %1947 = vmatprep.subr.mxu0 %v52
  %1948 = vmatpush1.msra.mxu0 %v51
  %1949 = vmatprep.subr.mxu0 %v48
  %1950 = vmatpush1.msra.mxu0 %v47
  %1951 = vmatprep.subr.mxu0 %v44
  %1952 = vmatpush1.msra.mxu0 %v43
  %1953 = vmatprep.subr.mxu0 %v40
  %1954 = vmatpush1.msra.mxu0 %v39
  %1955 = vmatprep.subr.mxu0 %v36
  %1956 = vmatpush1.msra.mxu0 %v35
  %1957 = vmatprep.subr.mxu0 %v32
  %1958 = vmatpush1.msra.mxu0 %v31
  %1959 = vmatprep.subr.mxu0 %v28
  %1960 = vmatpush1.msra.mxu0 %v27
  %1961 = vmatprep.subr.mxu0 0.0
  %1962 = vmatpush2.msra.mxu0 0.0
  %1963 = vmatprep.subr.mxu0 0.0
  %1964 = vmatpush2.msra.mxu0 0.0
  %1965 = vmatprep.subr.mxu0 0.0
  %1966 = vmatpush2.msra.mxu0 0.0
  %1967 = vmatprep.subr.mxu0 0.0
  %1968 = vmatpush2.msra.mxu0 0.0
  %1969 = vmatprep.subr.mxu0 0.0
  %1970 = vmatpush2.msra.mxu0 0.0
  %1971 = vmatprep.subr.mxu0 0.0
  %1972 = vmatpush2.msra.mxu0 0.0
  %1973 = vmatprep.subr.mxu0 0.0
  %1974 = vmatpush2.msra.mxu0 0.0
  %1975 = vmatprep.subr.mxu0 0.0
  %1976 = vmatpush2.msra.mxu0 0.0
  %1977 = vmatprep.subr.mxu0 0.0
  %1978 = vmatpush2.msra.mxu0 0.0
  %1979 = vmatprep.subr.mxu0 0.0
  %1980 = vmatpush2.msra.mxu0 0.0
  %1981 = vmatprep.subr.mxu0 0.0
  %1982 = vmatpush2.msra.mxu0 0.0
  %1983 = vmatprep.subr.mxu0 0.0
  %1984 = vmatpush2.msra.mxu0 0.0
  %1985 = vmatprep.subr.mxu0 0.0
  %1986 = vmatpush2.msra.mxu0 0.0
  %1987 = vmatprep.subr.mxu0 0.0
  %1988 = vmatpush2.msra.mxu0 0.0
  %1989 = vmatprep.subr.mxu0 0.0
  %1990 = vmatpush2.msra.mxu0 0.0
  %1991 = vmatprep.subr.mxu0 0.0
  %1992 = vmatpush2.msra.mxu0 0.0
  %1993 = vmatprep.mubr.f32.mxu0 0.0
  %1994 = vmatmul.mubr.f32.gmra.mxu0 %v1529
  %v1995 = vpop.f32.mrf.mxu0
  %v1996 = vadd.f32 0.0, %v1995
  %v1997 = vpop.f32.mrf.mxu0
  %v1998 = vadd.f32 0.0, %v1997
  %1999 = vdwg.mxu0
  %v2000 = vadd.f32 %v1854, %v1925
  %v2001 = vadd.f32 %v1855, %v1927
  %v2002 = vadd.f32 %v1856, %v1996
  %v2003 = vadd.f32 %v1857, %v1998
  %v2004 = vxor.u32 %v2000, 2147483648
  %v2005 = vmul.f32 %v2004, 1.442695
  %v2006 = vpow.pop %v2005
  %v2007 = vadd.f32 %v2006, 1.0
  %v2008 = vrcp.pop %v2007
  %v2009 = vmul.f32 1.0, %v2008
  %v2010 = vxor.u32 %v2001, 2147483648
  %v2011 = vmul.f32 %v2010, 1.442695
  %v2012 = vpow.pop %v2011
  %v2013 = vadd.f32 %v2012, 1.0
  %v2014 = vrcp.pop %v2013
  %v2015 = vmul.f32 1.0, %v2014
  %v2016 = vtanh.pop %v2002
  %v2017 = vxor.u32 %v2003, 2147483648
  %v2018 = vmul.f32 %v2017, 1.442695
  %v2019 = vpow.pop %v2018
  %v2020 = vadd.f32 %v2019, 1.0
  %v2021 = vrcp.pop %v2020
  %v2022 = vmul.f32 1.0, %v2021
  %v2023 = vmul.f32 %v2015, %v1527
  %v2024 = vmul.f32 %v2009, %v2016
  %v2025 = vadd.f32 %v2023, %v2024
  %v2026 = vtanh.pop %v2025
  %v2027 = vmul.f32 %v2022, %v2026
  %2028 = vmatprep.subr.mxu0 %v214
  %2029 = vmatpush1.msra.mxu0 %v213
  %2030 = vmatprep.subr.mxu0 %v210
  %2031 = vmatpush1.msra.mxu0 %v209
  %2032 = vmatprep.subr.mxu0 %v206
  %2033 = vmatpush1.msra.mxu0 %v205
  %2034 = vmatprep.subr.mxu0 %v202
  %2035 = vmatpush1.msra.mxu0 %v201
  %2036 = vmatprep.subr.mxu0 %v198
  %2037 = vmatpush1.msra.mxu0 %v197
  %2038 = vmatprep.subr.mxu0 %v194
  %2039 = vmatpush1.msra.mxu0 %v193
  %2040 = vmatprep.subr.mxu0 %v190
  %2041 = vmatpush1.msra.mxu0 %v189
  %2042 = vmatprep.subr.mxu0 %v186
  %2043 = vmatpush1.msra.mxu0 %v185
  %2044 = vmatprep.subr.mxu0 %v182
  %2045 = vmatpush1.msra.mxu0 %v181
  %2046 = vmatprep.subr.mxu0 %v178
  %2047 = vmatpush1.msra.mxu0 %v177
  %2048 = vmatprep.subr.mxu0 %v174
  %2049 = vmatpush1.msra.mxu0 %v173
  %2050 = vmatprep.subr.mxu0 %v170
  %2051 = vmatpush1.msra.mxu0 %v169
  %2052 = vmatprep.subr.mxu0 %v166
  %2053 = vmatpush1.msra.mxu0 %v165
  %2054 = vmatprep.subr.mxu0 %v162
  %2055 = vmatpush1.msra.mxu0 %v161
  %2056 = vmatprep.subr.mxu0 %v158
  %2057 = vmatpush1.msra.mxu0 %v157
  %2058 = vmatprep.subr.mxu0 %v154
  %2059 = vmatpush1.msra.mxu0 %v153
  %2060 = vmatprep.subr.mxu0 0.0
  %2061 = vmatpush2.msra.mxu0 0.0
  %2062 = vmatprep.subr.mxu0 0.0
  %2063 = vmatpush2.msra.mxu0 0.0
  %2064 = vmatprep.subr.mxu0 0.0
  %2065 = vmatpush2.msra.mxu0 0.0
  %2066 = vmatprep.subr.mxu0 0.0
  %2067 = vmatpush2.msra.mxu0 0.0
  %2068 = vmatprep.subr.mxu0 0.0
  %2069 = vmatpush2.msra.mxu0 0.0
  %2070 = vmatprep.subr.mxu0 0.0
  %2071 = vmatpush2.msra.mxu0 0.0
  %2072 = vmatprep.subr.mxu0 0.0
  %2073 = vmatpush2.msra.mxu0 0.0
  %2074 = vmatprep.subr.mxu0 0.0
  %2075 = vmatpush2.msra.mxu0 0.0
  %2076 = vmatprep.subr.mxu0 0.0
  %2077 = vmatpush2.msra.mxu0 0.0
  %2078 = vmatprep.subr.mxu0 0.0
  %2079 = vmatpush2.msra.mxu0 0.0
  %2080 = vmatprep.subr.mxu0 0.0
  %2081 = vmatpush2.msra.mxu0 0.0
  %2082 = vmatprep.subr.mxu0 0.0
  %2083 = vmatpush2.msra.mxu0 0.0
  %2084 = vmatprep.subr.mxu0 0.0
  %2085 = vmatpush2.msra.mxu0 0.0
  %2086 = vmatprep.subr.mxu0 0.0
  %2087 = vmatpush2.msra.mxu0 0.0
  %2088 = vmatprep.subr.mxu0 0.0
  %2089 = vmatpush2.msra.mxu0 0.0
  %2090 = vmatprep.subr.mxu0 0.0
  %2091 = vmatpush2.msra.mxu0 0.0
  %2092 = vmatprep.mubr.f32.mxu0 0.0
  %2093 = vmatmul.mubr.f32.gmra.mxu0 %v1845
  %v2094 = vpop.f32.mrf.mxu0
  %v2095 = vadd.f32 0.0, %v2094
  %v2096 = vpop.f32.mrf.mxu0
  %v2097 = vadd.f32 0.0, %v2096
  %2098 = vdwg.mxu0
  %2099 = vmatprep.subr.mxu0 %v216
  %2100 = vmatpush1.msra.mxu0 %v215
  %2101 = vmatprep.subr.mxu0 %v212
  %2102 = vmatpush1.msra.mxu0 %v211
  %2103 = vmatprep.subr.mxu0 %v208
  %2104 = vmatpush1.msra.mxu0 %v207
  %2105 = vmatprep.subr.mxu0 %v204
  %2106 = vmatpush1.msra.mxu0 %v203
  %2107 = vmatprep.subr.mxu0 %v200
  %2108 = vmatpush1.msra.mxu0 %v199
  %2109 = vmatprep.subr.mxu0 %v196
  %2110 = vmatpush1.msra.mxu0 %v195
  %2111 = vmatprep.subr.mxu0 %v192
  %2112 = vmatpush1.msra.mxu0 %v191
  %2113 = vmatprep.subr.mxu0 %v188
  %2114 = vmatpush1.msra.mxu0 %v187
  %2115 = vmatprep.subr.mxu0 %v184
  %2116 = vmatpush1.msra.mxu0 %v183
  %2117 = vmatprep.subr.mxu0 %v180
  %2118 = vmatpush1.msra.mxu0 %v179
  %2119 = vmatprep.subr.mxu0 %v176
  %2120 = vmatpush1.msra.mxu0 %v175
  %2121 = vmatprep.subr.mxu0 %v172
  %2122 = vmatpush1.msra.mxu0 %v171
  %2123 = vmatprep.subr.mxu0 %v168
  %2124 = vmatpush1.msra.mxu0 %v167
  %2125 = vmatprep.subr.mxu0 %v164
  %2126 = vmatpush1.msra.mxu0 %v163
  %2127 = vmatprep.subr.mxu0 %v160
  %2128 = vmatpush1.msra.mxu0 %v159
  %2129 = vmatprep.subr.mxu0 %v156
  %2130 = vmatpush1.msra.mxu0 %v155
  %2131 = vmatprep.subr.mxu0 0.0
  %2132 = vmatpush2.msra.mxu0 0.0
  %2133 = vmatprep.subr.mxu0 0.0
  %2134 = vmatpush2.msra.mxu0 0.0
  %2135 = vmatprep.subr.mxu0 0.0
  %2136 = vmatpush2.msra.mxu0 0.0
  %2137 = vmatprep.subr.mxu0 0.0
  %2138 = vmatpush2.msra.mxu0 0.0
  %2139 = vmatprep.subr.mxu0 0.0
  %2140 = vmatpush2.msra.mxu0 0.0
  %2141 = vmatprep.subr.mxu0 0.0
  %2142 = vmatpush2.msra.mxu0 0.0
  %2143 = vmatprep.subr.mxu0 0.0
  %2144 = vmatpush2.msra.mxu0 0.0
  %2145 = vmatprep.subr.mxu0 0.0
  %2146 = vmatpush2.msra.mxu0 0.0
  %2147 = vmatprep.subr.mxu0 0.0
  %2148 = vmatpush2.msra.mxu0 0.0
  %2149 = vmatprep.subr.mxu0 0.0
  %2150 = vmatpush2.msra.mxu0 0.0
  %2151 = vmatprep.subr.mxu0 0.0
  %2152 = vmatpush2.msra.mxu0 0.0
  %2153 = vmatprep.subr.mxu0 0.0
  %2154 = vmatpush2.msra.mxu0 0.0
  %2155 = vmatprep.subr.mxu0 0.0
  %2156 = vmatpush2.msra.mxu0 0.0
  %2157 = vmatprep.subr.mxu0 0.0
  %2158 = vmatpush2.msra.mxu0 0.0
  %2159 = vmatprep.subr.mxu0 0.0
  %2160 = vmatpush2.msra.mxu0 0.0
  %2161 = vmatprep.subr.mxu0 0.0
  %2162 = vmatpush2.msra.mxu0 0.0
  %2163 = vmatprep.mubr.f32.mxu0 0.0
  %2164 = vmatmul.mubr.f32.gmra.mxu0 %v1845
  %v2165 = vpop.f32.mrf.mxu0
  %v2166 = vadd.f32 0.0, %v2165
  %v2167 = vpop.f32.mrf.mxu0
  %v2168 = vadd.f32 0.0, %v2167
  %2169 = vdwg.mxu0
  %v2170 = vadd.f32 %v659, %v2095
  %v2171 = vadd.f32 %v663, %v2097
  %v2172 = vadd.f32 %v667, %v2166
  %v2173 = vadd.f32 %v671, %v2168
  %2174 = vmatprep.subr.mxu0 %v150
  %2175 = vmatpush1.msra.mxu0 %v149
  %2176 = vmatprep.subr.mxu0 %v146
  %2177 = vmatpush1.msra.mxu0 %v145
  %2178 = vmatprep.subr.mxu0 %v142
  %2179 = vmatpush1.msra.mxu0 %v141
  %2180 = vmatprep.subr.mxu0 %v138
  %2181 = vmatpush1.msra.mxu0 %v137
  %2182 = vmatprep.subr.mxu0 %v134
  %2183 = vmatpush1.msra.mxu0 %v133
  %2184 = vmatprep.subr.mxu0 %v130
  %2185 = vmatpush1.msra.mxu0 %v129
  %2186 = vmatprep.subr.mxu0 %v126
  %2187 = vmatpush1.msra.mxu0 %v125
  %2188 = vmatprep.subr.mxu0 %v122
  %2189 = vmatpush1.msra.mxu0 %v121
  %2190 = vmatprep.subr.mxu0 %v118
  %2191 = vmatpush1.msra.mxu0 %v117
  %2192 = vmatprep.subr.mxu0 %v114
  %2193 = vmatpush1.msra.mxu0 %v113
  %2194 = vmatprep.subr.mxu0 %v110
  %2195 = vmatpush1.msra.mxu0 %v109
  %2196 = vmatprep.subr.mxu0 %v106
  %2197 = vmatpush1.msra.mxu0 %v105
  %2198 = vmatprep.subr.mxu0 %v102
  %2199 = vmatpush1.msra.mxu0 %v101
  %2200 = vmatprep.subr.mxu0 %v98
  %2201 = vmatpush1.msra.mxu0 %v97
  %2202 = vmatprep.subr.mxu0 %v94
  %2203 = vmatpush1.msra.mxu0 %v93
  %2204 = vmatprep.subr.mxu0 %v90
  %2205 = vmatpush1.msra.mxu0 %v89
  %2206 = vmatprep.subr.mxu0 0.0
  %2207 = vmatpush2.msra.mxu0 0.0
  %2208 = vmatprep.subr.mxu0 0.0
  %2209 = vmatpush2.msra.mxu0 0.0
  %2210 = vmatprep.subr.mxu0 0.0
  %2211 = vmatpush2.msra.mxu0 0.0
  %2212 = vmatprep.subr.mxu0 0.0
  %2213 = vmatpush2.msra.mxu0 0.0
  %2214 = vmatprep.subr.mxu0 0.0
  %2215 = vmatpush2.msra.mxu0 0.0
  %2216 = vmatprep.subr.mxu0 0.0
  %2217 = vmatpush2.msra.mxu0 0.0
  %2218 = vmatprep.subr.mxu0 0.0
  %2219 = vmatpush2.msra.mxu0 0.0
  %2220 = vmatprep.subr.mxu0 0.0
  %2221 = vmatpush2.msra.mxu0 0.0
  %2222 = vmatprep.subr.mxu0 0.0
  %2223 = vmatpush2.msra.mxu0 0.0
  %2224 = vmatprep.subr.mxu0 0.0
  %2225 = vmatpush2.msra.mxu0 0.0
  %2226 = vmatprep.subr.mxu0 0.0
  %2227 = vmatpush2.msra.mxu0 0.0
  %2228 = vmatprep.subr.mxu0 0.0
  %2229 = vmatpush2.msra.mxu0 0.0
  %2230 = vmatprep.subr.mxu0 0.0
  %2231 = vmatpush2.msra.mxu0 0.0
  %2232 = vmatprep.subr.mxu0 0.0
  %2233 = vmatpush2.msra.mxu0 0.0
  %2234 = vmatprep.subr.mxu0 0.0
  %2235 = vmatpush2.msra.mxu0 0.0
  %2236 = vmatprep.subr.mxu0 0.0
  %2237 = vmatpush2.msra.mxu0 0.0
  %2238 = vmatprep.mubr.f32.mxu0 0.0
  %2239 = vmatmul.mubr.f32.gmra.mxu0 %v2027
  %v2240 = vpop.f32.mrf.mxu0
  %v2241 = vadd.f32 0.0, %v2240
  %v2242 = vpop.f32.mrf.mxu0
  %v2243 = vadd.f32 0.0, %v2242
  %2244 = vdwg.mxu0
  %2245 = vmatprep.subr.mxu0 %v152
  %2246 = vmatpush1.msra.mxu0 %v151
  %2247 = vmatprep.subr.mxu0 %v148
  %2248 = vmatpush1.msra.mxu0 %v147
  %2249 = vmatprep.subr.mxu0 %v144
  %2250 = vmatpush1.msra.mxu0 %v143
  %2251 = vmatprep.subr.mxu0 %v140
  %2252 = vmatpush1.msra.mxu0 %v139
  %2253 = vmatprep.subr.mxu0 %v136
  %2254 = vmatpush1.msra.mxu0 %v135
  %2255 = vmatprep.subr.mxu0 %v132
  %2256 = vmatpush1.msra.mxu0 %v131
  %2257 = vmatprep.subr.mxu0 %v128
  %2258 = vmatpush1.msra.mxu0 %v127
  %2259 = vmatprep.subr.mxu0 %v124
  %2260 = vmatpush1.msra.mxu0 %v123
  %2261 = vmatprep.subr.mxu0 %v120
  %2262 = vmatpush1.msra.mxu0 %v119
  %2263 = vmatprep.subr.mxu0 %v116
  %2264 = vmatpush1.msra.mxu0 %v115
  %2265 = vmatprep.subr.mxu0 %v112
  %2266 = vmatpush1.msra.mxu0 %v111
  %2267 = vmatprep.subr.mxu0 %v108
  %2268 = vmatpush1.msra.mxu0 %v107
  %2269 = vmatprep.subr.mxu0 %v104
  %2270 = vmatpush1.msra.mxu0 %v103
  %2271 = vmatprep.subr.mxu0 %v100
  %2272 = vmatpush1.msra.mxu0 %v99
  %2273 = vmatprep.subr.mxu0 %v96
  %2274 = vmatpush1.msra.mxu0 %v95
  %2275 = vmatprep.subr.mxu0 %v92
  %2276 = vmatpush1.msra.mxu0 %v91
  %2277 = vmatprep.subr.mxu0 0.0
  %2278 = vmatpush2.msra.mxu0 0.0
  %2279 = vmatprep.subr.mxu0 0.0
  %2280 = vmatpush2.msra.mxu0 0.0
  %2281 = vmatprep.subr.mxu0 0.0
  %2282 = vmatpush2.msra.mxu0 0.0
  %2283 = vmatprep.subr.mxu0 0.0
  %2284 = vmatpush2.msra.mxu0 0.0
  %2285 = vmatprep.subr.mxu0 0.0
  %2286 = vmatpush2.msra.mxu0 0.0
  %2287 = vmatprep.subr.mxu0 0.0
  %2288 = vmatpush2.msra.mxu0 0.0
  %2289 = vmatprep.subr.mxu0 0.0
  %2290 = vmatpush2.msra.mxu0 0.0
  %2291 = vmatprep.subr.mxu0 0.0
  %2292 = vmatpush2.msra.mxu0 0.0
  %2293 = vmatprep.subr.mxu0 0.0
  %2294 = vmatpush2.msra.mxu0 0.0
  %2295 = vmatprep.subr.mxu0 0.0
  %2296 = vmatpush2.msra.mxu0 0.0
  %2297 = vmatprep.subr.mxu0 0.0
  %2298 = vmatpush2.msra.mxu0 0.0
  %2299 = vmatprep.subr.mxu0 0.0
  %2300 = vmatpush2.msra.mxu0 0.0
  %2301 = vmatprep.subr.mxu0 0.0
  %2302 = vmatpush2.msra.mxu0 0.0
  %2303 = vmatprep.subr.mxu0 0.0
  %2304 = vmatpush2.msra.mxu0 0.0
  %2305 = vmatprep.subr.mxu0 0.0
  %2306 = vmatpush2.msra.mxu0 0.0
  %2307 = vmatprep.subr.mxu0 0.0
  %2308 = vmatpush2.msra.mxu0 0.0
  %2309 = vmatprep.mubr.f32.mxu0 0.0
  %2310 = vmatmul.mubr.f32.gmra.mxu0 %v2027
  %v2311 = vpop.f32.mrf.mxu0
  %v2312 = vadd.f32 0.0, %v2311
  %v2313 = vpop.f32.mrf.mxu0
  %v2314 = vadd.f32 0.0, %v2313
  %2315 = vdwg.mxu0
  %v2316 = vadd.f32 %v2170, %v2241
  %v2317 = vadd.f32 %v2171, %v2243
  %v2318 = vadd.f32 %v2172, %v2312
  %v2319 = vadd.f32 %v2173, %v2314
  %v2320 = vxor.u32 %v2316, 2147483648
  %v2321 = vmul.f32 %v2320, 1.442695
  %v2322 = vpow.pop %v2321
  %v2323 = vadd.f32 %v2322, 1.0
  %v2324 = vrcp.pop %v2323
  %v2325 = vmul.f32 1.0, %v2324
  %v2326 = vxor.u32 %v2317, 2147483648
  %v2327 = vmul.f32 %v2326, 1.442695
  %v2328 = vpow.pop %v2327
  %v2329 = vadd.f32 %v2328, 1.0
  %v2330 = vrcp.pop %v2329
  %v2331 = vmul.f32 1.0, %v2330
  %v2332 = vtanh.pop %v2318
  %v2333 = vxor.u32 %v2319, 2147483648
  %v2334 = vmul.f32 %v2333, 1.442695
  %v2335 = vpow.pop %v2334
  %v2336 = vadd.f32 %v2335, 1.0
  %v2337 = vrcp.pop %v2336
  %v2338 = vmul.f32 1.0, %v2337
  %v2339 = vmul.f32 %v2331, %v1843
  %v2340 = vmul.f32 %v2325, %v2332
  %v2341 = vadd.f32 %v2339, %v2340
  %v2342 = vtanh.pop %v2341
  %v2343 = vmul.f32 %v2338, %v2342
  %2344 = vset.pattern.permute.xlu0 4
  %2345 = vperm.xlu0 %2344, %v286
  %v2346 = vpop.permute.xlu0 %2345
  %v2348 = vmul.f32 %v2346, %v297
  %v2349 = vmul.f32 %v2346, %v301
  %v2350 = vmul.f32 %v2346, %v305
  %v2351 = vmul.f32 %v2346, %v309
  %v2352 = vadd.f32 %v322, %v2348
  %v2353 = vadd.f32 %v326, %v2349
  %v2354 = vadd.f32 %v330, %v2350
  %v2355 = vadd.f32 %v334, %v2351
  %2356 = vmatprep.subr.mxu0 %v86
  %2357 = vmatpush1.msra.mxu0 %v85
  %2358 = vmatprep.subr.mxu0 %v82
  %2359 = vmatpush1.msra.mxu0 %v81
  %2360 = vmatprep.subr.mxu0 %v78
  %2361 = vmatpush1.msra.mxu0 %v77
  %2362 = vmatprep.subr.mxu0 %v74
  %2363 = vmatpush1.msra.mxu0 %v73
  %2364 = vmatprep.subr.mxu0 %v70
  %2365 = vmatpush1.msra.mxu0 %v69
  %2366 = vmatprep.subr.mxu0 %v66
  %2367 = vmatpush1.msra.mxu0 %v65
  %2368 = vmatprep.subr.mxu0 %v62
  %2369 = vmatpush1.msra.mxu0 %v61
  %2370 = vmatprep.subr.mxu0 %v58
  %2371 = vmatpush1.msra.mxu0 %v57
  %2372 = vmatprep.subr.mxu0 %v54
  %2373 = vmatpush1.msra.mxu0 %v53
  %2374 = vmatprep.subr.mxu0 %v50
  %2375 = vmatpush1.msra.mxu0 %v49
  %2376 = vmatprep.subr.mxu0 %v46
  %2377 = vmatpush1.msra.mxu0 %v45
  %2378 = vmatprep.subr.mxu0 %v42
  %2379 = vmatpush1.msra.mxu0 %v41
  %2380 = vmatprep.subr.mxu0 %v38
  %2381 = vmatpush1.msra.mxu0 %v37
  %2382 = vmatprep.subr.mxu0 %v34
  %2383 = vmatpush1.msra.mxu0 %v33
  %2384 = vmatprep.subr.mxu0 %v30
  %2385 = vmatpush1.msra.mxu0 %v29
  %2386 = vmatprep.subr.mxu0 %v26
  %2387 = vmatpush1.msra.mxu0 %v25
  %2388 = vmatprep.subr.mxu0 0.0
  %2389 = vmatpush2.msra.mxu0 0.0
  %2390 = vmatprep.subr.mxu0 0.0
  %2391 = vmatpush2.msra.mxu0 0.0
  %2392 = vmatprep.subr.mxu0 0.0
  %2393 = vmatpush2.msra.mxu0 0.0
  %2394 = vmatprep.subr.mxu0 0.0
  %2395 = vmatpush2.msra.mxu0 0.0
  %2396 = vmatprep.subr.mxu0 0.0
  %2397 = vmatpush2.msra.mxu0 0.0
  %2398 = vmatprep.subr.mxu0 0.0
  %2399 = vmatpush2.msra.mxu0 0.0
  %2400 = vmatprep.subr.mxu0 0.0
  %2401 = vmatpush2.msra.mxu0 0.0
  %2402 = vmatprep.subr.mxu0 0.0
  %2403 = vmatpush2.msra.mxu0 0.0
  %2404 = vmatprep.subr.mxu0 0.0
  %2405 = vmatpush2.msra.mxu0 0.0
  %2406 = vmatprep.subr.mxu0 0.0
  %2407 = vmatpush2.msra.mxu0 0.0
  %2408 = vmatprep.subr.mxu0 0.0
  %2409 = vmatpush2.msra.mxu0 0.0
  %2410 = vmatprep.subr.mxu0 0.0
  %2411 = vmatpush2.msra.mxu0 0.0
  %2412 = vmatprep.subr.mxu0 0.0
  %2413 = vmatpush2.msra.mxu0 0.0
  %2414 = vmatprep.subr.mxu0 0.0
  %2415 = vmatpush2.msra.mxu0 0.0
  %2416 = vmatprep.subr.mxu0 0.0
  %2417 = vmatpush2.msra.mxu0 0.0
  %2418 = vmatprep.subr.mxu0 0.0
  %2419 = vmatpush2.msra.mxu0 0.0
  %2420 = vmatprep.mubr.f32.mxu0 0.0
  %2421 = vmatmul.mubr.f32.gmra.mxu0 %v2027
  %v2422 = vpop.f32.mrf.mxu0
  %v2423 = vadd.f32 0.0, %v2422
  %v2424 = vpop.f32.mrf.mxu0
  %v2425 = vadd.f32 0.0, %v2424
  %2426 = vdwg.mxu0
  %2427 = vmatprep.subr.mxu0 %v88
  %2428 = vmatpush1.msra.mxu0 %v87
  %2429 = vmatprep.subr.mxu0 %v84
  %2430 = vmatpush1.msra.mxu0 %v83
  %2431 = vmatprep.subr.mxu0 %v80
  %2432 = vmatpush1.msra.mxu0 %v79
  %2433 = vmatprep.subr.mxu0 %v76
  %2434 = vmatpush1.msra.mxu0 %v75
  %2435 = vmatprep.subr.mxu0 %v72
  %2436 = vmatpush1.msra.mxu0 %v71
  %2437 = vmatprep.subr.mxu0 %v68
  %2438 = vmatpush1.msra.mxu0 %v67
  %2439 = vmatprep.subr.mxu0 %v64
  %2440 = vmatpush1.msra.mxu0 %v63
  %2441 = vmatprep.subr.mxu0 %v60
  %2442 = vmatpush1.msra.mxu0 %v59
  %2443 = vmatprep.subr.mxu0 %v56
  %2444 = vmatpush1.msra.mxu0 %v55
  %2445 = vmatprep.subr.mxu0 %v52
  %2446 = vmatpush1.msra.mxu0 %v51
  %2447 = vmatprep.subr.mxu0 %v48
  %2448 = vmatpush1.msra.mxu0 %v47
  %2449 = vmatprep.subr.mxu0 %v44
  %2450 = vmatpush1.msra.mxu0 %v43
  %2451 = vmatprep.subr.mxu0 %v40
  %2452 = vmatpush1.msra.mxu0 %v39
  %2453 = vmatprep.subr.mxu0 %v36
  %2454 = vmatpush1.msra.mxu0 %v35
  %2455 = vmatprep.subr.mxu0 %v32
  %2456 = vmatpush1.msra.mxu0 %v31
  %2457 = vmatprep.subr.mxu0 %v28
  %2458 = vmatpush1.msra.mxu0 %v27
  %2459 = vmatprep.subr.mxu0 0.0
  %2460 = vmatpush2.msra.mxu0 0.0
  %2461 = vmatprep.subr.mxu0 0.0
  %2462 = vmatpush2.msra.mxu0 0.0
  %2463 = vmatprep.subr.mxu0 0.0
  %2464 = vmatpush2.msra.mxu0 0.0
  %2465 = vmatprep.subr.mxu0 0.0
  %2466 = vmatpush2.msra.mxu0 0.0
  %2467 = vmatprep.subr.mxu0 0.0
  %2468 = vmatpush2.msra.mxu0 0.0
  %2469 = vmatprep.subr.mxu0 0.0
  %2470 = vmatpush2.msra.mxu0 0.0
  %2471 = vmatprep.subr.mxu0 0.0
  %2472 = vmatpush2.msra.mxu0 0.0
  %2473 = vmatprep.subr.mxu0 0.0
  %2474 = vmatpush2.msra.mxu0 0.0
  %2475 = vmatprep.subr.mxu0 0.0
  %2476 = vmatpush2.msra.mxu0 0.0
  %2477 = vmatprep.subr.mxu0 0.0
  %2478 = vmatpush2.msra.mxu0 0.0
  %2479 = vmatprep.subr.mxu0 0.0
  %2480 = vmatpush2.msra.mxu0 0.0
  %2481 = vmatprep.subr.mxu0 0.0
  %2482 = vmatpush2.msra.mxu0 0.0
  %2483 = vmatprep.subr.mxu0 0.0
  %2484 = vmatpush2.msra.mxu0 0.0
  %2485 = vmatprep.subr.mxu0 0.0
  %2486 = vmatpush2.msra.mxu0 0.0
  %2487 = vmatprep.subr.mxu0 0.0
  %2488 = vmatpush2.msra.mxu0 0.0
  %2489 = vmatprep.subr.mxu0 0.0
  %2490 = vmatpush2.msra.mxu0 0.0
  %2491 = vmatprep.mubr.f32.mxu0 0.0
  %2492 = vmatmul.mubr.f32.gmra.mxu0 %v2027
  %v2493 = vpop.f32.mrf.mxu0
  %v2494 = vadd.f32 0.0, %v2493
  %v2495 = vpop.f32.mrf.mxu0
  %v2496 = vadd.f32 0.0, %v2495
  %2497 = vdwg.mxu0
  %v2498 = vadd.f32 %v2352, %v2423
  %v2499 = vadd.f32 %v2353, %v2425
  %v2500 = vadd.f32 %v2354, %v2494
  %v2501 = vadd.f32 %v2355, %v2496
  %v2502 = vxor.u32 %v2498, 2147483648
  %v2503 = vmul.f32 %v2502, 1.442695
  %v2504 = vpow.pop %v2503
  %v2505 = vadd.f32 %v2504, 1.0
  %v2506 = vrcp.pop %v2505
  %v2507 = vmul.f32 1.0, %v2506
  %v2508 = vxor.u32 %v2499, 2147483648
  %v2509 = vmul.f32 %v2508, 1.442695
  %v2510 = vpow.pop %v2509
  %v2511 = vadd.f32 %v2510, 1.0
  %v2512 = vrcp.pop %v2511
  %v2513 = vmul.f32 1.0, %v2512
  %v2514 = vtanh.pop %v2500
  %v2515 = vxor.u32 %v2501, 2147483648
  %v2516 = vmul.f32 %v2515, 1.442695
  %v2517 = vpow.pop %v2516
  %v2518 = vadd.f32 %v2517, 1.0
  %v2519 = vrcp.pop %v2518
  %v2520 = vmul.f32 1.0, %v2519
  %v2521 = vmul.f32 %v2513, %v2025
  %v2522 = vmul.f32 %v2507, %v2514
  %v2523 = vadd.f32 %v2521, %v2522
  %v2524 = vtanh.pop %v2523
  %v2525 = vmul.f32 %v2520, %v2524
  %2526 = vmatprep.subr.mxu0 %v214
  %2527 = vmatpush1.msra.mxu0 %v213
  %2528 = vmatprep.subr.mxu0 %v210
  %2529 = vmatpush1.msra.mxu0 %v209
  %2530 = vmatprep.subr.mxu0 %v206
  %2531 = vmatpush1.msra.mxu0 %v205
  %2532 = vmatprep.subr.mxu0 %v202
  %2533 = vmatpush1.msra.mxu0 %v201
  %2534 = vmatprep.subr.mxu0 %v198
  %2535 = vmatpush1.msra.mxu0 %v197
  %2536 = vmatprep.subr.mxu0 %v194
  %2537 = vmatpush1.msra.mxu0 %v193
  %2538 = vmatprep.subr.mxu0 %v190
  %2539 = vmatpush1.msra.mxu0 %v189
  %2540 = vmatprep.subr.mxu0 %v186
  %2541 = vmatpush1.msra.mxu0 %v185
  %2542 = vmatprep.subr.mxu0 %v182
  %2543 = vmatpush1.msra.mxu0 %v181
  %2544 = vmatprep.subr.mxu0 %v178
  %2545 = vmatpush1.msra.mxu0 %v177
  %2546 = vmatprep.subr.mxu0 %v174
  %2547 = vmatpush1.msra.mxu0 %v173
  %2548 = vmatprep.subr.mxu0 %v170
  %2549 = vmatpush1.msra.mxu0 %v169
  %2550 = vmatprep.subr.mxu0 %v166
  %2551 = vmatpush1.msra.mxu0 %v165
  %2552 = vmatprep.subr.mxu0 %v162
  %2553 = vmatpush1.msra.mxu0 %v161
  %2554 = vmatprep.subr.mxu0 %v158
  %2555 = vmatpush1.msra.mxu0 %v157
  %2556 = vmatprep.subr.mxu0 %v154
  %2557 = vmatpush1.msra.mxu0 %v153
  %2558 = vmatprep.subr.mxu0 0.0
  %2559 = vmatpush2.msra.mxu0 0.0
  %2560 = vmatprep.subr.mxu0 0.0
  %2561 = vmatpush2.msra.mxu0 0.0
  %2562 = vmatprep.subr.mxu0 0.0
  %2563 = vmatpush2.msra.mxu0 0.0
  %2564 = vmatprep.subr.mxu0 0.0
  %2565 = vmatpush2.msra.mxu0 0.0
  %2566 = vmatprep.subr.mxu0 0.0
  %2567 = vmatpush2.msra.mxu0 0.0
  %2568 = vmatprep.subr.mxu0 0.0
  %2569 = vmatpush2.msra.mxu0 0.0
  %2570 = vmatprep.subr.mxu0 0.0
  %2571 = vmatpush2.msra.mxu0 0.0
  %2572 = vmatprep.subr.mxu0 0.0
  %2573 = vmatpush2.msra.mxu0 0.0
  %2574 = vmatprep.subr.mxu0 0.0
  %2575 = vmatpush2.msra.mxu0 0.0
  %2576 = vmatprep.subr.mxu0 0.0
  %2577 = vmatpush2.msra.mxu0 0.0
  %2578 = vmatprep.subr.mxu0 0.0
  %2579 = vmatpush2.msra.mxu0 0.0
  %2580 = vmatprep.subr.mxu0 0.0
  %2581 = vmatpush2.msra.mxu0 0.0
  %2582 = vmatprep.subr.mxu0 0.0
  %2583 = vmatpush2.msra.mxu0 0.0
  %2584 = vmatprep.subr.mxu0 0.0
  %2585 = vmatpush2.msra.mxu0 0.0
  %2586 = vmatprep.subr.mxu0 0.0
  %2587 = vmatpush2.msra.mxu0 0.0
  %2588 = vmatprep.subr.mxu0 0.0
  %2589 = vmatpush2.msra.mxu0 0.0
  %2590 = vmatprep.mubr.f32.mxu0 0.0
  %2591 = vmatmul.mubr.f32.gmra.mxu0 %v2343
  %v2592 = vpop.f32.mrf.mxu0
  %v2593 = vadd.f32 0.0, %v2592
  %v2594 = vpop.f32.mrf.mxu0
  %v2595 = vadd.f32 0.0, %v2594
  %2596 = vdwg.mxu0
  %2597 = vmatprep.subr.mxu0 %v216
  %2598 = vmatpush1.msra.mxu0 %v215
  %2599 = vmatprep.subr.mxu0 %v212
  %2600 = vmatpush1.msra.mxu0 %v211
  %2601 = vmatprep.subr.mxu0 %v208
  %2602 = vmatpush1.msra.mxu0 %v207
  %2603 = vmatprep.subr.mxu0 %v204
  %2604 = vmatpush1.msra.mxu0 %v203
  %2605 = vmatprep.subr.mxu0 %v200
  %2606 = vmatpush1.msra.mxu0 %v199
  %2607 = vmatprep.subr.mxu0 %v196
  %2608 = vmatpush1.msra.mxu0 %v195
  %2609 = vmatprep.subr.mxu0 %v192
  %2610 = vmatpush1.msra.mxu0 %v191
  %2611 = vmatprep.subr.mxu0 %v188
  %2612 = vmatpush1.msra.mxu0 %v187
  %2613 = vmatprep.subr.mxu0 %v184
  %2614 = vmatpush1.msra.mxu0 %v183
  %2615 = vmatprep.subr.mxu0 %v180
  %2616 = vmatpush1.msra.mxu0 %v179
  %2617 = vmatprep.subr.mxu0 %v176
  %2618 = vmatpush1.msra.mxu0 %v175
  %2619 = vmatprep.subr.mxu0 %v172
  %2620 = vmatpush1.msra.mxu0 %v171
  %2621 = vmatprep.subr.mxu0 %v168
  %2622 = vmatpush1.msra.mxu0 %v167
  %2623 = vmatprep.subr.mxu0 %v164
  %2624 = vmatpush1.msra.mxu0 %v163
  %2625 = vmatprep.subr.mxu0 %v160
  %2626 = vmatpush1.msra.mxu0 %v159
  %2627 = vmatprep.subr.mxu0 %v156
  %2628 = vmatpush1.msra.mxu0 %v155
  %2629 = vmatprep.subr.mxu0 0.0
  %2630 = vmatpush2.msra.mxu0 0.0
  %2631 = vmatprep.subr.mxu0 0.0
  %2632 = vmatpush2.msra.mxu0 0.0
  %2633 = vmatprep.subr.mxu0 0.0
  %2634 = vmatpush2.msra.mxu0 0.0
  %2635 = vmatprep.subr.mxu0 0.0
  %2636 = vmatpush2.msra.mxu0 0.0
  %2637 = vmatprep.subr.mxu0 0.0
  %2638 = vmatpush2.msra.mxu0 0.0
  %2639 = vmatprep.subr.mxu0 0.0
  %2640 = vmatpush2.msra.mxu0 0.0
  %2641 = vmatprep.subr.mxu0 0.0
  %2642 = vmatpush2.msra.mxu0 0.0
  %2643 = vmatprep.subr.mxu0 0.0
  %2644 = vmatpush2.msra.mxu0 0.0
  %2645 = vmatprep.subr.mxu0 0.0
  %2646 = vmatpush2.msra.mxu0 0.0
  %2647 = vmatprep.subr.mxu0 0.0
  %2648 = vmatpush2.msra.mxu0 0.0
  %2649 = vmatprep.subr.mxu0 0.0
  %2650 = vmatpush2.msra.mxu0 0.0
  %2651 = vmatprep.subr.mxu0 0.0
  %2652 = vmatpush2.msra.mxu0 0.0
  %2653 = vmatprep.subr.mxu0 0.0
  %2654 = vmatpush2.msra.mxu0 0.0
  %2655 = vmatprep.subr.mxu0 0.0
  %2656 = vmatpush2.msra.mxu0 0.0
  %2657 = vmatprep.subr.mxu0 0.0
  %2658 = vmatpush2.msra.mxu0 0.0
  %2659 = vmatprep.subr.mxu0 0.0
  %2660 = vmatpush2.msra.mxu0 0.0
  %2661 = vmatprep.mubr.f32.mxu0 0.0
  %2662 = vmatmul.mubr.f32.gmra.mxu0 %v2343
  %v2663 = vpop.f32.mrf.mxu0
  %v2664 = vadd.f32 0.0, %v2663
  %v2665 = vpop.f32.mrf.mxu0
  %v2666 = vadd.f32 0.0, %v2665
  %2667 = vdwg.mxu0
  %v2668 = vadd.f32 %v659, %v2593
  %v2669 = vadd.f32 %v663, %v2595
  %v2670 = vadd.f32 %v667, %v2664
  %v2671 = vadd.f32 %v671, %v2666
  %2672 = vmatprep.subr.mxu0 %v150
  %2673 = vmatpush1.msra.mxu0 %v149
  %2674 = vmatprep.subr.mxu0 %v146
  %2675 = vmatpush1.msra.mxu0 %v145
  %2676 = vmatprep.subr.mxu0 %v142
  %2677 = vmatpush1.msra.mxu0 %v141
  %2678 = vmatprep.subr.mxu0 %v138
  %2679 = vmatpush1.msra.mxu0 %v137
  %2680 = vmatprep.subr.mxu0 %v134
  %2681 = vmatpush1.msra.mxu0 %v133
  %2682 = vmatprep.subr.mxu0 %v130
  %2683 = vmatpush1.msra.mxu0 %v129
  %2684 = vmatprep.subr.mxu0 %v126
  %2685 = vmatpush1.msra.mxu0 %v125
  %2686 = vmatprep.subr.mxu0 %v122
  %2687 = vmatpush1.msra.mxu0 %v121
  %2688 = vmatprep.subr.mxu0 %v118
  %2689 = vmatpush1.msra.mxu0 %v117
  %2690 = vmatprep.subr.mxu0 %v114
  %2691 = vmatpush1.msra.mxu0 %v113
  %2692 = vmatprep.subr.mxu0 %v110
  %2693 = vmatpush1.msra.mxu0 %v109
  %2694 = vmatprep.subr.mxu0 %v106
  %2695 = vmatpush1.msra.mxu0 %v105
  %2696 = vmatprep.subr.mxu0 %v102
  %2697 = vmatpush1.msra.mxu0 %v101
  %2698 = vmatprep.subr.mxu0 %v98
  %2699 = vmatpush1.msra.mxu0 %v97
  %2700 = vmatprep.subr.mxu0 %v94
  %2701 = vmatpush1.msra.mxu0 %v93
  %2702 = vmatprep.subr.mxu0 %v90
  %2703 = vmatpush1.msra.mxu0 %v89
  %2704 = vmatprep.subr.mxu0 0.0
  %2705 = vmatpush2.msra.mxu0 0.0
  %2706 = vmatprep.subr.mxu0 0.0
  %2707 = vmatpush2.msra.mxu0 0.0
  %2708 = vmatprep.subr.mxu0 0.0
  %2709 = vmatpush2.msra.mxu0 0.0
  %2710 = vmatprep.subr.mxu0 0.0
  %2711 = vmatpush2.msra.mxu0 0.0
  %2712 = vmatprep.subr.mxu0 0.0
  %2713 = vmatpush2.msra.mxu0 0.0
  %2714 = vmatprep.subr.mxu0 0.0
  %2715 = vmatpush2.msra.mxu0 0.0
  %2716 = vmatprep.subr.mxu0 0.0
  %2717 = vmatpush2.msra.mxu0 0.0
  %2718 = vmatprep.subr.mxu0 0.0
  %2719 = vmatpush2.msra.mxu0 0.0
  %2720 = vmatprep.subr.mxu0 0.0
  %2721 = vmatpush2.msra.mxu0 0.0
  %2722 = vmatprep.subr.mxu0 0.0
  %2723 = vmatpush2.msra.mxu0 0.0
  %2724 = vmatprep.subr.mxu0 0.0
  %2725 = vmatpush2.msra.mxu0 0.0
  %2726 = vmatprep.subr.mxu0 0.0
  %2727 = vmatpush2.msra.mxu0 0.0
  %2728 = vmatprep.subr.mxu0 0.0
  %2729 = vmatpush2.msra.mxu0 0.0
  %2730 = vmatprep.subr.mxu0 0.0
  %2731 = vmatpush2.msra.mxu0 0.0
  %2732 = vmatprep.subr.mxu0 0.0
  %2733 = vmatpush2.msra.mxu0 0.0
  %2734 = vmatprep.subr.mxu0 0.0
  %2735 = vmatpush2.msra.mxu0 0.0
  %2736 = vmatprep.mubr.f32.mxu0 0.0
  %2737 = vmatmul.mubr.f32.gmra.mxu0 %v2525
  %v2738 = vpop.f32.mrf.mxu0
  %v2739 = vadd.f32 0.0, %v2738
  %v2740 = vpop.f32.mrf.mxu0
  %v2741 = vadd.f32 0.0, %v2740
  %2742 = vdwg.mxu0
  %2743 = vmatprep.subr.mxu0 %v152
  %2744 = vmatpush1.msra.mxu0 %v151
  %2745 = vmatprep.subr.mxu0 %v148
  %2746 = vmatpush1.msra.mxu0 %v147
  %2747 = vmatprep.subr.mxu0 %v144
  %2748 = vmatpush1.msra.mxu0 %v143
  %2749 = vmatprep.subr.mxu0 %v140
  %2750 = vmatpush1.msra.mxu0 %v139
  %2751 = vmatprep.subr.mxu0 %v136
  %2752 = vmatpush1.msra.mxu0 %v135
  %2753 = vmatprep.subr.mxu0 %v132
  %2754 = vmatpush1.msra.mxu0 %v131
  %2755 = vmatprep.subr.mxu0 %v128
  %2756 = vmatpush1.msra.mxu0 %v127
  %2757 = vmatprep.subr.mxu0 %v124
  %2758 = vmatpush1.msra.mxu0 %v123
  %2759 = vmatprep.subr.mxu0 %v120
  %2760 = vmatpush1.msra.mxu0 %v119
  %2761 = vmatprep.subr.mxu0 %v116
  %2762 = vmatpush1.msra.mxu0 %v115
  %2763 = vmatprep.subr.mxu0 %v112
  %2764 = vmatpush1.msra.mxu0 %v111
  %2765 = vmatprep.subr.mxu0 %v108
  %2766 = vmatpush1.msra.mxu0 %v107
  %2767 = vmatprep.subr.mxu0 %v104
  %2768 = vmatpush1.msra.mxu0 %v103
  %2769 = vmatprep.subr.mxu0 %v100
  %2770 = vmatpush1.msra.mxu0 %v99
  %2771 = vmatprep.subr.mxu0 %v96
  %2772 = vmatpush1.msra.mxu0 %v95
  %2773 = vmatprep.subr.mxu0 %v92
  %2774 = vmatpush1.msra.mxu0 %v91
  %2775 = vmatprep.subr.mxu0 0.0
  %2776 = vmatpush2.msra.mxu0 0.0
  %2777 = vmatprep.subr.mxu0 0.0
  %2778 = vmatpush2.msra.mxu0 0.0
  %2779 = vmatprep.subr.mxu0 0.0
  %2780 = vmatpush2.msra.mxu0 0.0
  %2781 = vmatprep.subr.mxu0 0.0
  %2782 = vmatpush2.msra.mxu0 0.0
  %2783 = vmatprep.subr.mxu0 0.0
  %2784 = vmatpush2.msra.mxu0 0.0
  %2785 = vmatprep.subr.mxu0 0.0
  %2786 = vmatpush2.msra.mxu0 0.0
  %2787 = vmatprep.subr.mxu0 0.0
  %2788 = vmatpush2.msra.mxu0 0.0
  %2789 = vmatprep.subr.mxu0 0.0
  %2790 = vmatpush2.msra.mxu0 0.0
  %2791 = vmatprep.subr.mxu0 0.0
  %2792 = vmatpush2.msra.mxu0 0.0
  %2793 = vmatprep.subr.mxu0 0.0
  %2794 = vmatpush2.msra.mxu0 0.0
  %2795 = vmatprep.subr.mxu0 0.0
  %2796 = vmatpush2.msra.mxu0 0.0
  %2797 = vmatprep.subr.mxu0 0.0
  %2798 = vmatpush2.msra.mxu0 0.0
  %2799 = vmatprep.subr.mxu0 0.0
  %2800 = vmatpush2.msra.mxu0 0.0
  %2801 = vmatprep.subr.mxu0 0.0
  %2802 = vmatpush2.msra.mxu0 0.0
  %2803 = vmatprep.subr.mxu0 0.0
  %2804 = vmatpush2.msra.mxu0 0.0
  %2805 = vmatprep.subr.mxu0 0.0
  %2806 = vmatpush2.msra.mxu0 0.0
  %2807 = vmatprep.mubr.f32.mxu0 0.0
  %2808 = vmatmul.mubr.f32.gmra.mxu0 %v2525
  %v2809 = vpop.f32.mrf.mxu0
  %v2810 = vadd.f32 0.0, %v2809
  %v2811 = vpop.f32.mrf.mxu0
  %v2812 = vadd.f32 0.0, %v2811
  %2813 = vdwg.mxu0
  %v2814 = vadd.f32 %v2668, %v2739
  %v2815 = vadd.f32 %v2669, %v2741
  %v2816 = vadd.f32 %v2670, %v2810
  %v2817 = vadd.f32 %v2671, %v2812
  %v2818 = vxor.u32 %v2814, 2147483648
  %v2819 = vmul.f32 %v2818, 1.442695
  %v2820 = vpow.pop %v2819
  %v2821 = vadd.f32 %v2820, 1.0
  %v2822 = vrcp.pop %v2821
  %v2823 = vmul.f32 1.0, %v2822
  %v2824 = vxor.u32 %v2815, 2147483648
  %v2825 = vmul.f32 %v2824, 1.442695
  %v2826 = vpow.pop %v2825
  %v2827 = vadd.f32 %v2826, 1.0
  %v2828 = vrcp.pop %v2827
  %v2829 = vmul.f32 1.0, %v2828
  %v2830 = vtanh.pop %v2816
  %v2831 = vxor.u32 %v2817, 2147483648
  %v2832 = vmul.f32 %v2831, 1.442695
  %v2833 = vpow.pop %v2832
  %v2834 = vadd.f32 %v2833, 1.0
  %v2835 = vrcp.pop %v2834
  %v2836 = vmul.f32 1.0, %v2835
  %v2837 = vmul.f32 %v2829, %v2341
  %v2838 = vmul.f32 %v2823, %v2830
  %v2839 = vadd.f32 %v2837, %v2838
  %v2840 = vtanh.pop %v2839
  %v2841 = vmul.f32 %v2836, %v2840
  %2842 = vset.pattern.permute.xlu0 5
  %2843 = vperm.xlu0 %2842, %v286
  %v2844 = vpop.permute.xlu0 %2843
  %v2846 = vmul.f32 %v2844, %v297
  %v2847 = vmul.f32 %v2844, %v301
  %v2848 = vmul.f32 %v2844, %v305
  %v2849 = vmul.f32 %v2844, %v309
  %v2850 = vadd.f32 %v322, %v2846
  %v2851 = vadd.f32 %v326, %v2847
  %v2852 = vadd.f32 %v330, %v2848
  %v2853 = vadd.f32 %v334, %v2849
  %2854 = vmatprep.subr.mxu0 %v86
  %2855 = vmatpush1.msra.mxu0 %v85
  %2856 = vmatprep.subr.mxu0 %v82
  %2857 = vmatpush1.msra.mxu0 %v81
  %2858 = vmatprep.subr.mxu0 %v78
  %2859 = vmatpush1.msra.mxu0 %v77
  %2860 = vmatprep.subr.mxu0 %v74
  %2861 = vmatpush1.msra.mxu0 %v73
  %2862 = vmatprep.subr.mxu0 %v70
  %2863 = vmatpush1.msra.mxu0 %v69
  %2864 = vmatprep.subr.mxu0 %v66
  %2865 = vmatpush1.msra.mxu0 %v65
  %2866 = vmatprep.subr.mxu0 %v62
  %2867 = vmatpush1.msra.mxu0 %v61
  %2868 = vmatprep.subr.mxu0 %v58
  %2869 = vmatpush1.msra.mxu0 %v57
  %2870 = vmatprep.subr.mxu0 %v54
  %2871 = vmatpush1.msra.mxu0 %v53
  %2872 = vmatprep.subr.mxu0 %v50
  %2873 = vmatpush1.msra.mxu0 %v49
  %2874 = vmatprep.subr.mxu0 %v46
  %2875 = vmatpush1.msra.mxu0 %v45
  %2876 = vmatprep.subr.mxu0 %v42
  %2877 = vmatpush1.msra.mxu0 %v41
  %2878 = vmatprep.subr.mxu0 %v38
  %2879 = vmatpush1.msra.mxu0 %v37
  %2880 = vmatprep.subr.mxu0 %v34
  %2881 = vmatpush1.msra.mxu0 %v33
  %2882 = vmatprep.subr.mxu0 %v30
  %2883 = vmatpush1.msra.mxu0 %v29
  %2884 = vmatprep.subr.mxu0 %v26
  %2885 = vmatpush1.msra.mxu0 %v25
  %2886 = vmatprep.subr.mxu0 0.0
  %2887 = vmatpush2.msra.mxu0 0.0
  %2888 = vmatprep.subr.mxu0 0.0
  %2889 = vmatpush2.msra.mxu0 0.0
  %2890 = vmatprep.subr.mxu0 0.0
  %2891 = vmatpush2.msra.mxu0 0.0
  %2892 = vmatprep.subr.mxu0 0.0
  %2893 = vmatpush2.msra.mxu0 0.0
  %2894 = vmatprep.subr.mxu0 0.0
  %2895 = vmatpush2.msra.mxu0 0.0
  %2896 = vmatprep.subr.mxu0 0.0
  %2897 = vmatpush2.msra.mxu0 0.0
  %2898 = vmatprep.subr.mxu0 0.0
  %2899 = vmatpush2.msra.mxu0 0.0
  %2900 = vmatprep.subr.mxu0 0.0
  %2901 = vmatpush2.msra.mxu0 0.0
  %2902 = vmatprep.subr.mxu0 0.0
  %2903 = vmatpush2.msra.mxu0 0.0
  %2904 = vmatprep.subr.mxu0 0.0
  %2905 = vmatpush2.msra.mxu0 0.0
  %2906 = vmatprep.subr.mxu0 0.0
  %2907 = vmatpush2.msra.mxu0 0.0
  %2908 = vmatprep.subr.mxu0 0.0
  %2909 = vmatpush2.msra.mxu0 0.0
  %2910 = vmatprep.subr.mxu0 0.0
  %2911 = vmatpush2.msra.mxu0 0.0
  %2912 = vmatprep.subr.mxu0 0.0
  %2913 = vmatpush2.msra.mxu0 0.0
  %2914 = vmatprep.subr.mxu0 0.0
  %2915 = vmatpush2.msra.mxu0 0.0
  %2916 = vmatprep.subr.mxu0 0.0
  %2917 = vmatpush2.msra.mxu0 0.0
  %2918 = vmatprep.mubr.f32.mxu0 0.0
  %2919 = vmatmul.mubr.f32.gmra.mxu0 %v2525
  %v2920 = vpop.f32.mrf.mxu0
  %v2921 = vadd.f32 0.0, %v2920
  %v2922 = vpop.f32.mrf.mxu0
  %v2923 = vadd.f32 0.0, %v2922
  %2924 = vdwg.mxu0
  %2925 = vmatprep.subr.mxu0 %v88
  %2926 = vmatpush1.msra.mxu0 %v87
  %2927 = vmatprep.subr.mxu0 %v84
  %2928 = vmatpush1.msra.mxu0 %v83
  %2929 = vmatprep.subr.mxu0 %v80
  %2930 = vmatpush1.msra.mxu0 %v79
  %2931 = vmatprep.subr.mxu0 %v76
  %2932 = vmatpush1.msra.mxu0 %v75
  %2933 = vmatprep.subr.mxu0 %v72
  %2934 = vmatpush1.msra.mxu0 %v71
  %2935 = vmatprep.subr.mxu0 %v68
  %2936 = vmatpush1.msra.mxu0 %v67
  %2937 = vmatprep.subr.mxu0 %v64
  %2938 = vmatpush1.msra.mxu0 %v63
  %2939 = vmatprep.subr.mxu0 %v60
  %2940 = vmatpush1.msra.mxu0 %v59
  %2941 = vmatprep.subr.mxu0 %v56
  %2942 = vmatpush1.msra.mxu0 %v55
  %2943 = vmatprep.subr.mxu0 %v52
  %2944 = vmatpush1.msra.mxu0 %v51
  %2945 = vmatprep.subr.mxu0 %v48
  %2946 = vmatpush1.msra.mxu0 %v47
  %2947 = vmatprep.subr.mxu0 %v44
  %2948 = vmatpush1.msra.mxu0 %v43
  %2949 = vmatprep.subr.mxu0 %v40
  %2950 = vmatpush1.msra.mxu0 %v39
  %2951 = vmatprep.subr.mxu0 %v36
  %2952 = vmatpush1.msra.mxu0 %v35
  %2953 = vmatprep.subr.mxu0 %v32
  %2954 = vmatpush1.msra.mxu0 %v31
  %2955 = vmatprep.subr.mxu0 %v28
  %2956 = vmatpush1.msra.mxu0 %v27
  %2957 = vmatprep.subr.mxu0 0.0
  %2958 = vmatpush2.msra.mxu0 0.0
  %2959 = vmatprep.subr.mxu0 0.0
  %2960 = vmatpush2.msra.mxu0 0.0
  %2961 = vmatprep.subr.mxu0 0.0
  %2962 = vmatpush2.msra.mxu0 0.0
  %2963 = vmatprep.subr.mxu0 0.0
  %2964 = vmatpush2.msra.mxu0 0.0
  %2965 = vmatprep.subr.mxu0 0.0
  %2966 = vmatpush2.msra.mxu0 0.0
  %2967 = vmatprep.subr.mxu0 0.0
  %2968 = vmatpush2.msra.mxu0 0.0
  %2969 = vmatprep.subr.mxu0 0.0
  %2970 = vmatpush2.msra.mxu0 0.0
  %2971 = vmatprep.subr.mxu0 0.0
  %2972 = vmatpush2.msra.mxu0 0.0
  %2973 = vmatprep.subr.mxu0 0.0
  %2974 = vmatpush2.msra.mxu0 0.0
  %2975 = vmatprep.subr.mxu0 0.0
  %2976 = vmatpush2.msra.mxu0 0.0
  %2977 = vmatprep.subr.mxu0 0.0
  %2978 = vmatpush2.msra.mxu0 0.0
  %2979 = vmatprep.subr.mxu0 0.0
  %2980 = vmatpush2.msra.mxu0 0.0
  %2981 = vmatprep.subr.mxu0 0.0
  %2982 = vmatpush2.msra.mxu0 0.0
  %2983 = vmatprep.subr.mxu0 0.0
  %2984 = vmatpush2.msra.mxu0 0.0
  %2985 = vmatprep.subr.mxu0 0.0
  %2986 = vmatpush2.msra.mxu0 0.0
  %2987 = vmatprep.subr.mxu0 0.0
  %2988 = vmatpush2.msra.mxu0 0.0
  %2989 = vmatprep.mubr.f32.mxu0 0.0
  %2990 = vmatmul.mubr.f32.gmra.mxu0 %v2525
  %v2991 = vpop.f32.mrf.mxu0
  %v2992 = vadd.f32 0.0, %v2991
  %v2993 = vpop.f32.mrf.mxu0
  %v2994 = vadd.f32 0.0, %v2993
  %2995 = vdwg.mxu0
  %v2996 = vadd.f32 %v2850, %v2921
  %v2997 = vadd.f32 %v2851, %v2923
  %v2998 = vadd.f32 %v2852, %v2992
  %v2999 = vadd.f32 %v2853, %v2994
  %v3000 = vxor.u32 %v2996, 2147483648
  %v3001 = vmul.f32 %v3000, 1.442695
  %v3002 = vpow.pop %v3001
  %v3003 = vadd.f32 %v3002, 1.0
  %v3004 = vrcp.pop %v3003
  %v3005 = vmul.f32 1.0, %v3004
  %v3006 = vxor.u32 %v2997, 2147483648
  %v3007 = vmul.f32 %v3006, 1.442695
  %v3008 = vpow.pop %v3007
  %v3009 = vadd.f32 %v3008, 1.0
  %v3010 = vrcp.pop %v3009
  %v3011 = vmul.f32 1.0, %v3010
  %v3012 = vtanh.pop %v2998
  %v3013 = vxor.u32 %v2999, 2147483648
  %v3014 = vmul.f32 %v3013, 1.442695
  %v3015 = vpow.pop %v3014
  %v3016 = vadd.f32 %v3015, 1.0
  %v3017 = vrcp.pop %v3016
  %v3018 = vmul.f32 1.0, %v3017
  %v3019 = vmul.f32 %v3011, %v2523
  %v3020 = vmul.f32 %v3005, %v3012
  %v3021 = vadd.f32 %v3019, %v3020
  %v3022 = vtanh.pop %v3021
  %v3023 = vmul.f32 %v3018, %v3022
  %3024 = vmatprep.subr.mxu0 %v214
  %3025 = vmatpush1.msra.mxu0 %v213
  %3026 = vmatprep.subr.mxu0 %v210
  %3027 = vmatpush1.msra.mxu0 %v209
  %3028 = vmatprep.subr.mxu0 %v206
  %3029 = vmatpush1.msra.mxu0 %v205
  %3030 = vmatprep.subr.mxu0 %v202
  %3031 = vmatpush1.msra.mxu0 %v201
  %3032 = vmatprep.subr.mxu0 %v198
  %3033 = vmatpush1.msra.mxu0 %v197
  %3034 = vmatprep.subr.mxu0 %v194
  %3035 = vmatpush1.msra.mxu0 %v193
  %3036 = vmatprep.subr.mxu0 %v190
  %3037 = vmatpush1.msra.mxu0 %v189
  %3038 = vmatprep.subr.mxu0 %v186
  %3039 = vmatpush1.msra.mxu0 %v185
  %3040 = vmatprep.subr.mxu0 %v182
  %3041 = vmatpush1.msra.mxu0 %v181
  %3042 = vmatprep.subr.mxu0 %v178
  %3043 = vmatpush1.msra.mxu0 %v177
  %3044 = vmatprep.subr.mxu0 %v174
  %3045 = vmatpush1.msra.mxu0 %v173
  %3046 = vmatprep.subr.mxu0 %v170
  %3047 = vmatpush1.msra.mxu0 %v169
  %3048 = vmatprep.subr.mxu0 %v166
  %3049 = vmatpush1.msra.mxu0 %v165
  %3050 = vmatprep.subr.mxu0 %v162
  %3051 = vmatpush1.msra.mxu0 %v161
  %3052 = vmatprep.subr.mxu0 %v158
  %3053 = vmatpush1.msra.mxu0 %v157
  %3054 = vmatprep.subr.mxu0 %v154
  %3055 = vmatpush1.msra.mxu0 %v153
  %3056 = vmatprep.subr.mxu0 0.0
  %3057 = vmatpush2.msra.mxu0 0.0
  %3058 = vmatprep.subr.mxu0 0.0
  %3059 = vmatpush2.msra.mxu0 0.0
  %3060 = vmatprep.subr.mxu0 0.0
  %3061 = vmatpush2.msra.mxu0 0.0
  %3062 = vmatprep.subr.mxu0 0.0
  %3063 = vmatpush2.msra.mxu0 0.0
  %3064 = vmatprep.subr.mxu0 0.0
  %3065 = vmatpush2.msra.mxu0 0.0
  %3066 = vmatprep.subr.mxu0 0.0
  %3067 = vmatpush2.msra.mxu0 0.0
  %3068 = vmatprep.subr.mxu0 0.0
  %3069 = vmatpush2.msra.mxu0 0.0
  %3070 = vmatprep.subr.mxu0 0.0
  %3071 = vmatpush2.msra.mxu0 0.0
  %3072 = vmatprep.subr.mxu0 0.0
  %3073 = vmatpush2.msra.mxu0 0.0
  %3074 = vmatprep.subr.mxu0 0.0
  %3075 = vmatpush2.msra.mxu0 0.0
  %3076 = vmatprep.subr.mxu0 0.0
  %3077 = vmatpush2.msra.mxu0 0.0
  %3078 = vmatprep.subr.mxu0 0.0
  %3079 = vmatpush2.msra.mxu0 0.0
  %3080 = vmatprep.subr.mxu0 0.0
  %3081 = vmatpush2.msra.mxu0 0.0
  %3082 = vmatprep.subr.mxu0 0.0
  %3083 = vmatpush2.msra.mxu0 0.0
  %3084 = vmatprep.subr.mxu0 0.0
  %3085 = vmatpush2.msra.mxu0 0.0
  %3086 = vmatprep.subr.mxu0 0.0
  %3087 = vmatpush2.msra.mxu0 0.0
  %3088 = vmatprep.mubr.f32.mxu0 0.0
  %3089 = vmatmul.mubr.f32.gmra.mxu0 %v2841
  %v3090 = vpop.f32.mrf.mxu0
  %v3091 = vadd.f32 0.0, %v3090
  %v3092 = vpop.f32.mrf.mxu0
  %v3093 = vadd.f32 0.0, %v3092
  %3094 = vdwg.mxu0
  %3095 = vmatprep.subr.mxu0 %v216
  %3096 = vmatpush1.msra.mxu0 %v215
  %3097 = vmatprep.subr.mxu0 %v212
  %3098 = vmatpush1.msra.mxu0 %v211
  %3099 = vmatprep.subr.mxu0 %v208
  %3100 = vmatpush1.msra.mxu0 %v207
  %3101 = vmatprep.subr.mxu0 %v204
  %3102 = vmatpush1.msra.mxu0 %v203
  %3103 = vmatprep.subr.mxu0 %v200
  %3104 = vmatpush1.msra.mxu0 %v199
  %3105 = vmatprep.subr.mxu0 %v196
  %3106 = vmatpush1.msra.mxu0 %v195
  %3107 = vmatprep.subr.mxu0 %v192
  %3108 = vmatpush1.msra.mxu0 %v191
  %3109 = vmatprep.subr.mxu0 %v188
  %3110 = vmatpush1.msra.mxu0 %v187
  %3111 = vmatprep.subr.mxu0 %v184
  %3112 = vmatpush1.msra.mxu0 %v183
  %3113 = vmatprep.subr.mxu0 %v180
  %3114 = vmatpush1.msra.mxu0 %v179
  %3115 = vmatprep.subr.mxu0 %v176
  %3116 = vmatpush1.msra.mxu0 %v175
  %3117 = vmatprep.subr.mxu0 %v172
  %3118 = vmatpush1.msra.mxu0 %v171
  %3119 = vmatprep.subr.mxu0 %v168
  %3120 = vmatpush1.msra.mxu0 %v167
  %3121 = vmatprep.subr.mxu0 %v164
  %3122 = vmatpush1.msra.mxu0 %v163
  %3123 = vmatprep.subr.mxu0 %v160
  %3124 = vmatpush1.msra.mxu0 %v159
  %3125 = vmatprep.subr.mxu0 %v156
  %3126 = vmatpush1.msra.mxu0 %v155
  %3127 = vmatprep.subr.mxu0 0.0
  %3128 = vmatpush2.msra.mxu0 0.0
  %3129 = vmatprep.subr.mxu0 0.0
  %3130 = vmatpush2.msra.mxu0 0.0
  %3131 = vmatprep.subr.mxu0 0.0
  %3132 = vmatpush2.msra.mxu0 0.0
  %3133 = vmatprep.subr.mxu0 0.0
  %3134 = vmatpush2.msra.mxu0 0.0
  %3135 = vmatprep.subr.mxu0 0.0
  %3136 = vmatpush2.msra.mxu0 0.0
  %3137 = vmatprep.subr.mxu0 0.0
  %3138 = vmatpush2.msra.mxu0 0.0
  %3139 = vmatprep.subr.mxu0 0.0
  %3140 = vmatpush2.msra.mxu0 0.0
  %3141 = vmatprep.subr.mxu0 0.0
  %3142 = vmatpush2.msra.mxu0 0.0
  %3143 = vmatprep.subr.mxu0 0.0
  %3144 = vmatpush2.msra.mxu0 0.0
  %3145 = vmatprep.subr.mxu0 0.0
  %3146 = vmatpush2.msra.mxu0 0.0
  %3147 = vmatprep.subr.mxu0 0.0
  %3148 = vmatpush2.msra.mxu0 0.0
  %3149 = vmatprep.subr.mxu0 0.0
  %3150 = vmatpush2.msra.mxu0 0.0
  %3151 = vmatprep.subr.mxu0 0.0
  %3152 = vmatpush2.msra.mxu0 0.0
  %3153 = vmatprep.subr.mxu0 0.0
  %3154 = vmatpush2.msra.mxu0 0.0
  %3155 = vmatprep.subr.mxu0 0.0
  %3156 = vmatpush2.msra.mxu0 0.0
  %3157 = vmatprep.subr.mxu0 0.0
  %3158 = vmatpush2.msra.mxu0 0.0
  %3159 = vmatprep.mubr.f32.mxu0 0.0
  %3160 = vmatmul.mubr.f32.gmra.mxu0 %v2841
  %v3161 = vpop.f32.mrf.mxu0
  %v3162 = vadd.f32 0.0, %v3161
  %v3163 = vpop.f32.mrf.mxu0
  %v3164 = vadd.f32 0.0, %v3163
  %3165 = vdwg.mxu0
  %v3166 = vadd.f32 %v659, %v3091
  %v3167 = vadd.f32 %v663, %v3093
  %v3168 = vadd.f32 %v667, %v3162
  %v3169 = vadd.f32 %v671, %v3164
  %3170 = vmatprep.subr.mxu0 %v150
  %3171 = vmatpush1.msra.mxu0 %v149
  %3172 = vmatprep.subr.mxu0 %v146
  %3173 = vmatpush1.msra.mxu0 %v145
  %3174 = vmatprep.subr.mxu0 %v142
  %3175 = vmatpush1.msra.mxu0 %v141
  %3176 = vmatprep.subr.mxu0 %v138
  %3177 = vmatpush1.msra.mxu0 %v137
  %3178 = vmatprep.subr.mxu0 %v134
  %3179 = vmatpush1.msra.mxu0 %v133
  %3180 = vmatprep.subr.mxu0 %v130
  %3181 = vmatpush1.msra.mxu0 %v129
  %3182 = vmatprep.subr.mxu0 %v126
  %3183 = vmatpush1.msra.mxu0 %v125
  %3184 = vmatprep.subr.mxu0 %v122
  %3185 = vmatpush1.msra.mxu0 %v121
  %3186 = vmatprep.subr.mxu0 %v118
  %3187 = vmatpush1.msra.mxu0 %v117
  %3188 = vmatprep.subr.mxu0 %v114
  %3189 = vmatpush1.msra.mxu0 %v113
  %3190 = vmatprep.subr.mxu0 %v110
  %3191 = vmatpush1.msra.mxu0 %v109
  %3192 = vmatprep.subr.mxu0 %v106
  %3193 = vmatpush1.msra.mxu0 %v105
  %3194 = vmatprep.subr.mxu0 %v102
  %3195 = vmatpush1.msra.mxu0 %v101
  %3196 = vmatprep.subr.mxu0 %v98
  %3197 = vmatpush1.msra.mxu0 %v97
  %3198 = vmatprep.subr.mxu0 %v94
  %3199 = vmatpush1.msra.mxu0 %v93
  %3200 = vmatprep.subr.mxu0 %v90
  %3201 = vmatpush1.msra.mxu0 %v89
  %3202 = vmatprep.subr.mxu0 0.0
  %3203 = vmatpush2.msra.mxu0 0.0
  %3204 = vmatprep.subr.mxu0 0.0
  %3205 = vmatpush2.msra.mxu0 0.0
  %3206 = vmatprep.subr.mxu0 0.0
  %3207 = vmatpush2.msra.mxu0 0.0
  %3208 = vmatprep.subr.mxu0 0.0
  %3209 = vmatpush2.msra.mxu0 0.0
  %3210 = vmatprep.subr.mxu0 0.0
  %3211 = vmatpush2.msra.mxu0 0.0
  %3212 = vmatprep.subr.mxu0 0.0
  %3213 = vmatpush2.msra.mxu0 0.0
  %3214 = vmatprep.subr.mxu0 0.0
  %3215 = vmatpush2.msra.mxu0 0.0
  %3216 = vmatprep.subr.mxu0 0.0
  %3217 = vmatpush2.msra.mxu0 0.0
  %3218 = vmatprep.subr.mxu0 0.0
  %3219 = vmatpush2.msra.mxu0 0.0
  %3220 = vmatprep.subr.mxu0 0.0
  %3221 = vmatpush2.msra.mxu0 0.0
  %3222 = vmatprep.subr.mxu0 0.0
  %3223 = vmatpush2.msra.mxu0 0.0
  %3224 = vmatprep.subr.mxu0 0.0
  %3225 = vmatpush2.msra.mxu0 0.0
  %3226 = vmatprep.subr.mxu0 0.0
  %3227 = vmatpush2.msra.mxu0 0.0
  %3228 = vmatprep.subr.mxu0 0.0
  %3229 = vmatpush2.msra.mxu0 0.0
  %3230 = vmatprep.subr.mxu0 0.0
  %3231 = vmatpush2.msra.mxu0 0.0
  %3232 = vmatprep.subr.mxu0 0.0
  %3233 = vmatpush2.msra.mxu0 0.0
  %3234 = vmatprep.mubr.f32.mxu0 0.0
  %3235 = vmatmul.mubr.f32.gmra.mxu0 %v3023
  %v3236 = vpop.f32.mrf.mxu0
  %v3237 = vadd.f32 0.0, %v3236
  %v3238 = vpop.f32.mrf.mxu0
  %v3239 = vadd.f32 0.0, %v3238
  %3240 = vdwg.mxu0
  %3241 = vmatprep.subr.mxu0 %v152
  %3242 = vmatpush1.msra.mxu0 %v151
  %3243 = vmatprep.subr.mxu0 %v148
  %3244 = vmatpush1.msra.mxu0 %v147
  %3245 = vmatprep.subr.mxu0 %v144
  %3246 = vmatpush1.msra.mxu0 %v143
  %3247 = vmatprep.subr.mxu0 %v140
  %3248 = vmatpush1.msra.mxu0 %v139
  %3249 = vmatprep.subr.mxu0 %v136
  %3250 = vmatpush1.msra.mxu0 %v135
  %3251 = vmatprep.subr.mxu0 %v132
  %3252 = vmatpush1.msra.mxu0 %v131
  %3253 = vmatprep.subr.mxu0 %v128
  %3254 = vmatpush1.msra.mxu0 %v127
  %3255 = vmatprep.subr.mxu0 %v124
  %3256 = vmatpush1.msra.mxu0 %v123
  %3257 = vmatprep.subr.mxu0 %v120
  %3258 = vmatpush1.msra.mxu0 %v119
  %3259 = vmatprep.subr.mxu0 %v116
  %3260 = vmatpush1.msra.mxu0 %v115
  %3261 = vmatprep.subr.mxu0 %v112
  %3262 = vmatpush1.msra.mxu0 %v111
  %3263 = vmatprep.subr.mxu0 %v108
  %3264 = vmatpush1.msra.mxu0 %v107
  %3265 = vmatprep.subr.mxu0 %v104
  %3266 = vmatpush1.msra.mxu0 %v103
  %3267 = vmatprep.subr.mxu0 %v100
  %3268 = vmatpush1.msra.mxu0 %v99
  %3269 = vmatprep.subr.mxu0 %v96
  %3270 = vmatpush1.msra.mxu0 %v95
  %3271 = vmatprep.subr.mxu0 %v92
  %3272 = vmatpush1.msra.mxu0 %v91
  %3273 = vmatprep.subr.mxu0 0.0
  %3274 = vmatpush2.msra.mxu0 0.0
  %3275 = vmatprep.subr.mxu0 0.0
  %3276 = vmatpush2.msra.mxu0 0.0
  %3277 = vmatprep.subr.mxu0 0.0
  %3278 = vmatpush2.msra.mxu0 0.0
  %3279 = vmatprep.subr.mxu0 0.0
  %3280 = vmatpush2.msra.mxu0 0.0
  %3281 = vmatprep.subr.mxu0 0.0
  %3282 = vmatpush2.msra.mxu0 0.0
  %3283 = vmatprep.subr.mxu0 0.0
  %3284 = vmatpush2.msra.mxu0 0.0
  %3285 = vmatprep.subr.mxu0 0.0
  %3286 = vmatpush2.msra.mxu0 0.0
  %3287 = vmatprep.subr.mxu0 0.0
  %3288 = vmatpush2.msra.mxu0 0.0
  %3289 = vmatprep.subr.mxu0 0.0
  %3290 = vmatpush2.msra.mxu0 0.0
  %3291 = vmatprep.subr.mxu0 0.0
  %3292 = vmatpush2.msra.mxu0 0.0
  %3293 = vmatprep.subr.mxu0 0.0
  %3294 = vmatpush2.msra.mxu0 0.0
  %3295 = vmatprep.subr.mxu0 0.0
  %3296 = vmatpush2.msra.mxu0 0.0
  %3297 = vmatprep.subr.mxu0 0.0
  %3298 = vmatpush2.msra.mxu0 0.0
  %3299 = vmatprep.subr.mxu0 0.0
  %3300 = vmatpush2.msra.mxu0 0.0
  %3301 = vmatprep.subr.mxu0 0.0
  %3302 = vmatpush2.msra.mxu0 0.0
  %3303 = vmatprep.subr.mxu0 0.0
  %3304 = vmatpush2.msra.mxu0 0.0
  %3305 = vmatprep.mubr.f32.mxu0 0.0
  %3306 = vmatmul.mubr.f32.gmra.mxu0 %v3023
  %v3307 = vpop.f32.mrf.mxu0
  %v3308 = vadd.f32 0.0, %v3307
  %v3309 = vpop.f32.mrf.mxu0
  %v3310 = vadd.f32 0.0, %v3309
  %3311 = vdwg.mxu0
  %v3312 = vadd.f32 %v3166, %v3237
  %v3313 = vadd.f32 %v3167, %v3239
  %v3314 = vadd.f32 %v3168, %v3308
  %v3315 = vadd.f32 %v3169, %v3310
  %v3316 = vxor.u32 %v3312, 2147483648
  %v3317 = vmul.f32 %v3316, 1.442695
  %v3318 = vpow.pop %v3317
  %v3319 = vadd.f32 %v3318, 1.0
  %v3320 = vrcp.pop %v3319
  %v3321 = vmul.f32 1.0, %v3320
  %v3322 = vxor.u32 %v3313, 2147483648
  %v3323 = vmul.f32 %v3322, 1.442695
  %v3324 = vpow.pop %v3323
  %v3325 = vadd.f32 %v3324, 1.0
  %v3326 = vrcp.pop %v3325
  %v3327 = vmul.f32 1.0, %v3326
  %v3328 = vtanh.pop %v3314
  %v3329 = vxor.u32 %v3315, 2147483648
  %v3330 = vmul.f32 %v3329, 1.442695
  %v3331 = vpow.pop %v3330
  %v3332 = vadd.f32 %v3331, 1.0
  %v3333 = vrcp.pop %v3332
  %v3334 = vmul.f32 1.0, %v3333
  %v3335 = vmul.f32 %v3327, %v2839
  %v3336 = vmul.f32 %v3321, %v3328
  %v3337 = vadd.f32 %v3335, %v3336
  %v3338 = vtanh.pop %v3337
  %v3339 = vmul.f32 %v3334, %v3338
  %3340 = vset.pattern.permute.xlu0 6
  %3341 = vperm.xlu0 %3340, %v286
  %v3342 = vpop.permute.xlu0 %3341
  %v3344 = vmul.f32 %v3342, %v297
  %v3345 = vmul.f32 %v3342, %v301
  %v3346 = vmul.f32 %v3342, %v305
  %v3347 = vmul.f32 %v3342, %v309
  %v3348 = vadd.f32 %v322, %v3344
  %v3349 = vadd.f32 %v326, %v3345
  %v3350 = vadd.f32 %v330, %v3346
  %v3351 = vadd.f32 %v334, %v3347
  %3352 = vmatprep.subr.mxu0 %v86
  %3353 = vmatpush1.msra.mxu0 %v85
  %3354 = vmatprep.subr.mxu0 %v82
  %3355 = vmatpush1.msra.mxu0 %v81
  %3356 = vmatprep.subr.mxu0 %v78
  %3357 = vmatpush1.msra.mxu0 %v77
  %3358 = vmatprep.subr.mxu0 %v74
  %3359 = vmatpush1.msra.mxu0 %v73
  %3360 = vmatprep.subr.mxu0 %v70
  %3361 = vmatpush1.msra.mxu0 %v69
  %3362 = vmatprep.subr.mxu0 %v66
  %3363 = vmatpush1.msra.mxu0 %v65
  %3364 = vmatprep.subr.mxu0 %v62
  %3365 = vmatpush1.msra.mxu0 %v61
  %3366 = vmatprep.subr.mxu0 %v58
  %3367 = vmatpush1.msra.mxu0 %v57
  %3368 = vmatprep.subr.mxu0 %v54
  %3369 = vmatpush1.msra.mxu0 %v53
  %3370 = vmatprep.subr.mxu0 %v50
  %3371 = vmatpush1.msra.mxu0 %v49
  %3372 = vmatprep.subr.mxu0 %v46
  %3373 = vmatpush1.msra.mxu0 %v45
  %3374 = vmatprep.subr.mxu0 %v42
  %3375 = vmatpush1.msra.mxu0 %v41
  %3376 = vmatprep.subr.mxu0 %v38
  %3377 = vmatpush1.msra.mxu0 %v37
  %3378 = vmatprep.subr.mxu0 %v34
  %3379 = vmatpush1.msra.mxu0 %v33
  %3380 = vmatprep.subr.mxu0 %v30
  %3381 = vmatpush1.msra.mxu0 %v29
  %3382 = vmatprep.subr.mxu0 %v26
  %3383 = vmatpush1.msra.mxu0 %v25
  %3384 = vmatprep.subr.mxu0 0.0
  %3385 = vmatpush2.msra.mxu0 0.0
  %3386 = vmatprep.subr.mxu0 0.0
  %3387 = vmatpush2.msra.mxu0 0.0
  %3388 = vmatprep.subr.mxu0 0.0
  %3389 = vmatpush2.msra.mxu0 0.0
  %3390 = vmatprep.subr.mxu0 0.0
  %3391 = vmatpush2.msra.mxu0 0.0
  %3392 = vmatprep.subr.mxu0 0.0
  %3393 = vmatpush2.msra.mxu0 0.0
  %3394 = vmatprep.subr.mxu0 0.0
  %3395 = vmatpush2.msra.mxu0 0.0
  %3396 = vmatprep.subr.mxu0 0.0
  %3397 = vmatpush2.msra.mxu0 0.0
  %3398 = vmatprep.subr.mxu0 0.0
  %3399 = vmatpush2.msra.mxu0 0.0
  %3400 = vmatprep.subr.mxu0 0.0
  %3401 = vmatpush2.msra.mxu0 0.0
  %3402 = vmatprep.subr.mxu0 0.0
  %3403 = vmatpush2.msra.mxu0 0.0
  %3404 = vmatprep.subr.mxu0 0.0
  %3405 = vmatpush2.msra.mxu0 0.0
  %3406 = vmatprep.subr.mxu0 0.0
  %3407 = vmatpush2.msra.mxu0 0.0
  %3408 = vmatprep.subr.mxu0 0.0
  %3409 = vmatpush2.msra.mxu0 0.0
  %3410 = vmatprep.subr.mxu0 0.0
  %3411 = vmatpush2.msra.mxu0 0.0
  %3412 = vmatprep.subr.mxu0 0.0
  %3413 = vmatpush2.msra.mxu0 0.0
  %3414 = vmatprep.subr.mxu0 0.0
  %3415 = vmatpush2.msra.mxu0 0.0
  %3416 = vmatprep.mubr.f32.mxu0 0.0
  %3417 = vmatmul.mubr.f32.gmra.mxu0 %v3023
  %v3418 = vpop.f32.mrf.mxu0
  %v3419 = vadd.f32 0.0, %v3418
  %v3420 = vpop.f32.mrf.mxu0
  %v3421 = vadd.f32 0.0, %v3420
  %3422 = vdwg.mxu0
  %3423 = vmatprep.subr.mxu0 %v88
  %3424 = vmatpush1.msra.mxu0 %v87
  %3425 = vmatprep.subr.mxu0 %v84
  %3426 = vmatpush1.msra.mxu0 %v83
  %3427 = vmatprep.subr.mxu0 %v80
  %3428 = vmatpush1.msra.mxu0 %v79
  %3429 = vmatprep.subr.mxu0 %v76
  %3430 = vmatpush1.msra.mxu0 %v75
  %3431 = vmatprep.subr.mxu0 %v72
  %3432 = vmatpush1.msra.mxu0 %v71
  %3433 = vmatprep.subr.mxu0 %v68
  %3434 = vmatpush1.msra.mxu0 %v67
  %3435 = vmatprep.subr.mxu0 %v64
  %3436 = vmatpush1.msra.mxu0 %v63
  %3437 = vmatprep.subr.mxu0 %v60
  %3438 = vmatpush1.msra.mxu0 %v59
  %3439 = vmatprep.subr.mxu0 %v56
  %3440 = vmatpush1.msra.mxu0 %v55
  %3441 = vmatprep.subr.mxu0 %v52
  %3442 = vmatpush1.msra.mxu0 %v51
  %3443 = vmatprep.subr.mxu0 %v48
  %3444 = vmatpush1.msra.mxu0 %v47
  %3445 = vmatprep.subr.mxu0 %v44
  %3446 = vmatpush1.msra.mxu0 %v43
  %3447 = vmatprep.subr.mxu0 %v40
  %3448 = vmatpush1.msra.mxu0 %v39
  %3449 = vmatprep.subr.mxu0 %v36
  %3450 = vmatpush1.msra.mxu0 %v35
  %3451 = vmatprep.subr.mxu0 %v32
  %3452 = vmatpush1.msra.mxu0 %v31
  %3453 = vmatprep.subr.mxu0 %v28
  %3454 = vmatpush1.msra.mxu0 %v27
  %3455 = vmatprep.subr.mxu0 0.0
  %3456 = vmatpush2.msra.mxu0 0.0
  %3457 = vmatprep.subr.mxu0 0.0
  %3458 = vmatpush2.msra.mxu0 0.0
  %3459 = vmatprep.subr.mxu0 0.0
  %3460 = vmatpush2.msra.mxu0 0.0
  %3461 = vmatprep.subr.mxu0 0.0
  %3462 = vmatpush2.msra.mxu0 0.0
  %3463 = vmatprep.subr.mxu0 0.0
  %3464 = vmatpush2.msra.mxu0 0.0
  %3465 = vmatprep.subr.mxu0 0.0
  %3466 = vmatpush2.msra.mxu0 0.0
  %3467 = vmatprep.subr.mxu0 0.0
  %3468 = vmatpush2.msra.mxu0 0.0
  %3469 = vmatprep.subr.mxu0 0.0
  %3470 = vmatpush2.msra.mxu0 0.0
  %3471 = vmatprep.subr.mxu0 0.0
  %3472 = vmatpush2.msra.mxu0 0.0
  %3473 = vmatprep.subr.mxu0 0.0
  %3474 = vmatpush2.msra.mxu0 0.0
  %3475 = vmatprep.subr.mxu0 0.0
  %3476 = vmatpush2.msra.mxu0 0.0
  %3477 = vmatprep.subr.mxu0 0.0
  %3478 = vmatpush2.msra.mxu0 0.0
  %3479 = vmatprep.subr.mxu0 0.0
  %3480 = vmatpush2.msra.mxu0 0.0
  %3481 = vmatprep.subr.mxu0 0.0
  %3482 = vmatpush2.msra.mxu0 0.0
  %3483 = vmatprep.subr.mxu0 0.0
  %3484 = vmatpush2.msra.mxu0 0.0
  %3485 = vmatprep.subr.mxu0 0.0
  %3486 = vmatpush2.msra.mxu0 0.0
  %3487 = vmatprep.mubr.f32.mxu0 0.0
  %3488 = vmatmul.mubr.f32.gmra.mxu0 %v3023
  %v3489 = vpop.f32.mrf.mxu0
  %v3490 = vadd.f32 0.0, %v3489
  %v3491 = vpop.f32.mrf.mxu0
  %v3492 = vadd.f32 0.0, %v3491
  %3493 = vdwg.mxu0
  %v3494 = vadd.f32 %v3348, %v3419
  %v3495 = vadd.f32 %v3349, %v3421
  %v3496 = vadd.f32 %v3350, %v3490
  %v3497 = vadd.f32 %v3351, %v3492
  %v3498 = vxor.u32 %v3494, 2147483648
  %v3499 = vmul.f32 %v3498, 1.442695
  %v3500 = vpow.pop %v3499
  %v3501 = vadd.f32 %v3500, 1.0
  %v3502 = vrcp.pop %v3501
  %v3503 = vmul.f32 1.0, %v3502
  %v3504 = vxor.u32 %v3495, 2147483648
  %v3505 = vmul.f32 %v3504, 1.442695
  %v3506 = vpow.pop %v3505
  %v3507 = vadd.f32 %v3506, 1.0
  %v3508 = vrcp.pop %v3507
  %v3509 = vmul.f32 1.0, %v3508
  %v3510 = vtanh.pop %v3496
  %v3511 = vxor.u32 %v3497, 2147483648
  %v3512 = vmul.f32 %v3511, 1.442695
  %v3513 = vpow.pop %v3512
  %v3514 = vadd.f32 %v3513, 1.0
  %v3515 = vrcp.pop %v3514
  %v3516 = vmul.f32 1.0, %v3515
  %v3517 = vmul.f32 %v3509, %v3021
  %v3518 = vmul.f32 %v3503, %v3510
  %v3519 = vadd.f32 %v3517, %v3518
  %v3520 = vtanh.pop %v3519
  %v3521 = vmul.f32 %v3516, %v3520
  %3522 = vmatprep.subr.mxu0 %v214
  %3523 = vmatpush1.msra.mxu0 %v213
  %3524 = vmatprep.subr.mxu0 %v210
  %3525 = vmatpush1.msra.mxu0 %v209
  %3526 = vmatprep.subr.mxu0 %v206
  %3527 = vmatpush1.msra.mxu0 %v205
  %3528 = vmatprep.subr.mxu0 %v202
  %3529 = vmatpush1.msra.mxu0 %v201
  %3530 = vmatprep.subr.mxu0 %v198
  %3531 = vmatpush1.msra.mxu0 %v197
  %3532 = vmatprep.subr.mxu0 %v194
  %3533 = vmatpush1.msra.mxu0 %v193
  %3534 = vmatprep.subr.mxu0 %v190
  %3535 = vmatpush1.msra.mxu0 %v189
  %3536 = vmatprep.subr.mxu0 %v186
  %3537 = vmatpush1.msra.mxu0 %v185
  %3538 = vmatprep.subr.mxu0 %v182
  %3539 = vmatpush1.msra.mxu0 %v181
  %3540 = vmatprep.subr.mxu0 %v178
  %3541 = vmatpush1.msra.mxu0 %v177
  %3542 = vmatprep.subr.mxu0 %v174
  %3543 = vmatpush1.msra.mxu0 %v173
  %3544 = vmatprep.subr.mxu0 %v170
  %3545 = vmatpush1.msra.mxu0 %v169
  %3546 = vmatprep.subr.mxu0 %v166
  %3547 = vmatpush1.msra.mxu0 %v165
  %3548 = vmatprep.subr.mxu0 %v162
  %3549 = vmatpush1.msra.mxu0 %v161
  %3550 = vmatprep.subr.mxu0 %v158
  %3551 = vmatpush1.msra.mxu0 %v157
  %3552 = vmatprep.subr.mxu0 %v154
  %3553 = vmatpush1.msra.mxu0 %v153
  %3554 = vmatprep.subr.mxu0 0.0
  %3555 = vmatpush2.msra.mxu0 0.0
  %3556 = vmatprep.subr.mxu0 0.0
  %3557 = vmatpush2.msra.mxu0 0.0
  %3558 = vmatprep.subr.mxu0 0.0
  %3559 = vmatpush2.msra.mxu0 0.0
  %3560 = vmatprep.subr.mxu0 0.0
  %3561 = vmatpush2.msra.mxu0 0.0
  %3562 = vmatprep.subr.mxu0 0.0
  %3563 = vmatpush2.msra.mxu0 0.0
  %3564 = vmatprep.subr.mxu0 0.0
  %3565 = vmatpush2.msra.mxu0 0.0
  %3566 = vmatprep.subr.mxu0 0.0
  %3567 = vmatpush2.msra.mxu0 0.0
  %3568 = vmatprep.subr.mxu0 0.0
  %3569 = vmatpush2.msra.mxu0 0.0
  %3570 = vmatprep.subr.mxu0 0.0
  %3571 = vmatpush2.msra.mxu0 0.0
  %3572 = vmatprep.subr.mxu0 0.0
  %3573 = vmatpush2.msra.mxu0 0.0
  %3574 = vmatprep.subr.mxu0 0.0
  %3575 = vmatpush2.msra.mxu0 0.0
  %3576 = vmatprep.subr.mxu0 0.0
  %3577 = vmatpush2.msra.mxu0 0.0
  %3578 = vmatprep.subr.mxu0 0.0
  %3579 = vmatpush2.msra.mxu0 0.0
  %3580 = vmatprep.subr.mxu0 0.0
  %3581 = vmatpush2.msra.mxu0 0.0
  %3582 = vmatprep.subr.mxu0 0.0
  %3583 = vmatpush2.msra.mxu0 0.0
  %3584 = vmatprep.subr.mxu0 0.0
  %3585 = vmatpush2.msra.mxu0 0.0
  %3586 = vmatprep.mubr.f32.mxu0 0.0
  %3587 = vmatmul.mubr.f32.gmra.mxu0 %v3339
  %v3588 = vpop.f32.mrf.mxu0
  %v3589 = vadd.f32 0.0, %v3588
  %v3590 = vpop.f32.mrf.mxu0
  %v3591 = vadd.f32 0.0, %v3590
  %3592 = vdwg.mxu0
  %3593 = vmatprep.subr.mxu0 %v216
  %3594 = vmatpush1.msra.mxu0 %v215
  %3595 = vmatprep.subr.mxu0 %v212
  %3596 = vmatpush1.msra.mxu0 %v211
  %3597 = vmatprep.subr.mxu0 %v208
  %3598 = vmatpush1.msra.mxu0 %v207
  %3599 = vmatprep.subr.mxu0 %v204
  %3600 = vmatpush1.msra.mxu0 %v203
  %3601 = vmatprep.subr.mxu0 %v200
  %3602 = vmatpush1.msra.mxu0 %v199
  %3603 = vmatprep.subr.mxu0 %v196
  %3604 = vmatpush1.msra.mxu0 %v195
  %3605 = vmatprep.subr.mxu0 %v192
  %3606 = vmatpush1.msra.mxu0 %v191
  %3607 = vmatprep.subr.mxu0 %v188
  %3608 = vmatpush1.msra.mxu0 %v187
  %3609 = vmatprep.subr.mxu0 %v184
  %3610 = vmatpush1.msra.mxu0 %v183
  %3611 = vmatprep.subr.mxu0 %v180
  %3612 = vmatpush1.msra.mxu0 %v179
  %3613 = vmatprep.subr.mxu0 %v176
  %3614 = vmatpush1.msra.mxu0 %v175
  %3615 = vmatprep.subr.mxu0 %v172
  %3616 = vmatpush1.msra.mxu0 %v171
  %3617 = vmatprep.subr.mxu0 %v168
  %3618 = vmatpush1.msra.mxu0 %v167
  %3619 = vmatprep.subr.mxu0 %v164
  %3620 = vmatpush1.msra.mxu0 %v163
  %3621 = vmatprep.subr.mxu0 %v160
  %3622 = vmatpush1.msra.mxu0 %v159
  %3623 = vmatprep.subr.mxu0 %v156
  %3624 = vmatpush1.msra.mxu0 %v155
  %3625 = vmatprep.subr.mxu0 0.0
  %3626 = vmatpush2.msra.mxu0 0.0
  %3627 = vmatprep.subr.mxu0 0.0
  %3628 = vmatpush2.msra.mxu0 0.0
  %3629 = vmatprep.subr.mxu0 0.0
  %3630 = vmatpush2.msra.mxu0 0.0
  %3631 = vmatprep.subr.mxu0 0.0
  %3632 = vmatpush2.msra.mxu0 0.0
  %3633 = vmatprep.subr.mxu0 0.0
  %3634 = vmatpush2.msra.mxu0 0.0
  %3635 = vmatprep.subr.mxu0 0.0
  %3636 = vmatpush2.msra.mxu0 0.0
  %3637 = vmatprep.subr.mxu0 0.0
  %3638 = vmatpush2.msra.mxu0 0.0
  %3639 = vmatprep.subr.mxu0 0.0
  %3640 = vmatpush2.msra.mxu0 0.0
  %3641 = vmatprep.subr.mxu0 0.0
  %3642 = vmatpush2.msra.mxu0 0.0
  %3643 = vmatprep.subr.mxu0 0.0
  %3644 = vmatpush2.msra.mxu0 0.0
  %3645 = vmatprep.subr.mxu0 0.0
  %3646 = vmatpush2.msra.mxu0 0.0
  %3647 = vmatprep.subr.mxu0 0.0
  %3648 = vmatpush2.msra.mxu0 0.0
  %3649 = vmatprep.subr.mxu0 0.0
  %3650 = vmatpush2.msra.mxu0 0.0
  %3651 = vmatprep.subr.mxu0 0.0
  %3652 = vmatpush2.msra.mxu0 0.0
  %3653 = vmatprep.subr.mxu0 0.0
  %3654 = vmatpush2.msra.mxu0 0.0
  %3655 = vmatprep.subr.mxu0 0.0
  %3656 = vmatpush2.msra.mxu0 0.0
  %3657 = vmatprep.mubr.f32.mxu0 0.0
  %3658 = vmatmul.mubr.f32.gmra.mxu0 %v3339
  %v3659 = vpop.f32.mrf.mxu0
  %v3660 = vadd.f32 0.0, %v3659
  %v3661 = vpop.f32.mrf.mxu0
  %v3662 = vadd.f32 0.0, %v3661
  %3663 = vdwg.mxu0
  %v3664 = vadd.f32 %v659, %v3589
  %v3665 = vadd.f32 %v663, %v3591
  %v3666 = vadd.f32 %v667, %v3660
  %v3667 = vadd.f32 %v671, %v3662
  %3668 = vmatprep.subr.mxu0 %v150
  %3669 = vmatpush1.msra.mxu0 %v149
  %3670 = vmatprep.subr.mxu0 %v146
  %3671 = vmatpush1.msra.mxu0 %v145
  %3672 = vmatprep.subr.mxu0 %v142
  %3673 = vmatpush1.msra.mxu0 %v141
  %3674 = vmatprep.subr.mxu0 %v138
  %3675 = vmatpush1.msra.mxu0 %v137
  %3676 = vmatprep.subr.mxu0 %v134
  %3677 = vmatpush1.msra.mxu0 %v133
  %3678 = vmatprep.subr.mxu0 %v130
  %3679 = vmatpush1.msra.mxu0 %v129
  %3680 = vmatprep.subr.mxu0 %v126
  %3681 = vmatpush1.msra.mxu0 %v125
  %3682 = vmatprep.subr.mxu0 %v122
  %3683 = vmatpush1.msra.mxu0 %v121
  %3684 = vmatprep.subr.mxu0 %v118
  %3685 = vmatpush1.msra.mxu0 %v117
  %3686 = vmatprep.subr.mxu0 %v114
  %3687 = vmatpush1.msra.mxu0 %v113
  %3688 = vmatprep.subr.mxu0 %v110
  %3689 = vmatpush1.msra.mxu0 %v109
  %3690 = vmatprep.subr.mxu0 %v106
  %3691 = vmatpush1.msra.mxu0 %v105
  %3692 = vmatprep.subr.mxu0 %v102
  %3693 = vmatpush1.msra.mxu0 %v101
  %3694 = vmatprep.subr.mxu0 %v98
  %3695 = vmatpush1.msra.mxu0 %v97
  %3696 = vmatprep.subr.mxu0 %v94
  %3697 = vmatpush1.msra.mxu0 %v93
  %3698 = vmatprep.subr.mxu0 %v90
  %3699 = vmatpush1.msra.mxu0 %v89
  %3700 = vmatprep.subr.mxu0 0.0
  %3701 = vmatpush2.msra.mxu0 0.0
  %3702 = vmatprep.subr.mxu0 0.0
  %3703 = vmatpush2.msra.mxu0 0.0
  %3704 = vmatprep.subr.mxu0 0.0
  %3705 = vmatpush2.msra.mxu0 0.0
  %3706 = vmatprep.subr.mxu0 0.0
  %3707 = vmatpush2.msra.mxu0 0.0
  %3708 = vmatprep.subr.mxu0 0.0
  %3709 = vmatpush2.msra.mxu0 0.0
  %3710 = vmatprep.subr.mxu0 0.0
  %3711 = vmatpush2.msra.mxu0 0.0
  %3712 = vmatprep.subr.mxu0 0.0
  %3713 = vmatpush2.msra.mxu0 0.0
  %3714 = vmatprep.subr.mxu0 0.0
  %3715 = vmatpush2.msra.mxu0 0.0
  %3716 = vmatprep.subr.mxu0 0.0
  %3717 = vmatpush2.msra.mxu0 0.0
  %3718 = vmatprep.subr.mxu0 0.0
  %3719 = vmatpush2.msra.mxu0 0.0
  %3720 = vmatprep.subr.mxu0 0.0
  %3721 = vmatpush2.msra.mxu0 0.0
  %3722 = vmatprep.subr.mxu0 0.0
  %3723 = vmatpush2.msra.mxu0 0.0
  %3724 = vmatprep.subr.mxu0 0.0
  %3725 = vmatpush2.msra.mxu0 0.0
  %3726 = vmatprep.subr.mxu0 0.0
  %3727 = vmatpush2.msra.mxu0 0.0
  %3728 = vmatprep.subr.mxu0 0.0
  %3729 = vmatpush2.msra.mxu0 0.0
  %3730 = vmatprep.subr.mxu0 0.0
  %3731 = vmatpush2.msra.mxu0 0.0
  %3732 = vmatprep.mubr.f32.mxu0 0.0
  %3733 = vmatmul.mubr.f32.gmra.mxu0 %v3521
  %v3734 = vpop.f32.mrf.mxu0
  %v3735 = vadd.f32 0.0, %v3734
  %v3736 = vpop.f32.mrf.mxu0
  %v3737 = vadd.f32 0.0, %v3736
  %3738 = vdwg.mxu0
  %3739 = vmatprep.subr.mxu0 %v152
  %3740 = vmatpush1.msra.mxu0 %v151
  %3741 = vmatprep.subr.mxu0 %v148
  %3742 = vmatpush1.msra.mxu0 %v147
  %3743 = vmatprep.subr.mxu0 %v144
  %3744 = vmatpush1.msra.mxu0 %v143
  %3745 = vmatprep.subr.mxu0 %v140
  %3746 = vmatpush1.msra.mxu0 %v139
  %3747 = vmatprep.subr.mxu0 %v136
  %3748 = vmatpush1.msra.mxu0 %v135
  %3749 = vmatprep.subr.mxu0 %v132
  %3750 = vmatpush1.msra.mxu0 %v131
  %3751 = vmatprep.subr.mxu0 %v128
  %3752 = vmatpush1.msra.mxu0 %v127
  %3753 = vmatprep.subr.mxu0 %v124
  %3754 = vmatpush1.msra.mxu0 %v123
  %3755 = vmatprep.subr.mxu0 %v120
  %3756 = vmatpush1.msra.mxu0 %v119
  %3757 = vmatprep.subr.mxu0 %v116
  %3758 = vmatpush1.msra.mxu0 %v115
  %3759 = vmatprep.subr.mxu0 %v112
  %3760 = vmatpush1.msra.mxu0 %v111
  %3761 = vmatprep.subr.mxu0 %v108
  %3762 = vmatpush1.msra.mxu0 %v107
  %3763 = vmatprep.subr.mxu0 %v104
  %3764 = vmatpush1.msra.mxu0 %v103
  %3765 = vmatprep.subr.mxu0 %v100
  %3766 = vmatpush1.msra.mxu0 %v99
  %3767 = vmatprep.subr.mxu0 %v96
  %3768 = vmatpush1.msra.mxu0 %v95
  %3769 = vmatprep.subr.mxu0 %v92
  %3770 = vmatpush1.msra.mxu0 %v91
  %3771 = vmatprep.subr.mxu0 0.0
  %3772 = vmatpush2.msra.mxu0 0.0
  %3773 = vmatprep.subr.mxu0 0.0
  %3774 = vmatpush2.msra.mxu0 0.0
  %3775 = vmatprep.subr.mxu0 0.0
  %3776 = vmatpush2.msra.mxu0 0.0
  %3777 = vmatprep.subr.mxu0 0.0
  %3778 = vmatpush2.msra.mxu0 0.0
  %3779 = vmatprep.subr.mxu0 0.0
  %3780 = vmatpush2.msra.mxu0 0.0
  %3781 = vmatprep.subr.mxu0 0.0
  %3782 = vmatpush2.msra.mxu0 0.0
  %3783 = vmatprep.subr.mxu0 0.0
  %3784 = vmatpush2.msra.mxu0 0.0
  %3785 = vmatprep.subr.mxu0 0.0
  %3786 = vmatpush2.msra.mxu0 0.0
  %3787 = vmatprep.subr.mxu0 0.0
  %3788 = vmatpush2.msra.mxu0 0.0
  %3789 = vmatprep.subr.mxu0 0.0
  %3790 = vmatpush2.msra.mxu0 0.0
  %3791 = vmatprep.subr.mxu0 0.0
  %3792 = vmatpush2.msra.mxu0 0.0
  %3793 = vmatprep.subr.mxu0 0.0
  %3794 = vmatpush2.msra.mxu0 0.0
  %3795 = vmatprep.subr.mxu0 0.0
  %3796 = vmatpush2.msra.mxu0 0.0
  %3797 = vmatprep.subr.mxu0 0.0
  %3798 = vmatpush2.msra.mxu0 0.0
  %3799 = vmatprep.subr.mxu0 0.0
  %3800 = vmatpush2.msra.mxu0 0.0
  %3801 = vmatprep.subr.mxu0 0.0
  %3802 = vmatpush2.msra.mxu0 0.0
  %3803 = vmatprep.mubr.f32.mxu0 0.0
  %3804 = vmatmul.mubr.f32.gmra.mxu0 %v3521
  %v3805 = vpop.f32.mrf.mxu0
  %v3806 = vadd.f32 0.0, %v3805
  %v3807 = vpop.f32.mrf.mxu0
  %v3808 = vadd.f32 0.0, %v3807
  %3809 = vdwg.mxu0
  %v3810 = vadd.f32 %v3664, %v3735
  %v3811 = vadd.f32 %v3665, %v3737
  %v3812 = vadd.f32 %v3666, %v3806
  %v3813 = vadd.f32 %v3667, %v3808
  %v3814 = vxor.u32 %v3810, 2147483648
  %v3815 = vmul.f32 %v3814, 1.442695
  %v3816 = vpow.pop %v3815
  %v3817 = vadd.f32 %v3816, 1.0
  %v3818 = vrcp.pop %v3817
  %v3819 = vmul.f32 1.0, %v3818
  %v3820 = vxor.u32 %v3811, 2147483648
  %v3821 = vmul.f32 %v3820, 1.442695
  %v3822 = vpow.pop %v3821
  %v3823 = vadd.f32 %v3822, 1.0
  %v3824 = vrcp.pop %v3823
  %v3825 = vmul.f32 1.0, %v3824
  %v3826 = vtanh.pop %v3812
  %v3827 = vxor.u32 %v3813, 2147483648
  %v3828 = vmul.f32 %v3827, 1.442695
  %v3829 = vpow.pop %v3828
  %v3830 = vadd.f32 %v3829, 1.0
  %v3831 = vrcp.pop %v3830
  %v3832 = vmul.f32 1.0, %v3831
  %v3833 = vmul.f32 %v3825, %v3337
  %v3834 = vmul.f32 %v3819, %v3826
  %v3835 = vadd.f32 %v3833, %v3834
  %v3836 = vtanh.pop %v3835
  %v3837 = vmul.f32 %v3832, %v3836
  %3838 = vset.pattern.permute.xlu0 7
  %3839 = vperm.xlu0 %3838, %v286
  %v3840 = vpop.permute.xlu0 %3839
  %v3842 = vmul.f32 %v3840, %v297
  %v3843 = vmul.f32 %v3840, %v301
  %v3844 = vmul.f32 %v3840, %v305
  %v3845 = vmul.f32 %v3840, %v309
  %v3846 = vadd.f32 %v322, %v3842
  %v3847 = vadd.f32 %v326, %v3843
  %v3848 = vadd.f32 %v330, %v3844
  %v3849 = vadd.f32 %v334, %v3845
  %3850 = vmatprep.subr.mxu0 %v86
  %3851 = vmatpush1.msra.mxu0 %v85
  %3852 = vmatprep.subr.mxu0 %v82
  %3853 = vmatpush1.msra.mxu0 %v81
  %3854 = vmatprep.subr.mxu0 %v78
  %3855 = vmatpush1.msra.mxu0 %v77
  %3856 = vmatprep.subr.mxu0 %v74
  %3857 = vmatpush1.msra.mxu0 %v73
  %3858 = vmatprep.subr.mxu0 %v70
  %3859 = vmatpush1.msra.mxu0 %v69
  %3860 = vmatprep.subr.mxu0 %v66
  %3861 = vmatpush1.msra.mxu0 %v65
  %3862 = vmatprep.subr.mxu0 %v62
  %3863 = vmatpush1.msra.mxu0 %v61
  %3864 = vmatprep.subr.mxu0 %v58
  %3865 = vmatpush1.msra.mxu0 %v57
  %3866 = vmatprep.subr.mxu0 %v54
  %3867 = vmatpush1.msra.mxu0 %v53
  %3868 = vmatprep.subr.mxu0 %v50
  %3869 = vmatpush1.msra.mxu0 %v49
  %3870 = vmatprep.subr.mxu0 %v46
  %3871 = vmatpush1.msra.mxu0 %v45
  %3872 = vmatprep.subr.mxu0 %v42
  %3873 = vmatpush1.msra.mxu0 %v41
  %3874 = vmatprep.subr.mxu0 %v38
  %3875 = vmatpush1.msra.mxu0 %v37
  %3876 = vmatprep.subr.mxu0 %v34
  %3877 = vmatpush1.msra.mxu0 %v33
  %3878 = vmatprep.subr.mxu0 %v30
  %3879 = vmatpush1.msra.mxu0 %v29
  %3880 = vmatprep.subr.mxu0 %v26
  %3881 = vmatpush1.msra.mxu0 %v25
  %3882 = vmatprep.subr.mxu0 0.0
  %3883 = vmatpush2.msra.mxu0 0.0
  %3884 = vmatprep.subr.mxu0 0.0
  %3885 = vmatpush2.msra.mxu0 0.0
  %3886 = vmatprep.subr.mxu0 0.0
  %3887 = vmatpush2.msra.mxu0 0.0
  %3888 = vmatprep.subr.mxu0 0.0
  %3889 = vmatpush2.msra.mxu0 0.0
  %3890 = vmatprep.subr.mxu0 0.0
  %3891 = vmatpush2.msra.mxu0 0.0
  %3892 = vmatprep.subr.mxu0 0.0
  %3893 = vmatpush2.msra.mxu0 0.0
  %3894 = vmatprep.subr.mxu0 0.0
  %3895 = vmatpush2.msra.mxu0 0.0
  %3896 = vmatprep.subr.mxu0 0.0
  %3897 = vmatpush2.msra.mxu0 0.0
  %3898 = vmatprep.subr.mxu0 0.0
  %3899 = vmatpush2.msra.mxu0 0.0
  %3900 = vmatprep.subr.mxu0 0.0
  %3901 = vmatpush2.msra.mxu0 0.0
  %3902 = vmatprep.subr.mxu0 0.0
  %3903 = vmatpush2.msra.mxu0 0.0
  %3904 = vmatprep.subr.mxu0 0.0
  %3905 = vmatpush2.msra.mxu0 0.0
  %3906 = vmatprep.subr.mxu0 0.0
  %3907 = vmatpush2.msra.mxu0 0.0
  %3908 = vmatprep.subr.mxu0 0.0
  %3909 = vmatpush2.msra.mxu0 0.0
  %3910 = vmatprep.subr.mxu0 0.0
  %3911 = vmatpush2.msra.mxu0 0.0
  %3912 = vmatprep.subr.mxu0 0.0
  %3913 = vmatpush2.msra.mxu0 0.0
  %3914 = vmatprep.mubr.f32.mxu0 0.0
  %3915 = vmatmul.mubr.f32.gmra.mxu0 %v3521
  %v3916 = vpop.f32.mrf.mxu0
  %v3917 = vadd.f32 0.0, %v3916
  %v3918 = vpop.f32.mrf.mxu0
  %v3919 = vadd.f32 0.0, %v3918
  %3920 = vdwg.mxu0
  %3921 = vmatprep.subr.mxu0 %v88
  %3922 = vmatpush1.msra.mxu0 %v87
  %3923 = vmatprep.subr.mxu0 %v84
  %3924 = vmatpush1.msra.mxu0 %v83
  %3925 = vmatprep.subr.mxu0 %v80
  %3926 = vmatpush1.msra.mxu0 %v79
  %3927 = vmatprep.subr.mxu0 %v76
  %3928 = vmatpush1.msra.mxu0 %v75
  %3929 = vmatprep.subr.mxu0 %v72
  %3930 = vmatpush1.msra.mxu0 %v71
  %3931 = vmatprep.subr.mxu0 %v68
  %3932 = vmatpush1.msra.mxu0 %v67
  %3933 = vmatprep.subr.mxu0 %v64
  %3934 = vmatpush1.msra.mxu0 %v63
  %3935 = vmatprep.subr.mxu0 %v60
  %3936 = vmatpush1.msra.mxu0 %v59
  %3937 = vmatprep.subr.mxu0 %v56
  %3938 = vmatpush1.msra.mxu0 %v55
  %3939 = vmatprep.subr.mxu0 %v52
  %3940 = vmatpush1.msra.mxu0 %v51
  %3941 = vmatprep.subr.mxu0 %v48
  %3942 = vmatpush1.msra.mxu0 %v47
  %3943 = vmatprep.subr.mxu0 %v44
  %3944 = vmatpush1.msra.mxu0 %v43
  %3945 = vmatprep.subr.mxu0 %v40
  %3946 = vmatpush1.msra.mxu0 %v39
  %3947 = vmatprep.subr.mxu0 %v36
  %3948 = vmatpush1.msra.mxu0 %v35
  %3949 = vmatprep.subr.mxu0 %v32
  %3950 = vmatpush1.msra.mxu0 %v31
  %3951 = vmatprep.subr.mxu0 %v28
  %3952 = vmatpush1.msra.mxu0 %v27
  %3953 = vmatprep.subr.mxu0 0.0
  %3954 = vmatpush2.msra.mxu0 0.0
  %3955 = vmatprep.subr.mxu0 0.0
  %3956 = vmatpush2.msra.mxu0 0.0
  %3957 = vmatprep.subr.mxu0 0.0
  %3958 = vmatpush2.msra.mxu0 0.0
  %3959 = vmatprep.subr.mxu0 0.0
  %3960 = vmatpush2.msra.mxu0 0.0
  %3961 = vmatprep.subr.mxu0 0.0
  %3962 = vmatpush2.msra.mxu0 0.0
  %3963 = vmatprep.subr.mxu0 0.0
  %3964 = vmatpush2.msra.mxu0 0.0
  %3965 = vmatprep.subr.mxu0 0.0
  %3966 = vmatpush2.msra.mxu0 0.0
  %3967 = vmatprep.subr.mxu0 0.0
  %3968 = vmatpush2.msra.mxu0 0.0
  %3969 = vmatprep.subr.mxu0 0.0
  %3970 = vmatpush2.msra.mxu0 0.0
  %3971 = vmatprep.subr.mxu0 0.0
  %3972 = vmatpush2.msra.mxu0 0.0
  %3973 = vmatprep.subr.mxu0 0.0
  %3974 = vmatpush2.msra.mxu0 0.0
  %3975 = vmatprep.subr.mxu0 0.0
  %3976 = vmatpush2.msra.mxu0 0.0
  %3977 = vmatprep.subr.mxu0 0.0
  %3978 = vmatpush2.msra.mxu0 0.0
  %3979 = vmatprep.subr.mxu0 0.0
  %3980 = vmatpush2.msra.mxu0 0.0
  %3981 = vmatprep.subr.mxu0 0.0
  %3982 = vmatpush2.msra.mxu0 0.0
  %3983 = vmatprep.subr.mxu0 0.0
  %3984 = vmatpush2.msra.mxu0 0.0
  %3985 = vmatprep.mubr.f32.mxu0 0.0
  %3986 = vmatmul.mubr.f32.gmra.mxu0 %v3521
  %v3987 = vpop.f32.mrf.mxu0
  %v3988 = vadd.f32 0.0, %v3987
  %v3989 = vpop.f32.mrf.mxu0
  %v3990 = vadd.f32 0.0, %v3989
  %3991 = vdwg.mxu0
  %v3992 = vadd.f32 %v3846, %v3917
  %v3993 = vadd.f32 %v3847, %v3919
  %v3994 = vadd.f32 %v3848, %v3988
  %v3995 = vadd.f32 %v3849, %v3990
  %v3996 = vxor.u32 %v3992, 2147483648
  %v3997 = vmul.f32 %v3996, 1.442695
  %v3998 = vpow.pop %v3997
  %v3999 = vadd.f32 %v3998, 1.0
  %v4000 = vrcp.pop %v3999
  %v4001 = vmul.f32 1.0, %v4000
  %v4002 = vxor.u32 %v3993, 2147483648
  %v4003 = vmul.f32 %v4002, 1.442695
  %v4004 = vpow.pop %v4003
  %v4005 = vadd.f32 %v4004, 1.0
  %v4006 = vrcp.pop %v4005
  %v4007 = vmul.f32 1.0, %v4006
  %v4008 = vtanh.pop %v3994
  %v4009 = vxor.u32 %v3995, 2147483648
  %v4010 = vmul.f32 %v4009, 1.442695
  %v4011 = vpow.pop %v4010
  %v4012 = vadd.f32 %v4011, 1.0
  %v4013 = vrcp.pop %v4012
  %v4014 = vmul.f32 1.0, %v4013
  %v4015 = vmul.f32 %v4007, %v3519
  %v4016 = vmul.f32 %v4001, %v4008
  %v4017 = vadd.f32 %v4015, %v4016
  %v4018 = vtanh.pop %v4017
  %v4019 = vmul.f32 %v4014, %v4018
  %4020 = vmatprep.subr.mxu0 %v214
  %4021 = vmatpush1.msra.mxu0 %v213
  %4022 = vmatprep.subr.mxu0 %v210
  %4023 = vmatpush1.msra.mxu0 %v209
  %4024 = vmatprep.subr.mxu0 %v206
  %4025 = vmatpush1.msra.mxu0 %v205
  %4026 = vmatprep.subr.mxu0 %v202
  %4027 = vmatpush1.msra.mxu0 %v201
  %4028 = vmatprep.subr.mxu0 %v198
  %4029 = vmatpush1.msra.mxu0 %v197
  %4030 = vmatprep.subr.mxu0 %v194
  %4031 = vmatpush1.msra.mxu0 %v193
  %4032 = vmatprep.subr.mxu0 %v190
  %4033 = vmatpush1.msra.mxu0 %v189
  %4034 = vmatprep.subr.mxu0 %v186
  %4035 = vmatpush1.msra.mxu0 %v185
  %4036 = vmatprep.subr.mxu0 %v182
  %4037 = vmatpush1.msra.mxu0 %v181
  %4038 = vmatprep.subr.mxu0 %v178
  %4039 = vmatpush1.msra.mxu0 %v177
  %4040 = vmatprep.subr.mxu0 %v174
  %4041 = vmatpush1.msra.mxu0 %v173
  %4042 = vmatprep.subr.mxu0 %v170
  %4043 = vmatpush1.msra.mxu0 %v169
  %4044 = vmatprep.subr.mxu0 %v166
  %4045 = vmatpush1.msra.mxu0 %v165
  %4046 = vmatprep.subr.mxu0 %v162
  %4047 = vmatpush1.msra.mxu0 %v161
  %4048 = vmatprep.subr.mxu0 %v158
  %4049 = vmatpush1.msra.mxu0 %v157
  %4050 = vmatprep.subr.mxu0 %v154
  %4051 = vmatpush1.msra.mxu0 %v153
  %4052 = vmatprep.subr.mxu0 0.0
  %4053 = vmatpush2.msra.mxu0 0.0
  %4054 = vmatprep.subr.mxu0 0.0
  %4055 = vmatpush2.msra.mxu0 0.0
  %4056 = vmatprep.subr.mxu0 0.0
  %4057 = vmatpush2.msra.mxu0 0.0
  %4058 = vmatprep.subr.mxu0 0.0
  %4059 = vmatpush2.msra.mxu0 0.0
  %4060 = vmatprep.subr.mxu0 0.0
  %4061 = vmatpush2.msra.mxu0 0.0
  %4062 = vmatprep.subr.mxu0 0.0
  %4063 = vmatpush2.msra.mxu0 0.0
  %4064 = vmatprep.subr.mxu0 0.0
  %4065 = vmatpush2.msra.mxu0 0.0
  %4066 = vmatprep.subr.mxu0 0.0
  %4067 = vmatpush2.msra.mxu0 0.0
  %4068 = vmatprep.subr.mxu0 0.0
  %4069 = vmatpush2.msra.mxu0 0.0
  %4070 = vmatprep.subr.mxu0 0.0
  %4071 = vmatpush2.msra.mxu0 0.0
  %4072 = vmatprep.subr.mxu0 0.0
  %4073 = vmatpush2.msra.mxu0 0.0
  %4074 = vmatprep.subr.mxu0 0.0
  %4075 = vmatpush2.msra.mxu0 0.0
  %4076 = vmatprep.subr.mxu0 0.0
  %4077 = vmatpush2.msra.mxu0 0.0
  %4078 = vmatprep.subr.mxu0 0.0
  %4079 = vmatpush2.msra.mxu0 0.0
  %4080 = vmatprep.subr.mxu0 0.0
  %4081 = vmatpush2.msra.mxu0 0.0
  %4082 = vmatprep.subr.mxu0 0.0
  %4083 = vmatpush2.msra.mxu0 0.0
  %4084 = vmatprep.mubr.f32.mxu0 0.0
  %4085 = vmatmul.mubr.f32.gmra.mxu0 %v3837
  %v4086 = vpop.f32.mrf.mxu0
  %v4087 = vadd.f32 0.0, %v4086
  %v4088 = vpop.f32.mrf.mxu0
  %v4089 = vadd.f32 0.0, %v4088
  %4090 = vdwg.mxu0
  %4091 = vmatprep.subr.mxu0 %v216
  %4092 = vmatpush1.msra.mxu0 %v215
  %4093 = vmatprep.subr.mxu0 %v212
  %4094 = vmatpush1.msra.mxu0 %v211
  %4095 = vmatprep.subr.mxu0 %v208
  %4096 = vmatpush1.msra.mxu0 %v207
  %4097 = vmatprep.subr.mxu0 %v204
  %4098 = vmatpush1.msra.mxu0 %v203
  %4099 = vmatprep.subr.mxu0 %v200
  %4100 = vmatpush1.msra.mxu0 %v199
  %4101 = vmatprep.subr.mxu0 %v196
  %4102 = vmatpush1.msra.mxu0 %v195
  %4103 = vmatprep.subr.mxu0 %v192
  %4104 = vmatpush1.msra.mxu0 %v191
  %4105 = vmatprep.subr.mxu0 %v188
  %4106 = vmatpush1.msra.mxu0 %v187
  %4107 = vmatprep.subr.mxu0 %v184
  %4108 = vmatpush1.msra.mxu0 %v183
  %4109 = vmatprep.subr.mxu0 %v180
  %4110 = vmatpush1.msra.mxu0 %v179
  %4111 = vmatprep.subr.mxu0 %v176
  %4112 = vmatpush1.msra.mxu0 %v175
  %4113 = vmatprep.subr.mxu0 %v172
  %4114 = vmatpush1.msra.mxu0 %v171
  %4115 = vmatprep.subr.mxu0 %v168
  %4116 = vmatpush1.msra.mxu0 %v167
  %4117 = vmatprep.subr.mxu0 %v164
  %4118 = vmatpush1.msra.mxu0 %v163
  %4119 = vmatprep.subr.mxu0 %v160
  %4120 = vmatpush1.msra.mxu0 %v159
  %4121 = vmatprep.subr.mxu0 %v156
  %4122 = vmatpush1.msra.mxu0 %v155
  %4123 = vmatprep.subr.mxu0 0.0
  %4124 = vmatpush2.msra.mxu0 0.0
  %4125 = vmatprep.subr.mxu0 0.0
  %4126 = vmatpush2.msra.mxu0 0.0
  %4127 = vmatprep.subr.mxu0 0.0
  %4128 = vmatpush2.msra.mxu0 0.0
  %4129 = vmatprep.subr.mxu0 0.0
  %4130 = vmatpush2.msra.mxu0 0.0
  %4131 = vmatprep.subr.mxu0 0.0
  %4132 = vmatpush2.msra.mxu0 0.0
  %4133 = vmatprep.subr.mxu0 0.0
  %4134 = vmatpush2.msra.mxu0 0.0
  %4135 = vmatprep.subr.mxu0 0.0
  %4136 = vmatpush2.msra.mxu0 0.0
  %4137 = vmatprep.subr.mxu0 0.0
  %4138 = vmatpush2.msra.mxu0 0.0
  %4139 = vmatprep.subr.mxu0 0.0
  %4140 = vmatpush2.msra.mxu0 0.0
  %4141 = vmatprep.subr.mxu0 0.0
  %4142 = vmatpush2.msra.mxu0 0.0
  %4143 = vmatprep.subr.mxu0 0.0
  %4144 = vmatpush2.msra.mxu0 0.0
  %4145 = vmatprep.subr.mxu0 0.0
  %4146 = vmatpush2.msra.mxu0 0.0
  %4147 = vmatprep.subr.mxu0 0.0
  %4148 = vmatpush2.msra.mxu0 0.0
  %4149 = vmatprep.subr.mxu0 0.0
  %4150 = vmatpush2.msra.mxu0 0.0
  %4151 = vmatprep.subr.mxu0 0.0
  %4152 = vmatpush2.msra.mxu0 0.0
  %4153 = vmatprep.subr.mxu0 0.0
  %4154 = vmatpush2.msra.mxu0 0.0
  %4155 = vmatprep.mubr.f32.mxu0 0.0
  %4156 = vmatmul.mubr.f32.gmra.mxu0 %v3837
  %v4157 = vpop.f32.mrf.mxu0
  %v4158 = vadd.f32 0.0, %v4157
  %v4159 = vpop.f32.mrf.mxu0
  %v4160 = vadd.f32 0.0, %v4159
  %4161 = vdwg.mxu0
  %v4162 = vadd.f32 %v659, %v4087
  %v4163 = vadd.f32 %v663, %v4089
  %v4164 = vadd.f32 %v667, %v4158
  %v4165 = vadd.f32 %v671, %v4160
  %4166 = vmatprep.subr.mxu0 %v150
  %4167 = vmatpush1.msra.mxu0 %v149
  %4168 = vmatprep.subr.mxu0 %v146
  %4169 = vmatpush1.msra.mxu0 %v145
  %4170 = vmatprep.subr.mxu0 %v142
  %4171 = vmatpush1.msra.mxu0 %v141
  %4172 = vmatprep.subr.mxu0 %v138
  %4173 = vmatpush1.msra.mxu0 %v137
  %4174 = vmatprep.subr.mxu0 %v134
  %4175 = vmatpush1.msra.mxu0 %v133
  %4176 = vmatprep.subr.mxu0 %v130
  %4177 = vmatpush1.msra.mxu0 %v129
  %4178 = vmatprep.subr.mxu0 %v126
  %4179 = vmatpush1.msra.mxu0 %v125
  %4180 = vmatprep.subr.mxu0 %v122
  %4181 = vmatpush1.msra.mxu0 %v121
  %4182 = vmatprep.subr.mxu0 %v118
  %4183 = vmatpush1.msra.mxu0 %v117
  %4184 = vmatprep.subr.mxu0 %v114
  %4185 = vmatpush1.msra.mxu0 %v113
  %4186 = vmatprep.subr.mxu0 %v110
  %4187 = vmatpush1.msra.mxu0 %v109
  %4188 = vmatprep.subr.mxu0 %v106
  %4189 = vmatpush1.msra.mxu0 %v105
  %4190 = vmatprep.subr.mxu0 %v102
  %4191 = vmatpush1.msra.mxu0 %v101
  %4192 = vmatprep.subr.mxu0 %v98
  %4193 = vmatpush1.msra.mxu0 %v97
  %4194 = vmatprep.subr.mxu0 %v94
  %4195 = vmatpush1.msra.mxu0 %v93
  %4196 = vmatprep.subr.mxu0 %v90
  %4197 = vmatpush1.msra.mxu0 %v89
  %4198 = vmatprep.subr.mxu0 0.0
  %4199 = vmatpush2.msra.mxu0 0.0
  %4200 = vmatprep.subr.mxu0 0.0
  %4201 = vmatpush2.msra.mxu0 0.0
  %4202 = vmatprep.subr.mxu0 0.0
  %4203 = vmatpush2.msra.mxu0 0.0
  %4204 = vmatprep.subr.mxu0 0.0
  %4205 = vmatpush2.msra.mxu0 0.0
  %4206 = vmatprep.subr.mxu0 0.0
  %4207 = vmatpush2.msra.mxu0 0.0
  %4208 = vmatprep.subr.mxu0 0.0
  %4209 = vmatpush2.msra.mxu0 0.0
  %4210 = vmatprep.subr.mxu0 0.0
  %4211 = vmatpush2.msra.mxu0 0.0
  %4212 = vmatprep.subr.mxu0 0.0
  %4213 = vmatpush2.msra.mxu0 0.0
  %4214 = vmatprep.subr.mxu0 0.0
  %4215 = vmatpush2.msra.mxu0 0.0
  %4216 = vmatprep.subr.mxu0 0.0
  %4217 = vmatpush2.msra.mxu0 0.0
  %4218 = vmatprep.subr.mxu0 0.0
  %4219 = vmatpush2.msra.mxu0 0.0
  %4220 = vmatprep.subr.mxu0 0.0
  %4221 = vmatpush2.msra.mxu0 0.0
  %4222 = vmatprep.subr.mxu0 0.0
  %4223 = vmatpush2.msra.mxu0 0.0
  %4224 = vmatprep.subr.mxu0 0.0
  %4225 = vmatpush2.msra.mxu0 0.0
  %4226 = vmatprep.subr.mxu0 0.0
  %4227 = vmatpush2.msra.mxu0 0.0
  %4228 = vmatprep.subr.mxu0 0.0
  %4229 = vmatpush2.msra.mxu0 0.0
  %4230 = vmatprep.mubr.f32.mxu0 0.0
  %4231 = vmatmul.mubr.f32.gmra.mxu0 %v4019
  %v4232 = vpop.f32.mrf.mxu0
  %v4233 = vadd.f32 0.0, %v4232
  %v4234 = vpop.f32.mrf.mxu0
  %v4235 = vadd.f32 0.0, %v4234
  %4236 = vdwg.mxu0
  %4237 = vmatprep.subr.mxu0 %v152
  %4238 = vmatpush1.msra.mxu0 %v151
  %4239 = vmatprep.subr.mxu0 %v148
  %4240 = vmatpush1.msra.mxu0 %v147
  %4241 = vmatprep.subr.mxu0 %v144
  %4242 = vmatpush1.msra.mxu0 %v143
  %4243 = vmatprep.subr.mxu0 %v140
  %4244 = vmatpush1.msra.mxu0 %v139
  %4245 = vmatprep.subr.mxu0 %v136
  %4246 = vmatpush1.msra.mxu0 %v135
  %4247 = vmatprep.subr.mxu0 %v132
  %4248 = vmatpush1.msra.mxu0 %v131
  %4249 = vmatprep.subr.mxu0 %v128
  %4250 = vmatpush1.msra.mxu0 %v127
  %4251 = vmatprep.subr.mxu0 %v124
  %4252 = vmatpush1.msra.mxu0 %v123
  %4253 = vmatprep.subr.mxu0 %v120
  %4254 = vmatpush1.msra.mxu0 %v119
  %4255 = vmatprep.subr.mxu0 %v116
  %4256 = vmatpush1.msra.mxu0 %v115
  %4257 = vmatprep.subr.mxu0 %v112
  %4258 = vmatpush1.msra.mxu0 %v111
  %4259 = vmatprep.subr.mxu0 %v108
  %4260 = vmatpush1.msra.mxu0 %v107
  %4261 = vmatprep.subr.mxu0 %v104
  %4262 = vmatpush1.msra.mxu0 %v103
  %4263 = vmatprep.subr.mxu0 %v100
  %4264 = vmatpush1.msra.mxu0 %v99
  %4265 = vmatprep.subr.mxu0 %v96
  %4266 = vmatpush1.msra.mxu0 %v95
  %4267 = vmatprep.subr.mxu0 %v92
  %4268 = vmatpush1.msra.mxu0 %v91
  %4269 = vmatprep.subr.mxu0 0.0
  %4270 = vmatpush2.msra.mxu0 0.0
  %4271 = vmatprep.subr.mxu0 0.0
  %4272 = vmatpush2.msra.mxu0 0.0
  %4273 = vmatprep.subr.mxu0 0.0
  %4274 = vmatpush2.msra.mxu0 0.0
  %4275 = vmatprep.subr.mxu0 0.0
  %4276 = vmatpush2.msra.mxu0 0.0
  %4277 = vmatprep.subr.mxu0 0.0
  %4278 = vmatpush2.msra.mxu0 0.0
  %4279 = vmatprep.subr.mxu0 0.0
  %4280 = vmatpush2.msra.mxu0 0.0
  %4281 = vmatprep.subr.mxu0 0.0
  %4282 = vmatpush2.msra.mxu0 0.0
  %4283 = vmatprep.subr.mxu0 0.0
  %4284 = vmatpush2.msra.mxu0 0.0
  %4285 = vmatprep.subr.mxu0 0.0
  %4286 = vmatpush2.msra.mxu0 0.0
  %4287 = vmatprep.subr.mxu0 0.0
  %4288 = vmatpush2.msra.mxu0 0.0
  %4289 = vmatprep.subr.mxu0 0.0
  %4290 = vmatpush2.msra.mxu0 0.0
  %4291 = vmatprep.subr.mxu0 0.0
  %4292 = vmatpush2.msra.mxu0 0.0
  %4293 = vmatprep.subr.mxu0 0.0
  %4294 = vmatpush2.msra.mxu0 0.0
  %4295 = vmatprep.subr.mxu0 0.0
  %4296 = vmatpush2.msra.mxu0 0.0
  %4297 = vmatprep.subr.mxu0 0.0
  %4298 = vmatpush2.msra.mxu0 0.0
  %4299 = vmatprep.subr.mxu0 0.0
  %4300 = vmatpush2.msra.mxu0 0.0
  %4301 = vmatprep.mubr.f32.mxu0 0.0
  %4302 = vmatmul.mubr.f32.gmra.mxu0 %v4019
  %v4303 = vpop.f32.mrf.mxu0
  %v4304 = vadd.f32 0.0, %v4303
  %v4305 = vpop.f32.mrf.mxu0
  %v4306 = vadd.f32 0.0, %v4305
  %4307 = vdwg.mxu0
  %v4308 = vadd.f32 %v4162, %v4233
  %v4309 = vadd.f32 %v4163, %v4235
  %v4310 = vadd.f32 %v4164, %v4304
  %v4311 = vadd.f32 %v4165, %v4306
  %v4312 = vxor.u32 %v4308, 2147483648
  %v4313 = vmul.f32 %v4312, 1.442695
  %v4314 = vpow.pop %v4313
  %v4315 = vadd.f32 %v4314, 1.0
  %v4316 = vrcp.pop %v4315
  %v4317 = vmul.f32 1.0, %v4316
  %v4318 = vxor.u32 %v4309, 2147483648
  %v4319 = vmul.f32 %v4318, 1.442695
  %v4320 = vpow.pop %v4319
  %v4321 = vadd.f32 %v4320, 1.0
  %v4322 = vrcp.pop %v4321
  %v4323 = vmul.f32 1.0, %v4322
  %v4324 = vtanh.pop %v4310
  %v4325 = vxor.u32 %v4311, 2147483648
  %v4326 = vmul.f32 %v4325, 1.442695
  %v4327 = vpow.pop %v4326
  %v4328 = vadd.f32 %v4327, 1.0
  %v4329 = vrcp.pop %v4328
  %v4330 = vmul.f32 1.0, %v4329
  %v4331 = vmul.f32 %v4323, %v3835
  %v4332 = vmul.f32 %v4317, %v4324
  %v4333 = vadd.f32 %v4331, %v4332
  %v4334 = vtanh.pop %v4333
  %v4335 = vmul.f32 %v4330, %v4334
  %4336 = vmatprep.subr.mxu0 %v281
  %4337 = vmatpush1.msra.mxu0 %v280
  %4338 = vmatprep.subr.mxu0 %v277
  %4339 = vmatpush1.msra.mxu0 %v276
  %4340 = vmatprep.subr.mxu0 %v273
  %4341 = vmatpush1.msra.mxu0 %v272
  %4342 = vmatprep.subr.mxu0 %v269
  %4343 = vmatpush1.msra.mxu0 %v268
  %4344 = vmatprep.subr.mxu0 %v265
  %4345 = vmatpush1.msra.mxu0 %v264
  %4346 = vmatprep.subr.mxu0 %v261
  %4347 = vmatpush1.msra.mxu0 %v260
  %4348 = vmatprep.subr.mxu0 %v257
  %4349 = vmatpush1.msra.mxu0 %v256
  %4350 = vmatprep.subr.mxu0 %v253
  %4351 = vmatpush1.msra.mxu0 %v252
  %4352 = vmatprep.subr.mxu0 %v249
  %4353 = vmatpush1.msra.mxu0 %v248
  %4354 = vmatprep.subr.mxu0 %v245
  %4355 = vmatpush1.msra.mxu0 %v244
  %4356 = vmatprep.subr.mxu0 %v241
  %4357 = vmatpush1.msra.mxu0 %v240
  %4358 = vmatprep.subr.mxu0 %v237
  %4359 = vmatpush1.msra.mxu0 %v236
  %4360 = vmatprep.subr.mxu0 %v233
  %4361 = vmatpush1.msra.mxu0 %v232
  %4362 = vmatprep.subr.mxu0 %v229
  %4363 = vmatpush1.msra.mxu0 %v228
  %4364 = vmatprep.subr.mxu0 %v225
  %4365 = vmatpush1.msra.mxu0 %v224
  %4366 = vmatprep.subr.mxu0 %v221
  %4367 = vmatpush1.msra.mxu0 %v220
  %4368 = vmatprep.subr.mxu0 0.0
  %4369 = vmatpush2.msra.mxu0 0.0
  %4370 = vmatprep.subr.mxu0 0.0
  %4371 = vmatpush2.msra.mxu0 0.0
  %4372 = vmatprep.subr.mxu0 0.0
  %4373 = vmatpush2.msra.mxu0 0.0
  %4374 = vmatprep.subr.mxu0 0.0
  %4375 = vmatpush2.msra.mxu0 0.0
  %4376 = vmatprep.subr.mxu0 0.0
  %4377 = vmatpush2.msra.mxu0 0.0
  %4378 = vmatprep.subr.mxu0 0.0
  %4379 = vmatpush2.msra.mxu0 0.0
  %4380 = vmatprep.subr.mxu0 0.0
  %4381 = vmatpush2.msra.mxu0 0.0
  %4382 = vmatprep.subr.mxu0 0.0
  %4383 = vmatpush2.msra.mxu0 0.0
  %4384 = vmatprep.subr.mxu0 0.0
  %4385 = vmatpush2.msra.mxu0 0.0
  %4386 = vmatprep.subr.mxu0 0.0
  %4387 = vmatpush2.msra.mxu0 0.0
  %4388 = vmatprep.subr.mxu0 0.0
  %4389 = vmatpush2.msra.mxu0 0.0
  %4390 = vmatprep.subr.mxu0 0.0
  %4391 = vmatpush2.msra.mxu0 0.0
  %4392 = vmatprep.subr.mxu0 0.0
  %4393 = vmatpush2.msra.mxu0 0.0
  %4394 = vmatprep.subr.mxu0 0.0
  %4395 = vmatpush2.msra.mxu0 0.0
  %4396 = vmatprep.subr.mxu0 0.0
  %4397 = vmatpush2.msra.mxu0 0.0
  %4398 = vmatprep.subr.mxu0 0.0
  %4399 = vmatpush2.msra.mxu0 0.0
  %4400 = vmatprep.mubr.f32.mxu0 0.0
  %4401 = vmatmul.mubr.f32.gmra.mxu0 %v4335
  %v4402 = vpop.f32.mrf.mxu0
  %v4403 = vadd.f32 0.0, %v4402
  %v4404 = vpop.f32.mrf.mxu0
  %v4405 = vadd.f32 0.0, %v4404
  %4406 = vdwg.mxu0
  %4407 = vmatprep.subr.mxu0 %v283
  %4408 = vmatpush1.msra.mxu0 %v282
  %4409 = vmatprep.subr.mxu0 %v279
  %4410 = vmatpush1.msra.mxu0 %v278
  %4411 = vmatprep.subr.mxu0 %v275
  %4412 = vmatpush1.msra.mxu0 %v274
  %4413 = vmatprep.subr.mxu0 %v271
  %4414 = vmatpush1.msra.mxu0 %v270
  %4415 = vmatprep.subr.mxu0 %v267
  %4416 = vmatpush1.msra.mxu0 %v266
  %4417 = vmatprep.subr.mxu0 %v263
  %4418 = vmatpush1.msra.mxu0 %v262
  %4419 = vmatprep.subr.mxu0 %v259
  %4420 = vmatpush1.msra.mxu0 %v258
  %4421 = vmatprep.subr.mxu0 %v255
  %4422 = vmatpush1.msra.mxu0 %v254
  %4423 = vmatprep.subr.mxu0 %v251
  %4424 = vmatpush1.msra.mxu0 %v250
  %4425 = vmatprep.subr.mxu0 %v247
  %4426 = vmatpush1.msra.mxu0 %v246
  %4427 = vmatprep.subr.mxu0 %v243
  %4428 = vmatpush1.msra.mxu0 %v242
  %4429 = vmatprep.subr.mxu0 %v239
  %4430 = vmatpush1.msra.mxu0 %v238
  %4431 = vmatprep.subr.mxu0 %v235
  %4432 = vmatpush1.msra.mxu0 %v234
  %4433 = vmatprep.subr.mxu0 %v231
  %4434 = vmatpush1.msra.mxu0 %v230
  %4435 = vmatprep.subr.mxu0 %v227
  %4436 = vmatpush1.msra.mxu0 %v226
  %4437 = vmatprep.subr.mxu0 %v223
  %4438 = vmatpush1.msra.mxu0 %v222
  %4439 = vmatprep.subr.mxu0 0.0
  %4440 = vmatpush2.msra.mxu0 0.0
  %4441 = vmatprep.subr.mxu0 0.0
  %4442 = vmatpush2.msra.mxu0 0.0
  %4443 = vmatprep.subr.mxu0 0.0
  %4444 = vmatpush2.msra.mxu0 0.0
  %4445 = vmatprep.subr.mxu0 0.0
  %4446 = vmatpush2.msra.mxu0 0.0
  %4447 = vmatprep.subr.mxu0 0.0
  %4448 = vmatpush2.msra.mxu0 0.0
  %4449 = vmatprep.subr.mxu0 0.0
  %4450 = vmatpush2.msra.mxu0 0.0
  %4451 = vmatprep.subr.mxu0 0.0
  %4452 = vmatpush2.msra.mxu0 0.0
  %4453 = vmatprep.subr.mxu0 0.0
  %4454 = vmatpush2.msra.mxu0 0.0
  %4455 = vmatprep.subr.mxu0 0.0
  %4456 = vmatpush2.msra.mxu0 0.0
  %4457 = vmatprep.subr.mxu0 0.0
  %4458 = vmatpush2.msra.mxu0 0.0
  %4459 = vmatprep.subr.mxu0 0.0
  %4460 = vmatpush2.msra.mxu0 0.0
  %4461 = vmatprep.subr.mxu0 0.0
  %4462 = vmatpush2.msra.mxu0 0.0
  %4463 = vmatprep.subr.mxu0 0.0
  %4464 = vmatpush2.msra.mxu0 0.0
  %4465 = vmatprep.subr.mxu0 0.0
  %4466 = vmatpush2.msra.mxu0 0.0
  %4467 = vmatprep.subr.mxu0 0.0
  %4468 = vmatpush2.msra.mxu0 0.0
  %4469 = vmatprep.subr.mxu0 0.0
  %4470 = vmatpush2.msra.mxu0 0.0
  %4471 = vmatprep.mubr.f32.mxu0 0.0
  %4472 = vmatmul.mubr.f32.gmra.mxu0 %v4335
  %v4473 = vpop.f32.mrf.mxu0
  %v4474 = vadd.f32 0.0, %v4473
  %v4475 = vpop.f32.mrf.mxu0
  %v4476 = vadd.f32 0.0, %v4475
  %4477 = vdwg.mxu0
  %v4479 = vlaneseq
  %v4480 = vshrl.u32 %v4479, 7
  %v4481 = vsub.s32 0, %v4480
  %v4482 = vrot.slane %v285, %v4481
  %v4483 = vlaneseq
  %v4484 = vshrl.u32 %v4483, 7
  %v4485 = vsub.s32 1, %v4484
  %v4486 = vrot.slane %v285, %v4485
  %v4487 = vlaneseq
  %v4488 = vshrl.u32 %v4487, 7
  %v4489 = vsub.s32 2, %v4488
  %v4490 = vrot.slane %v285, %v4489
  %v4491 = vlaneseq
  %v4492 = vshrl.u32 %v4491, 7
  %v4493 = vsub.s32 3, %v4492
  %v4494 = vrot.slane %v285, %v4493
  %v4499 = vadd.f32 %v4482, %v4403
  %v4500 = vadd.f32 %v4486, %v4405
  %v4501 = vadd.f32 %v4490, %v4474
  %v4502 = vadd.f32 %v4494, %v4476
  %4503 = vmatprep.subr.mxu0 %v86
  %4504 = vmatpush1.msra.mxu0 %v85
  %4505 = vmatprep.subr.mxu0 %v82
  %4506 = vmatpush1.msra.mxu0 %v81
  %4507 = vmatprep.subr.mxu0 %v78
  %4508 = vmatpush1.msra.mxu0 %v77
  %4509 = vmatprep.subr.mxu0 %v74
  %4510 = vmatpush1.msra.mxu0 %v73
  %4511 = vmatprep.subr.mxu0 %v70
  %4512 = vmatpush1.msra.mxu0 %v69
  %4513 = vmatprep.subr.mxu0 %v66
  %4514 = vmatpush1.msra.mxu0 %v65
  %4515 = vmatprep.subr.mxu0 %v62
  %4516 = vmatpush1.msra.mxu0 %v61
  %4517 = vmatprep.subr.mxu0 %v58
  %4518 = vmatpush1.msra.mxu0 %v57
  %4519 = vmatprep.subr.mxu0 %v54
  %4520 = vmatpush1.msra.mxu0 %v53
  %4521 = vmatprep.subr.mxu0 %v50
  %4522 = vmatpush1.msra.mxu0 %v49
  %4523 = vmatprep.subr.mxu0 %v46
  %4524 = vmatpush1.msra.mxu0 %v45
  %4525 = vmatprep.subr.mxu0 %v42
  %4526 = vmatpush1.msra.mxu0 %v41
  %4527 = vmatprep.subr.mxu0 %v38
  %4528 = vmatpush1.msra.mxu0 %v37
  %4529 = vmatprep.subr.mxu0 %v34
  %4530 = vmatpush1.msra.mxu0 %v33
  %4531 = vmatprep.subr.mxu0 %v30
  %4532 = vmatpush1.msra.mxu0 %v29
  %4533 = vmatprep.subr.mxu0 %v26
  %4534 = vmatpush1.msra.mxu0 %v25
  %4535 = vmatprep.subr.mxu0 0.0
  %4536 = vmatpush2.msra.mxu0 0.0
  %4537 = vmatprep.subr.mxu0 0.0
  %4538 = vmatpush2.msra.mxu0 0.0
  %4539 = vmatprep.subr.mxu0 0.0
  %4540 = vmatpush2.msra.mxu0 0.0
  %4541 = vmatprep.subr.mxu0 0.0
  %4542 = vmatpush2.msra.mxu0 0.0
  %4543 = vmatprep.subr.mxu0 0.0
  %4544 = vmatpush2.msra.mxu0 0.0
  %4545 = vmatprep.subr.mxu0 0.0
  %4546 = vmatpush2.msra.mxu0 0.0
  %4547 = vmatprep.subr.mxu0 0.0
  %4548 = vmatpush2.msra.mxu0 0.0
  %4549 = vmatprep.subr.mxu0 0.0
  %4550 = vmatpush2.msra.mxu0 0.0
  %4551 = vmatprep.subr.mxu0 0.0
  %4552 = vmatpush2.msra.mxu0 0.0
  %4553 = vmatprep.subr.mxu0 0.0
  %4554 = vmatpush2.msra.mxu0 0.0
  %4555 = vmatprep.subr.mxu0 0.0
  %4556 = vmatpush2.msra.mxu0 0.0
  %4557 = vmatprep.subr.mxu0 0.0
  %4558 = vmatpush2.msra.mxu0 0.0
  %4559 = vmatprep.subr.mxu0 0.0
  %4560 = vmatpush2.msra.mxu0 0.0
  %4561 = vmatprep.subr.mxu0 0.0
  %4562 = vmatpush2.msra.mxu0 0.0
  %4563 = vmatprep.subr.mxu0 0.0
  %4564 = vmatpush2.msra.mxu0 0.0
  %4565 = vmatprep.subr.mxu0 0.0
  %4566 = vmatpush2.msra.mxu0 0.0
  %4567 = vmatprep.mubr.f32.mxu0 0.0
  %4568 = vmatmul.mubr.f32.gmra.mxu0 %v4019
  %v4569 = vpop.f32.mrf.mxu0
  %v4570 = vadd.f32 0.0, %v4569
  %v4571 = vpop.f32.mrf.mxu0
  %v4572 = vadd.f32 0.0, %v4571
  %4573 = vdwg.mxu0
  %4574 = vmatprep.subr.mxu0 %v88
  %4575 = vmatpush1.msra.mxu0 %v87
  %4576 = vmatprep.subr.mxu0 %v84
  %4577 = vmatpush1.msra.mxu0 %v83
  %4578 = vmatprep.subr.mxu0 %v80
  %4579 = vmatpush1.msra.mxu0 %v79
  %4580 = vmatprep.subr.mxu0 %v76
  %4581 = vmatpush1.msra.mxu0 %v75
  %4582 = vmatprep.subr.mxu0 %v72
  %4583 = vmatpush1.msra.mxu0 %v71
  %4584 = vmatprep.subr.mxu0 %v68
  %4585 = vmatpush1.msra.mxu0 %v67
  %4586 = vmatprep.subr.mxu0 %v64
  %4587 = vmatpush1.msra.mxu0 %v63
  %4588 = vmatprep.subr.mxu0 %v60
  %4589 = vmatpush1.msra.mxu0 %v59
  %4590 = vmatprep.subr.mxu0 %v56
  %4591 = vmatpush1.msra.mxu0 %v55
  %4592 = vmatprep.subr.mxu0 %v52
  %4593 = vmatpush1.msra.mxu0 %v51
  %4594 = vmatprep.subr.mxu0 %v48
  %4595 = vmatpush1.msra.mxu0 %v47
  %4596 = vmatprep.subr.mxu0 %v44
  %4597 = vmatpush1.msra.mxu0 %v43
  %4598 = vmatprep.subr.mxu0 %v40
  %4599 = vmatpush1.msra.mxu0 %v39
  %4600 = vmatprep.subr.mxu0 %v36
  %4601 = vmatpush1.msra.mxu0 %v35
  %4602 = vmatprep.subr.mxu0 %v32
  %4603 = vmatpush1.msra.mxu0 %v31
  %4604 = vmatprep.subr.mxu0 %v28
  %4605 = vmatpush1.msra.mxu0 %v27
  %4606 = vmatprep.subr.mxu0 0.0
  %4607 = vmatpush2.msra.mxu0 0.0
  %4608 = vmatprep.subr.mxu0 0.0
  %4609 = vmatpush2.msra.mxu0 0.0
  %4610 = vmatprep.subr.mxu0 0.0
  %4611 = vmatpush2.msra.mxu0 0.0
  %4612 = vmatprep.subr.mxu0 0.0
  %4613 = vmatpush2.msra.mxu0 0.0
  %4614 = vmatprep.subr.mxu0 0.0
  %4615 = vmatpush2.msra.mxu0 0.0
  %4616 = vmatprep.subr.mxu0 0.0
  %4617 = vmatpush2.msra.mxu0 0.0
  %4618 = vmatprep.subr.mxu0 0.0
  %4619 = vmatpush2.msra.mxu0 0.0
  %4620 = vmatprep.subr.mxu0 0.0
  %4621 = vmatpush2.msra.mxu0 0.0
  %4622 = vmatprep.subr.mxu0 0.0
  %4623 = vmatpush2.msra.mxu0 0.0
  %4624 = vmatprep.subr.mxu0 0.0
  %4625 = vmatpush2.msra.mxu0 0.0
  %4626 = vmatprep.subr.mxu0 0.0
  %4627 = vmatpush2.msra.mxu0 0.0
  %4628 = vmatprep.subr.mxu0 0.0
  %4629 = vmatpush2.msra.mxu0 0.0
  %4630 = vmatprep.subr.mxu0 0.0
  %4631 = vmatpush2.msra.mxu0 0.0
  %4632 = vmatprep.subr.mxu0 0.0
  %4633 = vmatpush2.msra.mxu0 0.0
  %4634 = vmatprep.subr.mxu0 0.0
  %4635 = vmatpush2.msra.mxu0 0.0
  %4636 = vmatprep.subr.mxu0 0.0
  %4637 = vmatpush2.msra.mxu0 0.0
  %4638 = vmatprep.mubr.f32.mxu0 0.0
  %4639 = vmatmul.mubr.f32.gmra.mxu0 %v4019
  %v4640 = vpop.f32.mrf.mxu0
  %v4641 = vadd.f32 0.0, %v4640
  %v4642 = vpop.f32.mrf.mxu0
  %v4643 = vadd.f32 0.0, %v4642
  %4644 = vdwg.mxu0
  %v4645 = vadd.f32 %v4499, %v4570
  %v4646 = vadd.f32 %v4500, %v4572
  %v4647 = vadd.f32 %v4501, %v4641
  %v4648 = vadd.f32 %v4502, %v4643
  %v4649 = vxor.u32 %v4645, 2147483648
  %v4650 = vmul.f32 %v4649, 1.442695
  %v4651 = vpow.pop %v4650
  %v4652 = vadd.f32 %v4651, 1.0
  %v4653 = vrcp.pop %v4652
  %v4654 = vmul.f32 1.0, %v4653
  %v4655 = vxor.u32 %v4646, 2147483648
  %v4656 = vmul.f32 %v4655, 1.442695
  %v4657 = vpow.pop %v4656
  %v4658 = vadd.f32 %v4657, 1.0
  %v4659 = vrcp.pop %v4658
  %v4660 = vmul.f32 1.0, %v4659
  %v4661 = vtanh.pop %v4647
  %v4662 = vxor.u32 %v4648, 2147483648
  %v4663 = vmul.f32 %v4662, 1.442695
  %v4664 = vpow.pop %v4663
  %v4665 = vadd.f32 %v4664, 1.0
  %v4666 = vrcp.pop %v4665
  %v4667 = vmul.f32 1.0, %v4666
  %v4668 = vmul.f32 %v4660, %v4017
  %v4669 = vmul.f32 %v4654, %v4661
  %v4670 = vadd.f32 %v4668, %v4669
  %v4671 = vtanh.pop %v4670
  %v4672 = vmul.f32 %v4667, %v4671
  %4673 = vmatprep.subr.mxu0 %v214
  %4674 = vmatpush1.msra.mxu0 %v213
  %4675 = vmatprep.subr.mxu0 %v210
  %4676 = vmatpush1.msra.mxu0 %v209
  %4677 = vmatprep.subr.mxu0 %v206
  %4678 = vmatpush1.msra.mxu0 %v205
  %4679 = vmatprep.subr.mxu0 %v202
  %4680 = vmatpush1.msra.mxu0 %v201
  %4681 = vmatprep.subr.mxu0 %v198
  %4682 = vmatpush1.msra.mxu0 %v197
  %4683 = vmatprep.subr.mxu0 %v194
  %4684 = vmatpush1.msra.mxu0 %v193
  %4685 = vmatprep.subr.mxu0 %v190
  %4686 = vmatpush1.msra.mxu0 %v189
  %4687 = vmatprep.subr.mxu0 %v186
  %4688 = vmatpush1.msra.mxu0 %v185
  %4689 = vmatprep.subr.mxu0 %v182
  %4690 = vmatpush1.msra.mxu0 %v181
  %4691 = vmatprep.subr.mxu0 %v178
  %4692 = vmatpush1.msra.mxu0 %v177
  %4693 = vmatprep.subr.mxu0 %v174
  %4694 = vmatpush1.msra.mxu0 %v173
  %4695 = vmatprep.subr.mxu0 %v170
  %4696 = vmatpush1.msra.mxu0 %v169
  %4697 = vmatprep.subr.mxu0 %v166
  %4698 = vmatpush1.msra.mxu0 %v165
  %4699 = vmatprep.subr.mxu0 %v162
  %4700 = vmatpush1.msra.mxu0 %v161
  %4701 = vmatprep.subr.mxu0 %v158
  %4702 = vmatpush1.msra.mxu0 %v157
  %4703 = vmatprep.subr.mxu0 %v154
  %4704 = vmatpush1.msra.mxu0 %v153
  %4705 = vmatprep.subr.mxu0 0.0
  %4706 = vmatpush2.msra.mxu0 0.0
  %4707 = vmatprep.subr.mxu0 0.0
  %4708 = vmatpush2.msra.mxu0 0.0
  %4709 = vmatprep.subr.mxu0 0.0
  %4710 = vmatpush2.msra.mxu0 0.0
  %4711 = vmatprep.subr.mxu0 0.0
  %4712 = vmatpush2.msra.mxu0 0.0
  %4713 = vmatprep.subr.mxu0 0.0
  %4714 = vmatpush2.msra.mxu0 0.0
  %4715 = vmatprep.subr.mxu0 0.0
  %4716 = vmatpush2.msra.mxu0 0.0
  %4717 = vmatprep.subr.mxu0 0.0
  %4718 = vmatpush2.msra.mxu0 0.0
  %4719 = vmatprep.subr.mxu0 0.0
  %4720 = vmatpush2.msra.mxu0 0.0
  %4721 = vmatprep.subr.mxu0 0.0
  %4722 = vmatpush2.msra.mxu0 0.0
  %4723 = vmatprep.subr.mxu0 0.0
  %4724 = vmatpush2.msra.mxu0 0.0
  %4725 = vmatprep.subr.mxu0 0.0
  %4726 = vmatpush2.msra.mxu0 0.0
  %4727 = vmatprep.subr.mxu0 0.0
  %4728 = vmatpush2.msra.mxu0 0.0
  %4729 = vmatprep.subr.mxu0 0.0
  %4730 = vmatpush2.msra.mxu0 0.0
  %4731 = vmatprep.subr.mxu0 0.0
  %4732 = vmatpush2.msra.mxu0 0.0
  %4733 = vmatprep.subr.mxu0 0.0
  %4734 = vmatpush2.msra.mxu0 0.0
  %4735 = vmatprep.subr.mxu0 0.0
  %4736 = vmatpush2.msra.mxu0 0.0
  %4737 = vmatprep.mubr.f32.mxu0 0.0
  %4738 = vmatmul.mubr.f32.gmra.mxu0 %v4335
  %v4739 = vpop.f32.mrf.mxu0
  %v4740 = vadd.f32 0.0, %v4739
  %v4741 = vpop.f32.mrf.mxu0
  %v4742 = vadd.f32 0.0, %v4741
  %4743 = vdwg.mxu0
  %4744 = vmatprep.subr.mxu0 %v216
  %4745 = vmatpush1.msra.mxu0 %v215
  %4746 = vmatprep.subr.mxu0 %v212
  %4747 = vmatpush1.msra.mxu0 %v211
  %4748 = vmatprep.subr.mxu0 %v208
  %4749 = vmatpush1.msra.mxu0 %v207
  %4750 = vmatprep.subr.mxu0 %v204
  %4751 = vmatpush1.msra.mxu0 %v203
  %4752 = vmatprep.subr.mxu0 %v200
  %4753 = vmatpush1.msra.mxu0 %v199
  %4754 = vmatprep.subr.mxu0 %v196
  %4755 = vmatpush1.msra.mxu0 %v195
  %4756 = vmatprep.subr.mxu0 %v192
  %4757 = vmatpush1.msra.mxu0 %v191
  %4758 = vmatprep.subr.mxu0 %v188
  %4759 = vmatpush1.msra.mxu0 %v187
  %4760 = vmatprep.subr.mxu0 %v184
  %4761 = vmatpush1.msra.mxu0 %v183
  %4762 = vmatprep.subr.mxu0 %v180
  %4763 = vmatpush1.msra.mxu0 %v179
  %4764 = vmatprep.subr.mxu0 %v176
  %4765 = vmatpush1.msra.mxu0 %v175
  %4766 = vmatprep.subr.mxu0 %v172
  %4767 = vmatpush1.msra.mxu0 %v171
  %4768 = vmatprep.subr.mxu0 %v168
  %4769 = vmatpush1.msra.mxu0 %v167
  %4770 = vmatprep.subr.mxu0 %v164
  %4771 = vmatpush1.msra.mxu0 %v163
  %4772 = vmatprep.subr.mxu0 %v160
  %4773 = vmatpush1.msra.mxu0 %v159
  %4774 = vmatprep.subr.mxu0 %v156
  %4775 = vmatpush1.msra.mxu0 %v155
  %4776 = vmatprep.subr.mxu0 0.0
  %4777 = vmatpush2.msra.mxu0 0.0
  %4778 = vmatprep.subr.mxu0 0.0
  %4779 = vmatpush2.msra.mxu0 0.0
  %4780 = vmatprep.subr.mxu0 0.0
  %4781 = vmatpush2.msra.mxu0 0.0
  %4782 = vmatprep.subr.mxu0 0.0
  %4783 = vmatpush2.msra.mxu0 0.0
  %4784 = vmatprep.subr.mxu0 0.0
  %4785 = vmatpush2.msra.mxu0 0.0
  %4786 = vmatprep.subr.mxu0 0.0
  %4787 = vmatpush2.msra.mxu0 0.0
  %4788 = vmatprep.subr.mxu0 0.0
  %4789 = vmatpush2.msra.mxu0 0.0
  %4790 = vmatprep.subr.mxu0 0.0
  %4791 = vmatpush2.msra.mxu0 0.0
  %4792 = vmatprep.subr.mxu0 0.0
  %4793 = vmatpush2.msra.mxu0 0.0
  %4794 = vmatprep.subr.mxu0 0.0
  %4795 = vmatpush2.msra.mxu0 0.0
  %4796 = vmatprep.subr.mxu0 0.0
  %4797 = vmatpush2.msra.mxu0 0.0
  %4798 = vmatprep.subr.mxu0 0.0
  %4799 = vmatpush2.msra.mxu0 0.0
  %4800 = vmatprep.subr.mxu0 0.0
  %4801 = vmatpush2.msra.mxu0 0.0
  %4802 = vmatprep.subr.mxu0 0.0
  %4803 = vmatpush2.msra.mxu0 0.0
  %4804 = vmatprep.subr.mxu0 0.0
  %4805 = vmatpush2.msra.mxu0 0.0
  %4806 = vmatprep.subr.mxu0 0.0
  %4807 = vmatpush2.msra.mxu0 0.0
  %4808 = vmatprep.mubr.f32.mxu0 0.0
  %4809 = vmatmul.mubr.f32.gmra.mxu0 %v4335
  %v4810 = vpop.f32.mrf.mxu0
  %v4811 = vadd.f32 0.0, %v4810
  %v4812 = vpop.f32.mrf.mxu0
  %v4813 = vadd.f32 0.0, %v4812
  %4814 = vdwg.mxu0
  %v4815 = vadd.f32 %v659, %v4740
  %v4816 = vadd.f32 %v663, %v4742
  %v4817 = vadd.f32 %v667, %v4811
  %v4818 = vadd.f32 %v671, %v4813
  %4819 = vmatprep.subr.mxu0 %v150
  %4820 = vmatpush1.msra.mxu0 %v149
  %4821 = vmatprep.subr.mxu0 %v146
  %4822 = vmatpush1.msra.mxu0 %v145
  %4823 = vmatprep.subr.mxu0 %v142
  %4824 = vmatpush1.msra.mxu0 %v141
  %4825 = vmatprep.subr.mxu0 %v138
  %4826 = vmatpush1.msra.mxu0 %v137
  %4827 = vmatprep.subr.mxu0 %v134
  %4828 = vmatpush1.msra.mxu0 %v133
  %4829 = vmatprep.subr.mxu0 %v130
  %4830 = vmatpush1.msra.mxu0 %v129
  %4831 = vmatprep.subr.mxu0 %v126
  %4832 = vmatpush1.msra.mxu0 %v125
  %4833 = vmatprep.subr.mxu0 %v122
  %4834 = vmatpush1.msra.mxu0 %v121
  %4835 = vmatprep.subr.mxu0 %v118
  %4836 = vmatpush1.msra.mxu0 %v117
  %4837 = vmatprep.subr.mxu0 %v114
  %4838 = vmatpush1.msra.mxu0 %v113
  %4839 = vmatprep.subr.mxu0 %v110
  %4840 = vmatpush1.msra.mxu0 %v109
  %4841 = vmatprep.subr.mxu0 %v106
  %4842 = vmatpush1.msra.mxu0 %v105
  %4843 = vmatprep.subr.mxu0 %v102
  %4844 = vmatpush1.msra.mxu0 %v101
  %4845 = vmatprep.subr.mxu0 %v98
  %4846 = vmatpush1.msra.mxu0 %v97
  %4847 = vmatprep.subr.mxu0 %v94
  %4848 = vmatpush1.msra.mxu0 %v93
  %4849 = vmatprep.subr.mxu0 %v90
  %4850 = vmatpush1.msra.mxu0 %v89
  %4851 = vmatprep.subr.mxu0 0.0
  %4852 = vmatpush2.msra.mxu0 0.0
  %4853 = vmatprep.subr.mxu0 0.0
  %4854 = vmatpush2.msra.mxu0 0.0
  %4855 = vmatprep.subr.mxu0 0.0
  %4856 = vmatpush2.msra.mxu0 0.0
  %4857 = vmatprep.subr.mxu0 0.0
  %4858 = vmatpush2.msra.mxu0 0.0
  %4859 = vmatprep.subr.mxu0 0.0
  %4860 = vmatpush2.msra.mxu0 0.0
  %4861 = vmatprep.subr.mxu0 0.0
  %4862 = vmatpush2.msra.mxu0 0.0
  %4863 = vmatprep.subr.mxu0 0.0
  %4864 = vmatpush2.msra.mxu0 0.0
  %4865 = vmatprep.subr.mxu0 0.0
  %4866 = vmatpush2.msra.mxu0 0.0
  %4867 = vmatprep.subr.mxu0 0.0
  %4868 = vmatpush2.msra.mxu0 0.0
  %4869 = vmatprep.subr.mxu0 0.0
  %4870 = vmatpush2.msra.mxu0 0.0
  %4871 = vmatprep.subr.mxu0 0.0
  %4872 = vmatpush2.msra.mxu0 0.0
  %4873 = vmatprep.subr.mxu0 0.0
  %4874 = vmatpush2.msra.mxu0 0.0
  %4875 = vmatprep.subr.mxu0 0.0
  %4876 = vmatpush2.msra.mxu0 0.0
  %4877 = vmatprep.subr.mxu0 0.0
  %4878 = vmatpush2.msra.mxu0 0.0
  %4879 = vmatprep.subr.mxu0 0.0
  %4880 = vmatpush2.msra.mxu0 0.0
  %4881 = vmatprep.subr.mxu0 0.0
  %4882 = vmatpush2.msra.mxu0 0.0
  %4883 = vmatprep.mubr.f32.mxu0 0.0
  %4884 = vmatmul.mubr.f32.gmra.mxu0 %v4672
  %v4885 = vpop.f32.mrf.mxu0
  %v4886 = vadd.f32 0.0, %v4885
  %v4887 = vpop.f32.mrf.mxu0
  %v4888 = vadd.f32 0.0, %v4887
  %4889 = vdwg.mxu0
  %4890 = vmatprep.subr.mxu0 %v152
  %4891 = vmatpush1.msra.mxu0 %v151
  %4892 = vmatprep.subr.mxu0 %v148
  %4893 = vmatpush1.msra.mxu0 %v147
  %4894 = vmatprep.subr.mxu0 %v144
  %4895 = vmatpush1.msra.mxu0 %v143
  %4896 = vmatprep.subr.mxu0 %v140
  %4897 = vmatpush1.msra.mxu0 %v139
  %4898 = vmatprep.subr.mxu0 %v136
  %4899 = vmatpush1.msra.mxu0 %v135
  %4900 = vmatprep.subr.mxu0 %v132
  %4901 = vmatpush1.msra.mxu0 %v131
  %4902 = vmatprep.subr.mxu0 %v128
  %4903 = vmatpush1.msra.mxu0 %v127
  %4904 = vmatprep.subr.mxu0 %v124
  %4905 = vmatpush1.msra.mxu0 %v123
  %4906 = vmatprep.subr.mxu0 %v120
  %4907 = vmatpush1.msra.mxu0 %v119
  %4908 = vmatprep.subr.mxu0 %v116
  %4909 = vmatpush1.msra.mxu0 %v115
  %4910 = vmatprep.subr.mxu0 %v112
  %4911 = vmatpush1.msra.mxu0 %v111
  %4912 = vmatprep.subr.mxu0 %v108
  %4913 = vmatpush1.msra.mxu0 %v107
  %4914 = vmatprep.subr.mxu0 %v104
  %4915 = vmatpush1.msra.mxu0 %v103
  %4916 = vmatprep.subr.mxu0 %v100
  %4917 = vmatpush1.msra.mxu0 %v99
  %4918 = vmatprep.subr.mxu0 %v96
  %4919 = vmatpush1.msra.mxu0 %v95
  %4920 = vmatprep.subr.mxu0 %v92
  %4921 = vmatpush1.msra.mxu0 %v91
  %4922 = vmatprep.subr.mxu0 0.0
  %4923 = vmatpush2.msra.mxu0 0.0
  %4924 = vmatprep.subr.mxu0 0.0
  %4925 = vmatpush2.msra.mxu0 0.0
  %4926 = vmatprep.subr.mxu0 0.0
  %4927 = vmatpush2.msra.mxu0 0.0
  %4928 = vmatprep.subr.mxu0 0.0
  %4929 = vmatpush2.msra.mxu0 0.0
  %4930 = vmatprep.subr.mxu0 0.0
  %4931 = vmatpush2.msra.mxu0 0.0
  %4932 = vmatprep.subr.mxu0 0.0
  %4933 = vmatpush2.msra.mxu0 0.0
  %4934 = vmatprep.subr.mxu0 0.0
  %4935 = vmatpush2.msra.mxu0 0.0
  %4936 = vmatprep.subr.mxu0 0.0
  %4937 = vmatpush2.msra.mxu0 0.0
  %4938 = vmatprep.subr.mxu0 0.0
  %4939 = vmatpush2.msra.mxu0 0.0
  %4940 = vmatprep.subr.mxu0 0.0
  %4941 = vmatpush2.msra.mxu0 0.0
  %4942 = vmatprep.subr.mxu0 0.0
  %4943 = vmatpush2.msra.mxu0 0.0
  %4944 = vmatprep.subr.mxu0 0.0
  %4945 = vmatpush2.msra.mxu0 0.0
  %4946 = vmatprep.subr.mxu0 0.0
  %4947 = vmatpush2.msra.mxu0 0.0
  %4948 = vmatprep.subr.mxu0 0.0
  %4949 = vmatpush2.msra.mxu0 0.0
  %4950 = vmatprep.subr.mxu0 0.0
  %4951 = vmatpush2.msra.mxu0 0.0
  %4952 = vmatprep.subr.mxu0 0.0
  %4953 = vmatpush2.msra.mxu0 0.0
  %4954 = vmatprep.mubr.f32.mxu0 0.0
  %4955 = vmatmul.mubr.f32.gmra.mxu0 %v4672
  %v4956 = vpop.f32.mrf.mxu0
  %v4957 = vadd.f32 0.0, %v4956
  %v4958 = vpop.f32.mrf.mxu0
  %v4959 = vadd.f32 0.0, %v4958
  %4960 = vdwg.mxu0
  %v4961 = vadd.f32 %v4815, %v4886
  %v4962 = vadd.f32 %v4816, %v4888
  %v4963 = vadd.f32 %v4817, %v4957
  %v4964 = vadd.f32 %v4818, %v4959
  %v4965 = vxor.u32 %v4961, 2147483648
  %v4966 = vmul.f32 %v4965, 1.442695
  %v4967 = vpow.pop %v4966
  %v4968 = vadd.f32 %v4967, 1.0
  %v4969 = vrcp.pop %v4968
  %v4970 = vmul.f32 1.0, %v4969
  %v4971 = vxor.u32 %v4962, 2147483648
  %v4972 = vmul.f32 %v4971, 1.442695
  %v4973 = vpow.pop %v4972
  %v4974 = vadd.f32 %v4973, 1.0
  %v4975 = vrcp.pop %v4974
  %v4976 = vmul.f32 1.0, %v4975
  %v4977 = vtanh.pop %v4963
  %v4978 = vxor.u32 %v4964, 2147483648
  %v4979 = vmul.f32 %v4978, 1.442695
  %v4980 = vpow.pop %v4979
  %v4981 = vadd.f32 %v4980, 1.0
  %v4982 = vrcp.pop %v4981
  %v4983 = vmul.f32 1.0, %v4982
  %v4984 = vmul.f32 %v4976, %v4333
  %v4985 = vmul.f32 %v4970, %v4977
  %v4986 = vadd.f32 %v4984, %v4985
  %v4987 = vtanh.pop %v4986
  %v4988 = vmul.f32 %v4983, %v4987
  %v4989 = vld [vmem:[%s4] sm:$0xff]
  %v4990 = vld [vmem:[%s4 + $0x8] sm:$0xff]
  %v4991 = vld [vmem:[%s4 + $0x10] sm:$0xff]
  %v4992 = vld [vmem:[%s4 + $0x18] sm:$0xff]
  %v4993 = vld [vmem:[%s4 + $0x20] sm:$0xff]
  %v4994 = vld [vmem:[%s4 + $0x28] sm:$0xff]
  %v4995 = vld [vmem:[%s4 + $0x30] sm:$0xff]
  %v4996 = vld [vmem:[%s4 + $0x38] sm:$0xff]
  %v4997 = vld [vmem:[%s4 + $0x40] sm:$0xff]
  %v4998 = vld [vmem:[%s4 + $0x48] sm:$0xff]
  %v4999 = vld [vmem:[%s4 + $0x50] sm:$0xff]
  %v5000 = vld [vmem:[%s4 + $0x58] sm:$0xff]
  %v5001 = vld [vmem:[%s4 + $0x60] sm:$0xff]
  %v5002 = vld [vmem:[%s4 + $0x68] sm:$0xff]
  %v5003 = vld [vmem:[%s4 + $0x70] sm:$0xff]
  %v5004 = vld [vmem:[%s4 + $0x78] sm:$0xff]
  %v5005 = vld [vmem:[#allocation2] sm:$0x1]
  %v5007 = vlaneseq
  %v5008 = vshrl.u32 %v5007, 7
  %v5009 = vsub.s32 0, %v5008
  %v5010 = vrot.slane %v5005, %v5009
  %5012 = vmatprep.subr.mxu0 0.0
  %5013 = vmatpush1.msra.mxu0 %v5004
  %5014 = vmatprep.subr.mxu0 0.0
  %5015 = vmatpush1.msra.mxu0 %v5003
  %5016 = vmatprep.subr.mxu0 0.0
  %5017 = vmatpush1.msra.mxu0 %v5002
  %5018 = vmatprep.subr.mxu0 0.0
  %5019 = vmatpush1.msra.mxu0 %v5001
  %5020 = vmatprep.subr.mxu0 0.0
  %5021 = vmatpush1.msra.mxu0 %v5000
  %5022 = vmatprep.subr.mxu0 0.0
  %5023 = vmatpush1.msra.mxu0 %v4999
  %5024 = vmatprep.subr.mxu0 0.0
  %5025 = vmatpush1.msra.mxu0 %v4998
  %5026 = vmatprep.subr.mxu0 0.0
  %5027 = vmatpush1.msra.mxu0 %v4997
  %5028 = vmatprep.subr.mxu0 0.0
  %5029 = vmatpush1.msra.mxu0 %v4996
  %5030 = vmatprep.subr.mxu0 0.0
  %5031 = vmatpush1.msra.mxu0 %v4995
  %5032 = vmatprep.subr.mxu0 0.0
  %5033 = vmatpush1.msra.mxu0 %v4994
  %5034 = vmatprep.subr.mxu0 0.0
  %5035 = vmatpush1.msra.mxu0 %v4993
  %5036 = vmatprep.subr.mxu0 0.0
  %5037 = vmatpush1.msra.mxu0 %v4992
  %5038 = vmatprep.subr.mxu0 0.0
  %5039 = vmatpush1.msra.mxu0 %v4991
  %5040 = vmatprep.subr.mxu0 0.0
  %5041 = vmatpush1.msra.mxu0 %v4990
  %5042 = vmatprep.subr.mxu0 0.0
  %5043 = vmatpush1.msra.mxu0 %v4989
  %5044 = vmatprep.subr.mxu0 0.0
  %5045 = vmatpush2.msra.mxu0 0.0
  %5046 = vmatprep.subr.mxu0 0.0
  %5047 = vmatpush2.msra.mxu0 0.0
  %5048 = vmatprep.subr.mxu0 0.0
  %5049 = vmatpush2.msra.mxu0 0.0
  %5050 = vmatprep.subr.mxu0 0.0
  %5051 = vmatpush2.msra.mxu0 0.0
  %5052 = vmatprep.subr.mxu0 0.0
  %5053 = vmatpush2.msra.mxu0 0.0
  %5054 = vmatprep.subr.mxu0 0.0
  %5055 = vmatpush2.msra.mxu0 0.0
  %5056 = vmatprep.subr.mxu0 0.0
  %5057 = vmatpush2.msra.mxu0 0.0
  %5058 = vmatprep.subr.mxu0 0.0
  %5059 = vmatpush2.msra.mxu0 0.0
  %5060 = vmatprep.subr.mxu0 0.0
  %5061 = vmatpush2.msra.mxu0 0.0
  %5062 = vmatprep.subr.mxu0 0.0
  %5063 = vmatpush2.msra.mxu0 0.0
  %5064 = vmatprep.subr.mxu0 0.0
  %5065 = vmatpush2.msra.mxu0 0.0
  %5066 = vmatprep.subr.mxu0 0.0
  %5067 = vmatpush2.msra.mxu0 0.0
  %5068 = vmatprep.subr.mxu0 0.0
  %5069 = vmatpush2.msra.mxu0 0.0
  %5070 = vmatprep.subr.mxu0 0.0
  %5071 = vmatpush2.msra.mxu0 0.0
  %5072 = vmatprep.subr.mxu0 0.0
  %5073 = vmatpush2.msra.mxu0 0.0
  %5074 = vmatprep.subr.mxu0 0.0
  %5075 = vmatpush2.msra.mxu0 0.0
  %5076 = vmatprep.mubr.f32.mxu0 0.0
  %5077 = vmatmul.mubr.f32.gmra.mxu0 %v4988
  %v5078 = vpop.f32.mrf.mxu0
  %v5079 = vadd.f32 %v5010, %v5078
  %v5080 = vpop.f32.mrf.mxu0
  %5081 = vdwg.mxu0
  %vm5082 = vcmask 1024
  %5083 = vst.msk [vmem:[%s6] sm:$0x3] %vm5082, %v5079
  // Predicated region
  $region26: #{sequence_forward.1} parent=0 // pred_check
    _
  $region27: #{sequence_forward.1} parent=0 // pred_check_branch
    %5085 = sbr.rel (0) target = $region29
  $region28: #{sequence_forward.1} parent=0 // pred_region
    _
  $region29: #{sequence_forward.1} parent=0 // pred_fallthru
    _
  // Predicated region
  $region30: #{sequence_forward.1} parent=0 // pred_check
    _
  $region31: #{sequence_forward.1} parent=0 // pred_check_branch
    %5087 = sbr.rel (0) target = $region33
  $region32: #{sequence_forward.1} parent=0 // pred_region
    _
  $region33: #{sequence_forward.1} parent=0 // pred_fallthru
    _

</llo_original>
